<compile_context>
chip_gen: v6e
topology: v6e:2x2x1
jax: 0.10.0
libtpu: 0.0.40
codegen_flags: <defaults>
</compile_context>

<pallas_src>
import math

import jax
import jax.numpy as jnp
from jax.experimental import pallas as pl
from jax.experimental.pallas import tpu as pltpu

# ---- problem configuration (small, consistent with the module) -------------
B = 2            # batch
N = 8            # sequence length (tokens)
DIM = 32         # embedding dim
NUM_HEADS = 4
HEAD_DIM = DIM // NUM_HEADS
MLP_RATIO = 4.0
HIDDEN = int(DIM * MLP_RATIO)
SCALE = HEAD_DIM ** (-0.5)
INIT_VALUES = 1e-1   # gamma_1 / gamma_2 init scale
LN_EPS = 1e-5
BN = B * N


def _layernorm(x, g, b):
    mu = jnp.mean(x, axis=-1, keepdims=True)
    var = jnp.mean((x - mu) ** 2, axis=-1, keepdims=True)
    return (x - mu) * jax.lax.rsqrt(var + LN_EPS) * g + b


def _gelu_exact(x):
    # matches torch.nn.GELU(approximate='none')
    return 0.5 * x * (1.0 + jax.lax.erf(x * (1.0 / math.sqrt(2.0))))


def vit_block_kernel(
    x_ref,                               # (B*N, D) token slab
    ln1_g_ref, ln1_b_ref,                # (1, D)
    wqkv_ref, bqkv_ref,                  # (D, 3D), (1, 3D)  [SCALE folded into Q]
    wproj_ref, bproj_ref,                # (D, D), (1, D)
    ln2_g_ref, ln2_b_ref,                # (1, D)
    fc1_w_ref, fc1_b_ref,                # (D, HID), (1, HID)
    fc2_w_ref, fc2_b_ref,                # (HID, D), (1, D)
    g1_ref, g2_ref,                      # (1, D)
    o_ref,                               # (B*N, D)
):
    x = x_ref[...].astype(jnp.float32)                                 # (BN, D)

    # ---------------- Attention branch ----------------
    h = _layernorm(x, ln1_g_ref[...], ln1_b_ref[...])                  # (BN, D)

    # single fused full-width QKV matmul (scale already folded into Q weights/bias)
    qkv = jnp.dot(h, wqkv_ref[...],
                  preferred_element_type=jnp.float32) + bqkv_ref[...]  # (BN, 3D)
    q = qkv[:, :DIM]
    k = qkv[:, DIM:2 * DIM]
    v = qkv[:, 2 * DIM:]

    # head split: (BN, D) -> (B*H, N, hd); K emitted pre-transposed (B*H, hd, N)
    q3 = q.reshape(B, N, NUM_HEADS, HEAD_DIM).transpose(0, 2, 1, 3) \
          .reshape(B * NUM_HEADS, N, HEAD_DIM)
    kT3 = k.reshape(B, N, NUM_HEADS, HEAD_DIM).transpose(0, 2, 3, 1) \
           .reshape(B * NUM_HEADS, HEAD_DIM, N)
    v3 = v.reshape(B, N, NUM_HEADS, HEAD_DIM).transpose(0, 2, 1, 3) \
          .reshape(B * NUM_HEADS, N, HEAD_DIM)

    s = jnp.einsum("bnd,bdm->bnm", q3, kT3,
                   preferred_element_type=jnp.float32)                 # (B*H, N, N)
    m = jnp.max(s, axis=-1, keepdims=True)
    e = jnp.exp(s - m)
    p = e * pl.reciprocal(jnp.sum(e, axis=-1, keepdims=True), approx=True)
    o3 = jnp.einsum("bnm,bmd->bnd", p, v3,
                    preferred_element_type=jnp.float32)                # (B*H, N, hd)

    # one head-concat relayout, then a single full-width output projection
    o_flat = o3.reshape(B, NUM_HEADS, N, HEAD_DIM).transpose(0, 2, 1, 3) \
               .reshape(BN, DIM)                                       # (BN, D)
    y = jnp.dot(o_flat, wproj_ref[...],
                preferred_element_type=jnp.float32) + bproj_ref[...]   # (BN, D)
    x = x + g1_ref[...] * y

    # ---------------- MLP branch ----------------
    h2 = _layernorm(x, ln2_g_ref[...], ln2_b_ref[...])                 # (BN, D)
    z = jnp.dot(h2, fc1_w_ref[...],
                preferred_element_type=jnp.float32) + fc1_b_ref[...]   # (BN, HID)
    z = _gelu_exact(z)
    z = jnp.dot(z, fc2_w_ref[...],
                preferred_element_type=jnp.float32) + fc2_b_ref[...]   # (BN, D)
    x = x + g2_ref[...] * z

    o_ref[...] = x.astype(o_ref.dtype)


def _prepare_kernel_params(p):
    """Host-side prep: fused QKV weight (scale folded into Q), (in,out) layouts."""
    def row(v):   # 1-D params as (1, D) rows for clean VMEM layout
        return v.reshape(1, -1)

    # torch nn.Linear weight is (out, in); transpose to (in, out) for x @ W.
    wqkvT = p["qkv_w"].T                                   # (D, 3D): [q | k | v]
    wqkvT = wqkvT.at[:, :DIM].multiply(SCALE)              # fold attention scale into Q
    bqkv = jnp.concatenate(
        [p["q_bias"] * SCALE, jnp.zeros_like(p["v_bias"]), p["v_bias"]]
    ).reshape(1, 3 * DIM)

    return [
        row(p["ln1_g"]), row(p["ln1_b"]),
        wqkvT, bqkv,
        p["proj_w"].T, row(p["proj_b"]),
        row(p["ln2_g"]), row(p["ln2_b"]),
        p["fc1_w"].T, row(p["fc1_b"]),
        p["fc2_w"].T, row(p["fc2_b"]),
        row(p["g1"]), row(p["g2"]),
    ]


def vit_encoder_block(x, params):
    """x: [B, N, D] float32.  params: module-style (torch-layout) parameters."""
    Bx, Nx, Dx = x.shape
    ordered = _prepare_kernel_params(params)

    # Whole problem fits in VMEM many times over -> no grid (one invocation).
    x_flat = x.reshape(Bx * Nx, Dx)
    n_args = 1 + len(ordered)

    flops = (2 * Bx * Nx * (Dx * 3 * Dx + Dx * Dx + 2 * Dx * HIDDEN)
             + 4 * Bx * NUM_HEADS * Nx * Nx * HEAD_DIM)
    transcendentals = Bx * NUM_HEADS * Nx * Nx + Bx * Nx * HIDDEN + 4 * Bx * Nx
    bytes_accessed = 4 * (2 * Bx * Nx * Dx + sum(int(a.size) for a in ordered))

    out = pl.pallas_call(
        vit_block_kernel,
        out_shape=jax.ShapeDtypeStruct((Bx * Nx, Dx), x.dtype),
        in_specs=[pl.BlockSpec(memory_space=pltpu.MemorySpace.VMEM)] * n_args,
        out_specs=pl.BlockSpec(memory_space=pltpu.MemorySpace.VMEM),
        cost_estimate=pl.CostEstimate(
            flops=flops,
            transcendentals=transcendentals,
            bytes_accessed=bytes_accessed,
        ),
    )(x_flat, *ordered)
    return out.reshape(Bx, Nx, Dx)


# ---------------- pure-JAX reference (module semantics, for correctness) ----
def reference_block(x, p):
    def ln(v, g, b):
        mu = jnp.mean(v, axis=-1, keepdims=True)
        var = jnp.mean((v - mu) ** 2, axis=-1, keepdims=True)
        return (v - mu) / jnp.sqrt(var + LN_EPS) * g + b

    Bx, Nx, _ = x.shape
    h = ln(x, p["ln1_g"], p["ln1_b"])
    qkv_b = jnp.concatenate(
        [p["q_bias"], jnp.zeros_like(p["v_bias"]), p["v_bias"]])
    qkv = h @ p["qkv_w"].T + qkv_b                                   # (B,N,3D)
    qkv = qkv.reshape(Bx, Nx, 3, NUM_HEADS, HEAD_DIM).transpose(2, 0, 3, 1, 4)
    q, k, v = qkv[0] * SCALE, qkv[1], qkv[2]                         # (B,H,N,hd)
    attn = jnp.einsum("bhnd,bhmd->bhnm", q, k)
    attn = jax.nn.softmax(attn, axis=-1)
    o = jnp.einsum("bhnm,bhmd->bhnd", attn, v)
    o = o.transpose(0, 2, 1, 3).reshape(Bx, Nx, DIM)
    o = o @ p["proj_w"].T + p["proj_b"]
    x = x + p["g1"] * o

    h2 = ln(x, p["ln2_g"], p["ln2_b"])
    z = h2 @ p["fc1_w"].T + p["fc1_b"]
    z = 0.5 * z * (1.0 + jax.lax.erf(z / jnp.sqrt(2.0)))
    z = z @ p["fc2_w"].T + p["fc2_b"]
    x = x + p["g2"] * z
    return x


def make_params(key):
    ks = jax.random.split(key, 12)
    s = 0.02
    # PyTorch nn.Linear weights are (out, in).
    return {
        "qkv_w": jax.random.normal(ks[0], (3 * DIM, DIM), jnp.float32) * s,
        "q_bias": jax.random.normal(ks[1], (DIM,), jnp.float32) * s,
        "v_bias": jax.random.normal(ks[2], (DIM,), jnp.float32) * s,
        "proj_w": jax.random.normal(ks[3], (DIM, DIM), jnp.float32) * s,
        "proj_b": jax.random.normal(ks[4], (DIM,), jnp.float32) * s,
        "fc1_w": jax.random.normal(ks[5], (HIDDEN, DIM), jnp.float32) * s,
        "fc1_b": jax.random.normal(ks[6], (HIDDEN,), jnp.float32) * s,
        "fc2_w": jax.random.normal(ks[7], (DIM, HIDDEN), jnp.float32) * s,
        "fc2_b": jax.random.normal(ks[8], (DIM,), jnp.float32) * s,
        "ln1_g": 1.0 + jax.random.normal(ks[9], (DIM,), jnp.float32) * s,
        "ln1_b": jax.random.normal(ks[10], (DIM,), jnp.float32) * s,
        "ln2_g": 1.0 + jax.random.normal(ks[11], (DIM,), jnp.float32) * s,
        "ln2_b": jnp.zeros((DIM,), jnp.float32),
        "g1": jnp.full((DIM,), INIT_VALUES, jnp.float32),
        "g2": jnp.full((DIM,), INIT_VALUES, jnp.float32),
    }


if __name__ == "__main__":
    key = jax.random.PRNGKey(0)
    kx, kp = jax.random.split(key)
    x = jax.random.normal(kx, (B, N, DIM), jnp.float32)
    params = make_params(kp)

    out = jax.block_until_ready(vit_encoder_block(x, params))
    ref = jax.block_until_ready(reference_block(x, params))

    assert out.shape == (B, N, DIM)
    max_err = float(jnp.max(jnp.abs(out - ref)))
    assert jnp.allclose(out, ref, atol=1e-4, rtol=1e-4), max_err
    print("KERNEL_OK")
</pallas_src>

<mosaic_0001>
module attributes {stable_mosaic.version = 11 : i64} {
  func.func @vit_block_kernel(%arg0: memref<16x32xf32, #tpu.memory_space<vmem>>, %arg1: memref<1x32xf32, #tpu.memory_space<vmem>>, %arg2: memref<1x32xf32, #tpu.memory_space<vmem>>, %arg3: memref<32x96xf32, #tpu.memory_space<vmem>>, %arg4: memref<1x96xf32, #tpu.memory_space<vmem>>, %arg5: memref<32x32xf32, #tpu.memory_space<vmem>>, %arg6: memref<1x32xf32, #tpu.memory_space<vmem>>, %arg7: memref<1x32xf32, #tpu.memory_space<vmem>>, %arg8: memref<1x32xf32, #tpu.memory_space<vmem>>, %arg9: memref<32x128xf32, #tpu.memory_space<vmem>>, %arg10: memref<1x128xf32, #tpu.memory_space<vmem>>, %arg11: memref<128x32xf32, #tpu.memory_space<vmem>>, %arg12: memref<1x32xf32, #tpu.memory_space<vmem>>, %arg13: memref<1x32xf32, #tpu.memory_space<vmem>>, %arg14: memref<1x32xf32, #tpu.memory_space<vmem>>, %arg15: memref<16x32xf32, #tpu.memory_space<vmem>>) attributes {dimension_semantics = [], scalar_prefetch = 0 : i64, scratch_operands = 0 : i64, tpu.core_type = #tpu.core_type<tc>} {
    %c0 = arith.constant 0 : index
    %c0_0 = arith.constant 0 : index
    %0 = vector.load %arg0[%c0, %c0_0] : memref<16x32xf32, #tpu.memory_space<vmem>>, vector<16x32xf32>
    %c0_1 = arith.constant 0 : index
    %c0_2 = arith.constant 0 : index
    %1 = vector.load %arg1[%c0_1, %c0_2] : memref<1x32xf32, #tpu.memory_space<vmem>>, vector<1x32xf32>
    %c0_3 = arith.constant 0 : index
    %c0_4 = arith.constant 0 : index
    %2 = vector.load %arg2[%c0_3, %c0_4] : memref<1x32xf32, #tpu.memory_space<vmem>>, vector<1x32xf32>
    %cst = arith.constant dense<0.000000e+00> : vector<16xf32>
    %3 = vector.multi_reduction <add>, %0, %cst [1] : vector<16x32xf32> to vector<16xf32>
    %4 = vector.shape_cast %3 : vector<16xf32> to vector<16x1xf32>
    %cst_5 = arith.constant 3.200000e+01 : f32
    %5 = vector.broadcast %cst_5 : f32 to vector<16x1xf32>
    %6 = arith.divf %4, %5 : vector<16x1xf32>
    %7 = vector.broadcast %6 : vector<16x1xf32> to vector<16x32xf32>
    %8 = arith.subf %0, %7 : vector<16x32xf32>
    %9 = arith.mulf %8, %8 : vector<16x32xf32>
    %cst_6 = arith.constant dense<0.000000e+00> : vector<16xf32>
    %10 = vector.multi_reduction <add>, %9, %cst_6 [1] : vector<16x32xf32> to vector<16xf32>
    %11 = vector.shape_cast %10 : vector<16xf32> to vector<16x1xf32>
    %cst_7 = arith.constant 3.200000e+01 : f32
    %12 = vector.broadcast %cst_7 : f32 to vector<16x1xf32>
    %13 = arith.divf %11, %12 : vector<16x1xf32>
    %14 = vector.broadcast %6 : vector<16x1xf32> to vector<16x32xf32>
    %15 = arith.subf %0, %14 : vector<16x32xf32>
    %cst_8 = arith.constant 9.99999974E-6 : f32
    %16 = vector.broadcast %cst_8 : f32 to vector<16x1xf32>
    %17 = arith.addf %13, %16 : vector<16x1xf32>
    %18 = math.rsqrt %17 : vector<16x1xf32>
    %19 = vector.broadcast %18 : vector<16x1xf32> to vector<16x32xf32>
    %20 = arith.mulf %15, %19 : vector<16x32xf32>
    %21 = vector.broadcast %1 : vector<1x32xf32> to vector<16x32xf32>
    %22 = arith.mulf %20, %21 : vector<16x32xf32>
    %23 = vector.broadcast %2 : vector<1x32xf32> to vector<16x32xf32>
    %24 = arith.addf %22, %23 : vector<16x32xf32>
    %c0_9 = arith.constant 0 : index
    %c0_10 = arith.constant 0 : index
    %25 = vector.load %arg3[%c0_9, %c0_10] : memref<32x96xf32, #tpu.memory_space<vmem>>, vector<32x96xf32>
    %cst_11 = arith.constant dense<0.000000e+00> : vector<16x96xf32>
    %26 = tpu.matmul %24, %25, %cst_11 {dimension_numbers = #tpu.dot_dimension_numbers<[1], [0], [0], [1], [0, 0, 1, 1], [], []>} : vector<16x32xf32>, vector<32x96xf32>, vector<16x96xf32> -> vector<16x96xf32>
    %c0_12 = arith.constant 0 : index
    %c0_13 = arith.constant 0 : index
    %27 = vector.load %arg4[%c0_12, %c0_13] : memref<1x96xf32, #tpu.memory_space<vmem>>, vector<1x96xf32>
    %28 = vector.broadcast %27 : vector<1x96xf32> to vector<16x96xf32>
    %29 = arith.addf %26, %28 : vector<16x96xf32>
    %30 = vector.extract_strided_slice %29 {offsets = [0, 0], sizes = [16, 32], strides = [1, 1]} : vector<16x96xf32> to vector<16x32xf32>
    %31 = vector.extract_strided_slice %29 {offsets = [0, 32], sizes = [16, 32], strides = [1, 1]} : vector<16x96xf32> to vector<16x32xf32>
    %32 = vector.extract_strided_slice %29 {offsets = [0, 64], sizes = [16, 32], strides = [1, 1]} : vector<16x96xf32> to vector<16x32xf32>
    %33 = vector.shape_cast %30 : vector<16x32xf32> to vector<2x8x4x8xf32>
    %34 = tpu.transpose %33, [0, 2, 1, 3] : vector<2x8x4x8xf32> -> vector<2x4x8x8xf32>
    %35 = vector.shape_cast %34 : vector<2x4x8x8xf32> to vector<8x8x8xf32>
    %36 = vector.shape_cast %31 : vector<16x32xf32> to vector<2x8x4x8xf32>
    %37 = tpu.transpose %36, [0, 2, 3, 1] : vector<2x8x4x8xf32> -> vector<2x4x8x8xf32>
    %38 = vector.shape_cast %37 : vector<2x4x8x8xf32> to vector<8x8x8xf32>
    %39 = vector.shape_cast %32 : vector<16x32xf32> to vector<2x8x4x8xf32>
    %40 = tpu.transpose %39, [0, 2, 1, 3] : vector<2x8x4x8xf32> -> vector<2x4x8x8xf32>
    %41 = vector.shape_cast %40 : vector<2x4x8x8xf32> to vector<8x8x8xf32>
    "tpu.trace_start"() <{level = 10 : i32, message = "bnd,bdm->bnm"}> : () -> ()
    %cst_14 = arith.constant dense<0.000000e+00> : vector<8x8x8xf32>
    %42 = tpu.matmul %35, %38, %cst_14 {dimension_numbers = #tpu.dot_dimension_numbers<[2], [1], [1], [2], [0, 0, 0, 1, 1, 2], [0], [0]>} : vector<8x8x8xf32>, vector<8x8x8xf32>, vector<8x8x8xf32> -> vector<8x8x8xf32>
    "tpu.trace_stop"() : () -> ()
    %cst_15 = arith.constant dense<0xFF800000> : vector<8x8xf32>
    %43 = vector.multi_reduction <maximumf>, %42, %cst_15 [2] : vector<8x8x8xf32> to vector<8x8xf32>
    %44 = vector.shape_cast %43 : vector<8x8xf32> to vector<8x8x1xf32>
    %45 = vector.broadcast %44 : vector<8x8x1xf32> to vector<8x8x8xf32>
    %46 = arith.subf %42, %45 : vector<8x8x8xf32>
    %47 = math.exp %46 : vector<8x8x8xf32>
    %cst_16 = arith.constant dense<0.000000e+00> : vector<8x8xf32>
    %48 = vector.multi_reduction <add>, %47, %cst_16 [2] : vector<8x8x8xf32> to vector<8x8xf32>
    %49 = vector.shape_cast %48 : vector<8x8xf32> to vector<8x8x1xf32>
    %50 = tpu.reciprocal %49 {approx = true} : vector<8x8x1xf32> -> vector<8x8x1xf32>
    %51 = vector.broadcast %50 : vector<8x8x1xf32> to vector<8x8x8xf32>
    %52 = arith.mulf %47, %51 : vector<8x8x8xf32>
    "tpu.trace_start"() <{level = 10 : i32, message = "bnm,bmd->bnd"}> : () -> ()
    %cst_17 = arith.constant dense<0.000000e+00> : vector<8x8x8xf32>
    %53 = tpu.matmul %52, %41, %cst_17 {dimension_numbers = #tpu.dot_dimension_numbers<[2], [1], [1], [2], [0, 0, 0, 1, 1, 2], [0], [0]>} : vector<8x8x8xf32>, vector<8x8x8xf32>, vector<8x8x8xf32> -> vector<8x8x8xf32>
    "tpu.trace_stop"() : () -> ()
    %54 = vector.shape_cast %53 : vector<8x8x8xf32> to vector<2x4x8x8xf32>
    %55 = tpu.transpose %54, [0, 2, 1, 3] : vector<2x4x8x8xf32> -> vector<2x8x4x8xf32>
    %56 = vector.shape_cast %55 : vector<2x8x4x8xf32> to vector<16x32xf32>
    %c0_18 = arith.constant 0 : index
    %c0_19 = arith.constant 0 : index
    %57 = vector.load %arg5[%c0_18, %c0_19] : memref<32x32xf32, #tpu.memory_space<vmem>>, vector<32x32xf32>
    %cst_20 = arith.constant dense<0.000000e+00> : vector<16x32xf32>
    %58 = tpu.matmul %56, %57, %cst_20 {dimension_numbers = #tpu.dot_dimension_numbers<[1], [0], [0], [1], [0, 0, 1, 1], [], []>} : vector<16x32xf32>, vector<32x32xf32>, vector<16x32xf32> -> vector<16x32xf32>
    %c0_21 = arith.constant 0 : index
    %c0_22 = arith.constant 0 : index
    %59 = vector.load %arg6[%c0_21, %c0_22] : memref<1x32xf32, #tpu.memory_space<vmem>>, vector<1x32xf32>
    %60 = vector.broadcast %59 : vector<1x32xf32> to vector<16x32xf32>
    %61 = arith.addf %58, %60 : vector<16x32xf32>
    %c0_23 = arith.constant 0 : index
    %c0_24 = arith.constant 0 : index
    %62 = vector.load %arg13[%c0_23, %c0_24] : memref<1x32xf32, #tpu.memory_space<vmem>>, vector<1x32xf32>
    %63 = vector.broadcast %62 : vector<1x32xf32> to vector<16x32xf32>
    %64 = arith.mulf %63, %61 : vector<16x32xf32>
    %65 = arith.addf %0, %64 : vector<16x32xf32>
    %c0_25 = arith.constant 0 : index
    %c0_26 = arith.constant 0 : index
    %66 = vector.load %arg7[%c0_25, %c0_26] : memref<1x32xf32, #tpu.memory_space<vmem>>, vector<1x32xf32>
    %c0_27 = arith.constant 0 : index
    %c0_28 = arith.constant 0 : index
    %67 = vector.load %arg8[%c0_27, %c0_28] : memref<1x32xf32, #tpu.memory_space<vmem>>, vector<1x32xf32>
    %cst_29 = arith.constant dense<0.000000e+00> : vector<16xf32>
    %68 = vector.multi_reduction <add>, %65, %cst_29 [1] : vector<16x32xf32> to vector<16xf32>
    %69 = vector.shape_cast %68 : vector<16xf32> to vector<16x1xf32>
    %cst_30 = arith.constant 3.200000e+01 : f32
    %70 = vector.broadcast %cst_30 : f32 to vector<16x1xf32>
    %71 = arith.divf %69, %70 : vector<16x1xf32>
    %72 = vector.broadcast %71 : vector<16x1xf32> to vector<16x32xf32>
    %73 = arith.subf %65, %72 : vector<16x32xf32>
    %74 = arith.mulf %73, %73 : vector<16x32xf32>
    %cst_31 = arith.constant dense<0.000000e+00> : vector<16xf32>
    %75 = vector.multi_reduction <add>, %74, %cst_31 [1] : vector<16x32xf32> to vector<16xf32>
    %76 = vector.shape_cast %75 : vector<16xf32> to vector<16x1xf32>
    %cst_32 = arith.constant 3.200000e+01 : f32
    %77 = vector.broadcast %cst_32 : f32 to vector<16x1xf32>
    %78 = arith.divf %76, %77 : vector<16x1xf32>
    %79 = vector.broadcast %71 : vector<16x1xf32> to vector<16x32xf32>
    %80 = arith.subf %65, %79 : vector<16x32xf32>
    %cst_33 = arith.constant 9.99999974E-6 : f32
    %81 = vector.broadcast %cst_33 : f32 to vector<16x1xf32>
    %82 = arith.addf %78, %81 : vector<16x1xf32>
    %83 = math.rsqrt %82 : vector<16x1xf32>
    %84 = vector.broadcast %83 : vector<16x1xf32> to vector<16x32xf32>
    %85 = arith.mulf %80, %84 : vector<16x32xf32>
    %86 = vector.broadcast %66 : vector<1x32xf32> to vector<16x32xf32>
    %87 = arith.mulf %85, %86 : vector<16x32xf32>
    %88 = vector.broadcast %67 : vector<1x32xf32> to vector<16x32xf32>
    %89 = arith.addf %87, %88 : vector<16x32xf32>
    %c0_34 = arith.constant 0 : index
    %c0_35 = arith.constant 0 : index
    %90 = vector.load %arg9[%c0_34, %c0_35] : memref<32x128xf32, #tpu.memory_space<vmem>>, vector<32x128xf32>
    %cst_36 = arith.constant dense<0.000000e+00> : vector<16x128xf32>
    %91 = tpu.matmul %89, %90, %cst_36 {dimension_numbers = #tpu.dot_dimension_numbers<[1], [0], [0], [1], [0, 0, 1, 1], [], []>} : vector<16x32xf32>, vector<32x128xf32>, vector<16x128xf32> -> vector<16x128xf32>
    %c0_37 = arith.constant 0 : index
    %c0_38 = arith.constant 0 : index
    %92 = vector.load %arg10[%c0_37, %c0_38] : memref<1x128xf32, #tpu.memory_space<vmem>>, vector<1x128xf32>
    %93 = vector.broadcast %92 : vector<1x128xf32> to vector<16x128xf32>
    %94 = arith.addf %91, %93 : vector<16x128xf32>
    %cst_39 = arith.constant 5.000000e-01 : f32
    %95 = vector.broadcast %cst_39 : f32 to vector<16x128xf32>
    %96 = arith.mulf %95, %94 : vector<16x128xf32>
    %cst_40 = arith.constant 0.707106769 : f32
    %97 = vector.broadcast %cst_40 : f32 to vector<16x128xf32>
    %98 = arith.mulf %94, %97 : vector<16x128xf32>
    %99 = math.erf %98 : vector<16x128xf32>
    %cst_41 = arith.constant 1.000000e+00 : f32
    %100 = vector.broadcast %cst_41 : f32 to vector<16x128xf32>
    %101 = arith.addf %100, %99 : vector<16x128xf32>
    %102 = arith.mulf %96, %101 : vector<16x128xf32>
    %c0_42 = arith.constant 0 : index
    %c0_43 = arith.constant 0 : index
    %103 = vector.load %arg11[%c0_42, %c0_43] : memref<128x32xf32, #tpu.memory_space<vmem>>, vector<128x32xf32>
    %cst_44 = arith.constant dense<0.000000e+00> : vector<16x32xf32>
    %104 = tpu.matmul %102, %103, %cst_44 {dimension_numbers = #tpu.dot_dimension_numbers<[1], [0], [0], [1], [0, 0, 1, 1], [], []>} : vector<16x128xf32>, vector<128x32xf32>, vector<16x32xf32> -> vector<16x32xf32>
    %c0_45 = arith.constant 0 : index
    %c0_46 = arith.constant 0 : index
    %105 = vector.load %arg12[%c0_45, %c0_46] : memref<1x32xf32, #tpu.memory_space<vmem>>, vector<1x32xf32>
    %106 = vector.broadcast %105 : vector<1x32xf32> to vector<16x32xf32>
    %107 = arith.addf %104, %106 : vector<16x32xf32>
    %c0_47 = arith.constant 0 : index
    %c0_48 = arith.constant 0 : index
    %108 = vector.load %arg14[%c0_47, %c0_48] : memref<1x32xf32, #tpu.memory_space<vmem>>, vector<1x32xf32>
    %109 = vector.broadcast %108 : vector<1x32xf32> to vector<16x32xf32>
    %110 = arith.mulf %109, %107 : vector<16x32xf32>
    %111 = arith.addf %65, %110 : vector<16x32xf32>
    %c0_49 = arith.constant 0 : index
    %c0_50 = arith.constant 0 : index
    %112 = vector.load %arg15[%c0_49, %c0_50] : memref<16x32xf32, #tpu.memory_space<vmem>>, vector<16x32xf32>
    tpu.vector_store %arg15[%c0_49, %c0_50], %111 {strides = array<i32>} : memref<16x32xf32, #tpu.memory_space<vmem>>, vector<16x32xf32>,
    return
  }
}

</mosaic_0001>

<llo_original>
// kernel: tpu_custom_call.1
$region0: #{tpu_custom_call.1}
  #allocation0 [shape = 'u32[]', space=smem, size = 0x4, offset = 0x4, fixed_abs, tag = 'smem constant byte address 0x4 - core index']
  #allocation1 [shape = 'u32[144,128]{1,0:T(1,128)}', space=vmem, size = 0x12000, scoped, tag = 'internal scratch']
  %s0 = inlined_call_operand.vmem [shape: f32[16,32], index: 0, kind: input, shape index: {}]
  %s1 = inlined_call_operand.vmem [shape: f32[1,32], index: 1, kind: input, shape index: {}]
  %s2 = inlined_call_operand.vmem [shape: f32[1,32], index: 2, kind: input, shape index: {}]
  %s3 = inlined_call_operand.vmem [shape: f32[32,96], index: 3, kind: input, shape index: {}]
  %s4 = inlined_call_operand.vmem [shape: f32[1,96], index: 4, kind: input, shape index: {}]
  %s5 = inlined_call_operand.vmem [shape: f32[32,32], index: 5, kind: input, shape index: {}]
  %s6 = inlined_call_operand.vmem [shape: f32[1,32], index: 6, kind: input, shape index: {}]
  %s7 = inlined_call_operand.vmem [shape: f32[1,32], index: 7, kind: input, shape index: {}]
  %s8 = inlined_call_operand.vmem [shape: f32[1,32], index: 8, kind: input, shape index: {}]
  %s9 = inlined_call_operand.vmem [shape: f32[32,128], index: 9, kind: input, shape index: {}]
  %s10 = inlined_call_operand.vmem [shape: f32[1,128], index: 10, kind: input, shape index: {}]
  %s11 = inlined_call_operand.vmem [shape: f32[128,32], index: 11, kind: input, shape index: {}]
  %s12 = inlined_call_operand.vmem [shape: f32[1,32], index: 12, kind: input, shape index: {}]
  %s13 = inlined_call_operand.vmem [shape: f32[1,32], index: 13, kind: input, shape index: {}]
  %s14 = inlined_call_operand.vmem [shape: f32[1,32], index: 14, kind: input, shape index: {}]
  %s15 = inlined_call_operand.hbm [shape: f32[16,32], index: 15, kind: output, shape index: {}]
  %s16 = sld [smem:[#allocation0]]
  $region70: #{tpu_custom_call.1} parent=0
    _
  %s18 = ssub.s32 1, %s16
  %s19 = scalar_select 0, %s18, %s16
  $region1: #{tpu_custom_call.1} parent=0
    #allocation2 [shape = 'u8[8192]{0}', space=vmem, size = 0x2000, scoped, tag = 'output window, operand 0, single buffered']
    #allocation3 [shape = 's32[1]{0}', space=sflag, size = 0x4, scoped, tag = 'scoped memory for tpu_custom_call.1']
    %20 = vsyncpa [#allocation3], 0
    // Predicated region
    $region2: #{tpu_custom_call.1} parent=1 // pred_check
      _
    $region3: #{tpu_custom_call.1} parent=1 // pred_check_branch
      %22 = sbr.rel (0) target = $region5
    $region4: #{tpu_custom_call.1} parent=1 // pred_region
      _
    $region5: #{tpu_custom_call.1} parent=1 // pred_fallthru
      _
    // Predicated region
    $region6: #{tpu_custom_call.1} parent=1 // pred_check
      _
    $region7: #{tpu_custom_call.1} parent=1 // pred_check_branch
      %24 = sbr.rel (0) target = $region9
    $region8: #{tpu_custom_call.1} parent=1 // pred_region
      _
    $region9: #{tpu_custom_call.1} parent=1 // pred_fallthru
      _
    // Predicated region
    $region10: #{tpu_custom_call.1} parent=1 // pred_check
      _
    $region11: #{tpu_custom_call.1} parent=1 // pred_check_branch
      %26 = sbr.rel (0) target = $region13
    $region12: #{tpu_custom_call.1} parent=1 // pred_region
      _
    $region13: #{tpu_custom_call.1} parent=1 // pred_fallthru
      _
    // Predicated region
    $region14: #{tpu_custom_call.1} parent=1 // pred_check
      _
    $region15: #{tpu_custom_call.1} parent=1 // pred_check_branch
      %28 = sbr.rel (0) target = $region17
    $region16: #{tpu_custom_call.1} parent=1 // pred_region
      _
    $region17: #{tpu_custom_call.1} parent=1 // pred_fallthru
      _
    // Predicated region
    $region18: #{tpu_custom_call.1} parent=1 // pred_check
      _
    $region19: #{tpu_custom_call.1} parent=1 // pred_check_branch
      %30 = sbr.rel (0) target = $region21
    $region20: #{tpu_custom_call.1} parent=1 // pred_region
      _
    $region21: #{tpu_custom_call.1} parent=1 // pred_fallthru
      _
    // Predicated region
    $region22: #{tpu_custom_call.1} parent=1 // pred_check
      _
    $region23: #{tpu_custom_call.1} parent=1 // pred_check_branch
      %32 = sbr.rel (0) target = $region25
    $region24: #{tpu_custom_call.1} parent=1 // pred_region
      _
    $region25: #{tpu_custom_call.1} parent=1 // pred_fallthru
      _
    // Predicated region
    $region26: #{tpu_custom_call.1} parent=1 // pred_check
      _
    $region27: #{tpu_custom_call.1} parent=1 // pred_check_branch
      %34 = sbr.rel (0) target = $region29
    $region28: #{tpu_custom_call.1} parent=1 // pred_region
      _
    $region29: #{tpu_custom_call.1} parent=1 // pred_fallthru
      _
    // Predicated region
    $region30: #{tpu_custom_call.1} parent=1 // pred_check
      _
    $region31: #{tpu_custom_call.1} parent=1 // pred_check_branch
      %36 = sbr.rel (0) target = $region33
    $region32: #{tpu_custom_call.1} parent=1 // pred_region
      _
    $region33: #{tpu_custom_call.1} parent=1 // pred_fallthru
      _
    // Predicated region
    $region34: #{tpu_custom_call.1} parent=1 // pred_check
      _
    $region35: #{tpu_custom_call.1} parent=1 // pred_check_branch
      %38 = sbr.rel (0) target = $region37
    $region36: #{tpu_custom_call.1} parent=1 // pred_region
      _
    $region37: #{tpu_custom_call.1} parent=1 // pred_fallthru
      _
    // Predicated region
    $region38: #{tpu_custom_call.1} parent=1 // pred_check
      _
    $region39: #{tpu_custom_call.1} parent=1 // pred_check_branch
      %40 = sbr.rel (0) target = $region41
    $region40: #{tpu_custom_call.1} parent=1 // pred_region
      _
    $region41: #{tpu_custom_call.1} parent=1 // pred_fallthru
      _
    // Predicated region
    $region42: #{tpu_custom_call.1} parent=1 // pred_check
      _
    $region43: #{tpu_custom_call.1} parent=1 // pred_check_branch
      %42 = sbr.rel (0) target = $region45
    $region44: #{tpu_custom_call.1} parent=1 // pred_region
      _
    $region45: #{tpu_custom_call.1} parent=1 // pred_fallthru
      _
    // Predicated region
    $region46: #{tpu_custom_call.1} parent=1 // pred_check
      _
    $region47: #{tpu_custom_call.1} parent=1 // pred_check_branch
      %44 = sbr.rel (0) target = $region49
    $region48: #{tpu_custom_call.1} parent=1 // pred_region
      _
    $region49: #{tpu_custom_call.1} parent=1 // pred_fallthru
      _
    // Predicated region
    $region50: #{tpu_custom_call.1} parent=1 // pred_check
      _
    $region51: #{tpu_custom_call.1} parent=1 // pred_check_branch
      %46 = sbr.rel (0) target = $region53
    $region52: #{tpu_custom_call.1} parent=1 // pred_region
      _
    $region53: #{tpu_custom_call.1} parent=1 // pred_fallthru
      _
    // Predicated region
    $region54: #{tpu_custom_call.1} parent=1 // pred_check
      _
    $region55: #{tpu_custom_call.1} parent=1 // pred_check_branch
      %48 = sbr.rel (0) target = $region57
    $region56: #{tpu_custom_call.1} parent=1 // pred_region
      _
    $region57: #{tpu_custom_call.1} parent=1 // pred_fallthru
      _
    // Predicated region
    $region58: #{tpu_custom_call.1} parent=1 // pred_check
      _
    $region59: #{tpu_custom_call.1} parent=1 // pred_check_branch
      %50 = sbr.rel (0) target = $region61
    $region60: #{tpu_custom_call.1} parent=1 // pred_region
      _
    $region61: #{tpu_custom_call.1} parent=1 // pred_fallthru
      _
    %v51 = vld [vmem:[%s0] sm:$0xff]
    %v52 = vld [vmem:[%s0 + $0x8] sm:$0xff]
    %v53 = vld [vmem:[%s1] sm:$0x1]
    %v54 = vld [vmem:[%s2] sm:$0x1]
    %vm55 = vcmask 261120
    %v56 = vsel %vm55, %v51, 0.0
    %57 = vadd.xlane.f32.xlu0 %v56
    %v58 = vpop.xlane.xlu0 %57
    %v59 = vsel %vm55, %v52, 0.0
    %60 = vadd.xlane.f32.xlu0 %v59
    %v61 = vpop.xlane.xlu0 %60
    %v62 = vrcp.pop 32.0
    %v63 = vmul.f32 %v58, %v62
    %v64 = vmul.f32 %v61, %v62
    %v65 = vsub.f32 %v51, %v63
    %v66 = vsub.f32 %v52, %v64
    %v67 = vmul.f32 %v65, %v65
    %v68 = vmul.f32 %v66, %v66
    %v69 = vsel %vm55, %v67, 0.0
    %70 = vadd.xlane.f32.xlu0 %v69
    %v71 = vpop.xlane.xlu0 %70
    %v72 = vsel %vm55, %v68, 0.0
    %73 = vadd.xlane.f32.xlu0 %v72
    %v74 = vpop.xlane.xlu0 %73
    %v75 = vmul.f32 %v71, %v62
    %v76 = vmul.f32 %v74, %v62
    %v77 = vadd.f32 %v75, 1e-05
    %v78 = vadd.f32 %v76, 1e-05
    %v79 = vrsqrt.pop %v77
    %v80 = vrsqrt.pop %v78
    %v81 = vmul.f32 %v65, %v79
    %v82 = vmul.f32 %v66, %v80
    %v84 = vlaneseq
    %v85 = vshrl.u32 %v84, 7
    %v86 = vsub.s32 0, %v85
    %v87 = vrot.slane %v53, %v86
    %v89 = vmul.f32 %v81, %v87
    %v90 = vmul.f32 %v82, %v87
    %v92 = vlaneseq
    %v93 = vshrl.u32 %v92, 7
    %v94 = vsub.s32 0, %v93
    %v95 = vrot.slane %v54, %v94
    %v97 = vadd.f32 %v89, %v95
    %v98 = vadd.f32 %v90, %v95
    %v99 = vld [vmem:[%s3] sm:$0xff]
    %v100 = vld [vmem:[%s3 + $0x8] sm:$0xff]
    %v101 = vld [vmem:[%s3 + $0x10] sm:$0xff]
    %v102 = vld [vmem:[%s3 + $0x18] sm:$0xff]
    %v103 = vld [vmem:[%s4] sm:$0x1]
    %v105 = vlaneseq
    %v106 = vshrl.u32 %v105, 7
    %v107 = vsub.s32 0, %v106
    %v108 = vrot.slane %v103, %v107
    %v111 = vsel %vm55, %v97, 0
    %v114 = vsel %vm55, %v98, 0
    %116 = vmatprep.subr.mxu0 0.0
    %117 = vmatpush1.msra.mxu0 0.0
    %118 = vmatprep.subr.mxu0 0.0
    %119 = vmatpush1.msra.mxu0 0.0
    %120 = vmatprep.subr.mxu0 0.0
    %121 = vmatpush1.msra.mxu0 0.0
    %122 = vmatprep.subr.mxu0 0.0
    %123 = vmatpush1.msra.mxu0 0.0
    %124 = vmatprep.subr.mxu0 0.0
    %125 = vmatpush1.msra.mxu0 0.0
    %126 = vmatprep.subr.mxu0 0.0
    %127 = vmatpush1.msra.mxu0 0.0
    %128 = vmatprep.subr.mxu0 0.0
    %129 = vmatpush1.msra.mxu0 0.0
    %130 = vmatprep.subr.mxu0 0.0
    %131 = vmatpush1.msra.mxu0 0.0
    %132 = vmatprep.subr.mxu0 0.0
    %133 = vmatpush1.msra.mxu0 0.0
    %134 = vmatprep.subr.mxu0 0.0
    %135 = vmatpush1.msra.mxu0 0.0
    %136 = vmatprep.subr.mxu0 0.0
    %137 = vmatpush1.msra.mxu0 0.0
    %138 = vmatprep.subr.mxu0 0.0
    %139 = vmatpush1.msra.mxu0 0.0
    %140 = vmatprep.subr.mxu0 0.0
    %141 = vmatpush1.msra.mxu0 %v102
    %142 = vmatprep.subr.mxu0 0.0
    %143 = vmatpush1.msra.mxu0 %v101
    %144 = vmatprep.subr.mxu0 0.0
    %145 = vmatpush1.msra.mxu0 %v100
    %146 = vmatprep.subr.mxu0 0.0
    %147 = vmatpush1.msra.mxu0 %v99
    %148 = vmatprep.subr.mxu0 0.0
    %149 = vmatpush2.msra.mxu0 0.0
    %150 = vmatprep.subr.mxu0 0.0
    %151 = vmatpush2.msra.mxu0 0.0
    %152 = vmatprep.subr.mxu0 0.0
    %153 = vmatpush2.msra.mxu0 0.0
    %154 = vmatprep.subr.mxu0 0.0
    %155 = vmatpush2.msra.mxu0 0.0
    %156 = vmatprep.subr.mxu0 0.0
    %157 = vmatpush2.msra.mxu0 0.0
    %158 = vmatprep.subr.mxu0 0.0
    %159 = vmatpush2.msra.mxu0 0.0
    %160 = vmatprep.subr.mxu0 0.0
    %161 = vmatpush2.msra.mxu0 0.0
    %162 = vmatprep.subr.mxu0 0.0
    %163 = vmatpush2.msra.mxu0 0.0
    %164 = vmatprep.subr.mxu0 0.0
    %165 = vmatpush2.msra.mxu0 0.0
    %166 = vmatprep.subr.mxu0 0.0
    %167 = vmatpush2.msra.mxu0 0.0
    %168 = vmatprep.subr.mxu0 0.0
    %169 = vmatpush2.msra.mxu0 0.0
    %170 = vmatprep.subr.mxu0 0.0
    %171 = vmatpush2.msra.mxu0 0.0
    %172 = vmatprep.subr.mxu0 0.0
    %173 = vmatpush2.msra.mxu0 0.0
    %174 = vmatprep.subr.mxu0 0.0
    %175 = vmatpush2.msra.mxu0 0.0
    %176 = vmatprep.subr.mxu0 0.0
    %177 = vmatpush2.msra.mxu0 0.0
    %178 = vmatprep.subr.mxu0 0.0
    %179 = vmatpush2.msra.mxu0 0.0
    %180 = vmatprep.mubr.f32.mxu0 0.0
    %181 = vmatmul.mubr.f32.gmra.mxu0 %v111
    %v182 = vpop.f32.mrf.mxu0
    %v183 = vadd.f32 %v108, %v182
    %v184 = vpop.f32.mrf.mxu0
    %185 = vmatprep.mubr.f32.mxu0 0.0
    %186 = vmatmul.mubr.f32.gmra.mxu0 %v114
    %v187 = vpop.f32.mrf.mxu0
    %v188 = vadd.f32 %v108, %v187
    %v189 = vpop.f32.mrf.mxu0
    %190 = vdwg.mxu0
    %193 = vrot.lane.b32.xlu0 %v183, 120
    %v194 = vpop.permute.xlu0 %193
    %195 = vrot.lane.b32.xlu0 %v188, 120
    %v196 = vpop.permute.xlu0 %195
    %199 = vrot.lane.b32.xlu0 %v183, 112
    %v200 = vpop.permute.xlu0 %199
    %201 = vrot.lane.b32.xlu0 %v188, 112
    %v202 = vpop.permute.xlu0 %201
    %205 = vrot.lane.b32.xlu0 %v183, 104
    %v206 = vpop.permute.xlu0 %205
    %207 = vrot.lane.b32.xlu0 %v188, 104
    %v208 = vpop.permute.xlu0 %207
    %v211 = vcombine.low %v183, %v200
    %v212 = vcombine.high %v183, %v200
    %v214 = vunpack.c.l.s4 1983009808
    %v215 = vunpack.c.0.s8 %v214
    %v216 = vlaneseq
    %v217 = vshrl.u32 %v216, 7
    %v218 = vsub.s32 %v215, %v217
    %v219 = vrot.slane %v211, %v218
    %v221 = vunpack.c.l.s4 1983009808
    %v222 = vunpack.c.0.s8 %v221
    %v223 = vlaneseq
    %v224 = vshrl.u32 %v223, 7
    %v225 = vsub.s32 %v222, %v224
    %v226 = vrot.slane %v212, %v225
    %v227 = vcombine.low %v194, %v206
    %v228 = vcombine.high %v194, %v206
    %v230 = vunpack.c.l.s4 1983009808
    %v231 = vunpack.c.0.s8 %v230
    %v232 = vlaneseq
    %v233 = vshrl.u32 %v232, 7
    %v234 = vsub.s32 %v231, %v233
    %v235 = vrot.slane %v227, %v234
    %v237 = vunpack.c.l.s4 1983009808
    %v238 = vunpack.c.0.s8 %v237
    %v239 = vlaneseq
    %v240 = vshrl.u32 %v239, 7
    %v241 = vsub.s32 %v238, %v240
    %v242 = vrot.slane %v228, %v241
    %v243 = vcombine.low %v219, %v235
    %v244 = vcombine.high %v219, %v235
    %v246 = vunpack.c.l.s4 1934713408
    %v247 = vunpack.c.0.s8 %v246
    %v248 = vlaneseq
    %v249 = vshrl.u32 %v248, 7
    %v250 = vsub.s32 %v247, %v249
    %v251 = vrot.slane %v243, %v250
    %v253 = vunpack.c.l.s4 1934713408
    %v254 = vunpack.c.0.s8 %v253
    %v255 = vlaneseq
    %v256 = vshrl.u32 %v255, 7
    %v257 = vsub.s32 %v254, %v256
    %v258 = vrot.slane %v244, %v257
    %v259 = vcombine.low %v226, %v242
    %v260 = vcombine.high %v226, %v242
    %v262 = vunpack.c.l.s4 1934713408
    %v263 = vunpack.c.0.s8 %v262
    %v264 = vlaneseq
    %v265 = vshrl.u32 %v264, 7
    %v266 = vsub.s32 %v263, %v265
    %v267 = vrot.slane %v259, %v266
    %v269 = vunpack.c.l.s4 1934713408
    %v270 = vunpack.c.0.s8 %v269
    %v271 = vlaneseq
    %v272 = vshrl.u32 %v271, 7
    %v273 = vsub.s32 %v270, %v272
    %v274 = vrot.slane %v260, %v273
    %v275 = vcombine.high %v251, 0.0
    %v276 = vcombine.high %v258, 0.0
    %v277 = vcombine.high %v267, 0.0
    %v278 = vcombine.high %v274, 0.0
    %v279 = vcombine.low %v188, %v202
    %v280 = vcombine.high %v188, %v202
    %v282 = vunpack.c.l.s4 1983009808
    %v283 = vunpack.c.0.s8 %v282
    %v284 = vlaneseq
    %v285 = vshrl.u32 %v284, 7
    %v286 = vsub.s32 %v283, %v285
    %v287 = vrot.slane %v279, %v286
    %v289 = vunpack.c.l.s4 1983009808
    %v290 = vunpack.c.0.s8 %v289
    %v291 = vlaneseq
    %v292 = vshrl.u32 %v291, 7
    %v293 = vsub.s32 %v290, %v292
    %v294 = vrot.slane %v280, %v293
    %v295 = vcombine.low %v196, %v208
    %v296 = vcombine.high %v196, %v208
    %v298 = vunpack.c.l.s4 1983009808
    %v299 = vunpack.c.0.s8 %v298
    %v300 = vlaneseq
    %v301 = vshrl.u32 %v300, 7
    %v302 = vsub.s32 %v299, %v301
    %v303 = vrot.slane %v295, %v302
    %v305 = vunpack.c.l.s4 1983009808
    %v306 = vunpack.c.0.s8 %v305
    %v307 = vlaneseq
    %v308 = vshrl.u32 %v307, 7
    %v309 = vsub.s32 %v306, %v308
    %v310 = vrot.slane %v296, %v309
    %v311 = vcombine.low %v287, %v303
    %v312 = vcombine.high %v287, %v303
    %v314 = vunpack.c.l.s4 1934713408
    %v315 = vunpack.c.0.s8 %v314
    %v316 = vlaneseq
    %v317 = vshrl.u32 %v316, 7
    %v318 = vsub.s32 %v315, %v317
    %v319 = vrot.slane %v311, %v318
    %v321 = vunpack.c.l.s4 1934713408
    %v322 = vunpack.c.0.s8 %v321
    %v323 = vlaneseq
    %v324 = vshrl.u32 %v323, 7
    %v325 = vsub.s32 %v322, %v324
    %v326 = vrot.slane %v312, %v325
    %v327 = vcombine.low %v294, %v310
    %v328 = vcombine.high %v294, %v310
    %v330 = vunpack.c.l.s4 1934713408
    %v331 = vunpack.c.0.s8 %v330
    %v332 = vlaneseq
    %v333 = vshrl.u32 %v332, 7
    %v334 = vsub.s32 %v331, %v333
    %v335 = vrot.slane %v327, %v334
    %v337 = vunpack.c.l.s4 1934713408
    %v338 = vunpack.c.0.s8 %v337
    %v339 = vlaneseq
    %v340 = vshrl.u32 %v339, 7
    %v341 = vsub.s32 %v338, %v340
    %v342 = vrot.slane %v328, %v341
    %v343 = vcombine.high %v319, 0.0
    %v344 = vcombine.high %v326, 0.0
    %v345 = vcombine.high %v335, 0.0
    %v346 = vcombine.high %v342, 0.0
    %v347 = vcombine.low %v251, %v258
    %v349 = vunpack.c.l.s4 1983009808
    %v350 = vunpack.c.0.s8 %v349
    %v351 = vlaneseq
    %v352 = vshrl.u32 %v351, 7
    %v353 = vsub.s32 %v350, %v352
    %v354 = vrot.slane %v347, %v353
    %v355 = vcombine.low %v275, %v276
    %v357 = vunpack.c.l.s4 1983009808
    %v358 = vunpack.c.0.s8 %v357
    %v359 = vlaneseq
    %v360 = vshrl.u32 %v359, 7
    %v361 = vsub.s32 %v358, %v360
    %v362 = vrot.slane %v355, %v361
    %v363 = vcombine.low %v267, %v274
    %v365 = vunpack.c.l.s4 1983009808
    %v366 = vunpack.c.0.s8 %v365
    %v367 = vlaneseq
    %v368 = vshrl.u32 %v367, 7
    %v369 = vsub.s32 %v366, %v368
    %v370 = vrot.slane %v363, %v369
    %v371 = vcombine.low %v277, %v278
    %v373 = vunpack.c.l.s4 1983009808
    %v374 = vunpack.c.0.s8 %v373
    %v375 = vlaneseq
    %v376 = vshrl.u32 %v375, 7
    %v377 = vsub.s32 %v374, %v376
    %v378 = vrot.slane %v371, %v377
    %v379 = vcombine.low %v354, %v362
    %v380 = vcombine.high %v354, %v362
    %v382 = vunpack.c.l.s4 1934713408
    %v383 = vunpack.c.0.s8 %v382
    %v384 = vlaneseq
    %v385 = vshrl.u32 %v384, 7
    %v386 = vsub.s32 %v383, %v385
    %v387 = vrot.slane %v379, %v386
    %v389 = vunpack.c.l.s4 1934713408
    %v390 = vunpack.c.0.s8 %v389
    %v391 = vlaneseq
    %v392 = vshrl.u32 %v391, 7
    %v393 = vsub.s32 %v390, %v392
    %v394 = vrot.slane %v380, %v393
    %v395 = vcombine.low %v370, %v378
    %v396 = vcombine.high %v370, %v378
    %v398 = vunpack.c.l.s4 1934713408
    %v399 = vunpack.c.0.s8 %v398
    %v400 = vlaneseq
    %v401 = vshrl.u32 %v400, 7
    %v402 = vsub.s32 %v399, %v401
    %v403 = vrot.slane %v395, %v402
    %v405 = vunpack.c.l.s4 1934713408
    %v406 = vunpack.c.0.s8 %v405
    %v407 = vlaneseq
    %v408 = vshrl.u32 %v407, 7
    %v409 = vsub.s32 %v406, %v408
    %v410 = vrot.slane %v396, %v409
    %v411 = vcombine.low %v387, %v403
    %v412 = vcombine.high %v387, %v403
    %v413 = vcombine.low %v394, %v410
    %v414 = vcombine.high %v394, %v410
    %v415 = vcombine.low %v319, %v326
    %v417 = vunpack.c.l.s4 1983009808
    %v418 = vunpack.c.0.s8 %v417
    %v419 = vlaneseq
    %v420 = vshrl.u32 %v419, 7
    %v421 = vsub.s32 %v418, %v420
    %v422 = vrot.slane %v415, %v421
    %v423 = vcombine.low %v343, %v344
    %v425 = vunpack.c.l.s4 1983009808
    %v426 = vunpack.c.0.s8 %v425
    %v427 = vlaneseq
    %v428 = vshrl.u32 %v427, 7
    %v429 = vsub.s32 %v426, %v428
    %v430 = vrot.slane %v423, %v429
    %v431 = vcombine.low %v335, %v342
    %v433 = vunpack.c.l.s4 1983009808
    %v434 = vunpack.c.0.s8 %v433
    %v435 = vlaneseq
    %v436 = vshrl.u32 %v435, 7
    %v437 = vsub.s32 %v434, %v436
    %v438 = vrot.slane %v431, %v437
    %v439 = vcombine.low %v345, %v346
    %v441 = vunpack.c.l.s4 1983009808
    %v442 = vunpack.c.0.s8 %v441
    %v443 = vlaneseq
    %v444 = vshrl.u32 %v443, 7
    %v445 = vsub.s32 %v442, %v444
    %v446 = vrot.slane %v439, %v445
    %v447 = vcombine.low %v422, %v430
    %v448 = vcombine.high %v422, %v430
    %v450 = vunpack.c.l.s4 1934713408
    %v451 = vunpack.c.0.s8 %v450
    %v452 = vlaneseq
    %v453 = vshrl.u32 %v452, 7
    %v454 = vsub.s32 %v451, %v453
    %v455 = vrot.slane %v447, %v454
    %v457 = vunpack.c.l.s4 1934713408
    %v458 = vunpack.c.0.s8 %v457
    %v459 = vlaneseq
    %v460 = vshrl.u32 %v459, 7
    %v461 = vsub.s32 %v458, %v460
    %v462 = vrot.slane %v448, %v461
    %v463 = vcombine.low %v438, %v446
    %v464 = vcombine.high %v438, %v446
    %v466 = vunpack.c.l.s4 1934713408
    %v467 = vunpack.c.0.s8 %v466
    %v468 = vlaneseq
    %v469 = vshrl.u32 %v468, 7
    %v470 = vsub.s32 %v467, %v469
    %v471 = vrot.slane %v463, %v470
    %v473 = vunpack.c.l.s4 1934713408
    %v474 = vunpack.c.0.s8 %v473
    %v475 = vlaneseq
    %v476 = vshrl.u32 %v475, 7
    %v477 = vsub.s32 %v474, %v476
    %v478 = vrot.slane %v464, %v477
    %v479 = vcombine.low %v455, %v471
    %v480 = vcombine.high %v455, %v471
    %v481 = vcombine.low %v462, %v478
    %v482 = vcombine.high %v462, %v478
    %483 = vrot.lane.b32.xlu0 %v183, 96
    %v484 = vpop.permute.xlu0 %483
    %485 = vrot.lane.b32.xlu0 %v188, 96
    %v486 = vpop.permute.xlu0 %485
    %487 = vrot.lane.b32.xlu0 %v194, 96
    %v488 = vpop.permute.xlu0 %487
    %489 = vrot.lane.b32.xlu0 %v196, 96
    %v490 = vpop.permute.xlu0 %489
    %491 = vrot.lane.b32.xlu0 %v200, 96
    %v492 = vpop.permute.xlu0 %491
    %493 = vrot.lane.b32.xlu0 %v202, 96
    %v494 = vpop.permute.xlu0 %493
    %495 = vrot.lane.b32.xlu0 %v206, 96
    %v496 = vpop.permute.xlu0 %495
    %497 = vrot.lane.b32.xlu0 %v208, 96
    %v498 = vpop.permute.xlu0 %497
    %v507 = vcombine.low %v484, %v492
    %v508 = vcombine.high %v484, %v492
    %v510 = vunpack.c.l.s4 1983009808
    %v511 = vunpack.c.0.s8 %v510
    %v512 = vlaneseq
    %v513 = vshrl.u32 %v512, 7
    %v514 = vsub.s32 %v511, %v513
    %v515 = vrot.slane %v507, %v514
    %v517 = vunpack.c.l.s4 1983009808
    %v518 = vunpack.c.0.s8 %v517
    %v519 = vlaneseq
    %v520 = vshrl.u32 %v519, 7
    %v521 = vsub.s32 %v518, %v520
    %v522 = vrot.slane %v508, %v521
    %v523 = vcombine.low %v488, %v496
    %v524 = vcombine.high %v488, %v496
    %v526 = vunpack.c.l.s4 1983009808
    %v527 = vunpack.c.0.s8 %v526
    %v528 = vlaneseq
    %v529 = vshrl.u32 %v528, 7
    %v530 = vsub.s32 %v527, %v529
    %v531 = vrot.slane %v523, %v530
    %v533 = vunpack.c.l.s4 1983009808
    %v534 = vunpack.c.0.s8 %v533
    %v535 = vlaneseq
    %v536 = vshrl.u32 %v535, 7
    %v537 = vsub.s32 %v534, %v536
    %v538 = vrot.slane %v524, %v537
    %v539 = vcombine.low %v515, %v531
    %v540 = vcombine.high %v515, %v531
    %v542 = vunpack.c.l.s4 1934713408
    %v543 = vunpack.c.0.s8 %v542
    %v544 = vlaneseq
    %v545 = vshrl.u32 %v544, 7
    %v546 = vsub.s32 %v543, %v545
    %v547 = vrot.slane %v539, %v546
    %v549 = vunpack.c.l.s4 1934713408
    %v550 = vunpack.c.0.s8 %v549
    %v551 = vlaneseq
    %v552 = vshrl.u32 %v551, 7
    %v553 = vsub.s32 %v550, %v552
    %v554 = vrot.slane %v540, %v553
    %v555 = vcombine.low %v522, %v538
    %v556 = vcombine.high %v522, %v538
    %v558 = vunpack.c.l.s4 1934713408
    %v559 = vunpack.c.0.s8 %v558
    %v560 = vlaneseq
    %v561 = vshrl.u32 %v560, 7
    %v562 = vsub.s32 %v559, %v561
    %v563 = vrot.slane %v555, %v562
    %v565 = vunpack.c.l.s4 1934713408
    %v566 = vunpack.c.0.s8 %v565
    %v567 = vlaneseq
    %v568 = vshrl.u32 %v567, 7
    %v569 = vsub.s32 %v566, %v568
    %v570 = vrot.slane %v556, %v569
    %v571 = vcombine.high %v547, 0.0
    %v572 = vcombine.high %v554, 0.0
    %v573 = vcombine.high %v563, 0.0
    %v574 = vcombine.high %v570, 0.0
    %v575 = vcombine.low %v486, %v494
    %v576 = vcombine.high %v486, %v494
    %v578 = vunpack.c.l.s4 1983009808
    %v579 = vunpack.c.0.s8 %v578
    %v580 = vlaneseq
    %v581 = vshrl.u32 %v580, 7
    %v582 = vsub.s32 %v579, %v581
    %v583 = vrot.slane %v575, %v582
    %v585 = vunpack.c.l.s4 1983009808
    %v586 = vunpack.c.0.s8 %v585
    %v587 = vlaneseq
    %v588 = vshrl.u32 %v587, 7
    %v589 = vsub.s32 %v586, %v588
    %v590 = vrot.slane %v576, %v589
    %v591 = vcombine.low %v490, %v498
    %v592 = vcombine.high %v490, %v498
    %v594 = vunpack.c.l.s4 1983009808
    %v595 = vunpack.c.0.s8 %v594
    %v596 = vlaneseq
    %v597 = vshrl.u32 %v596, 7
    %v598 = vsub.s32 %v595, %v597
    %v599 = vrot.slane %v591, %v598
    %v601 = vunpack.c.l.s4 1983009808
    %v602 = vunpack.c.0.s8 %v601
    %v603 = vlaneseq
    %v604 = vshrl.u32 %v603, 7
    %v605 = vsub.s32 %v602, %v604
    %v606 = vrot.slane %v592, %v605
    %v607 = vcombine.low %v583, %v599
    %v608 = vcombine.high %v583, %v599
    %v610 = vunpack.c.l.s4 1934713408
    %v611 = vunpack.c.0.s8 %v610
    %v612 = vlaneseq
    %v613 = vshrl.u32 %v612, 7
    %v614 = vsub.s32 %v611, %v613
    %v615 = vrot.slane %v607, %v614
    %v617 = vunpack.c.l.s4 1934713408
    %v618 = vunpack.c.0.s8 %v617
    %v619 = vlaneseq
    %v620 = vshrl.u32 %v619, 7
    %v621 = vsub.s32 %v618, %v620
    %v622 = vrot.slane %v608, %v621
    %v623 = vcombine.low %v590, %v606
    %v624 = vcombine.high %v590, %v606
    %v626 = vunpack.c.l.s4 1934713408
    %v627 = vunpack.c.0.s8 %v626
    %v628 = vlaneseq
    %v629 = vshrl.u32 %v628, 7
    %v630 = vsub.s32 %v627, %v629
    %v631 = vrot.slane %v623, %v630
    %v633 = vunpack.c.l.s4 1934713408
    %v634 = vunpack.c.0.s8 %v633
    %v635 = vlaneseq
    %v636 = vshrl.u32 %v635, 7
    %v637 = vsub.s32 %v634, %v636
    %v638 = vrot.slane %v624, %v637
    %v639 = vcombine.high %v615, 0.0
    %v640 = vcombine.high %v622, 0.0
    %v641 = vcombine.high %v631, 0.0
    %v642 = vcombine.high %v638, 0.0
    %643 = vxpose.xlu0.b32.start [1/16] %v547, 128
    %644 = vxpose.xlu0.b32.cont [2/16] 0.0, 128
    %645 = vxpose.xlu0.b32.cont [3/16] 0.0, 128
    %646 = vxpose.xlu0.b32.cont [4/16] 0.0, 128
    %647 = vxpose.xlu0.b32.cont [5/16] 0.0, 128
    %648 = vxpose.xlu0.b32.cont [6/16] 0.0, 128
    %649 = vxpose.xlu0.b32.cont [7/16] 0.0, 128
    %650 = vxpose.xlu0.b32.cont [8/16] 0.0, 128
    %651 = vxpose.xlu0.b32.cont [9/16] 0.0, 128
    %652 = vxpose.xlu0.b32.cont [10/16] 0.0, 128
    %653 = vxpose.xlu0.b32.cont [11/16] 0.0, 128
    %654 = vxpose.xlu0.b32.cont [12/16] 0.0, 128
    %655 = vxpose.xlu0.b32.cont [13/16] 0.0, 128
    %656 = vxpose.xlu0.b32.cont [14/16] 0.0, 128
    %657 = vxpose.xlu0.b32.cont [15/16] 0.0, 128
    %658 = vxpose.xlu0.b32.end [16/16] 0.0, 128
    %v659 = vpop.trf.xlu0
    %v660 = vpop.trf.xlu0
    %v661 = vpop.trf.xlu0
    %v662 = vpop.trf.xlu0
    %v663 = vpop.trf.xlu0
    %v664 = vpop.trf.xlu0
    %v665 = vpop.trf.xlu0
    %v666 = vpop.trf.xlu0
    %v667 = vpop.trf.xlu0
    %v668 = vpop.trf.xlu0
    %v669 = vpop.trf.xlu0
    %v670 = vpop.trf.xlu0
    %v671 = vpop.trf.xlu0
    %v672 = vpop.trf.xlu0
    %v673 = vpop.trf.xlu0
    %v674 = vpop.trf.xlu0
    %675 = vxpose.xlu0.b32.start [1/16] %v571, 128
    %676 = vxpose.xlu0.b32.cont [2/16] 0.0, 128
    %677 = vxpose.xlu0.b32.cont [3/16] 0.0, 128
    %678 = vxpose.xlu0.b32.cont [4/16] 0.0, 128
    %679 = vxpose.xlu0.b32.cont [5/16] 0.0, 128
    %680 = vxpose.xlu0.b32.cont [6/16] 0.0, 128
    %681 = vxpose.xlu0.b32.cont [7/16] 0.0, 128
    %682 = vxpose.xlu0.b32.cont [8/16] 0.0, 128
    %683 = vxpose.xlu0.b32.cont [9/16] 0.0, 128
    %684 = vxpose.xlu0.b32.cont [10/16] 0.0, 128
    %685 = vxpose.xlu0.b32.cont [11/16] 0.0, 128
    %686 = vxpose.xlu0.b32.cont [12/16] 0.0, 128
    %687 = vxpose.xlu0.b32.cont [13/16] 0.0, 128
    %688 = vxpose.xlu0.b32.cont [14/16] 0.0, 128
    %689 = vxpose.xlu0.b32.cont [15/16] 0.0, 128
    %690 = vxpose.xlu0.b32.end [16/16] 0.0, 128
    %v691 = vpop.trf.xlu0
    %v692 = vpop.trf.xlu0
    %v693 = vpop.trf.xlu0
    %v694 = vpop.trf.xlu0
    %v695 = vpop.trf.xlu0
    %v696 = vpop.trf.xlu0
    %v697 = vpop.trf.xlu0
    %v698 = vpop.trf.xlu0
    %v699 = vpop.trf.xlu0
    %v700 = vpop.trf.xlu0
    %v701 = vpop.trf.xlu0
    %v702 = vpop.trf.xlu0
    %v703 = vpop.trf.xlu0
    %v704 = vpop.trf.xlu0
    %v705 = vpop.trf.xlu0
    %v706 = vpop.trf.xlu0
    %707 = vxpose.xlu0.b32.start [1/16] %v554, 128
    %708 = vxpose.xlu0.b32.cont [2/16] 0.0, 128
    %709 = vxpose.xlu0.b32.cont [3/16] 0.0, 128
    %710 = vxpose.xlu0.b32.cont [4/16] 0.0, 128
    %711 = vxpose.xlu0.b32.cont [5/16] 0.0, 128
    %712 = vxpose.xlu0.b32.cont [6/16] 0.0, 128
    %713 = vxpose.xlu0.b32.cont [7/16] 0.0, 128
    %714 = vxpose.xlu0.b32.cont [8/16] 0.0, 128
    %715 = vxpose.xlu0.b32.cont [9/16] 0.0, 128
    %716 = vxpose.xlu0.b32.cont [10/16] 0.0, 128
    %717 = vxpose.xlu0.b32.cont [11/16] 0.0, 128
    %718 = vxpose.xlu0.b32.cont [12/16] 0.0, 128
    %719 = vxpose.xlu0.b32.cont [13/16] 0.0, 128
    %720 = vxpose.xlu0.b32.cont [14/16] 0.0, 128
    %721 = vxpose.xlu0.b32.cont [15/16] 0.0, 128
    %722 = vxpose.xlu0.b32.end [16/16] 0.0, 128
    %v723 = vpop.trf.xlu0
    %v724 = vpop.trf.xlu0
    %v725 = vpop.trf.xlu0
    %v726 = vpop.trf.xlu0
    %v727 = vpop.trf.xlu0
    %v728 = vpop.trf.xlu0
    %v729 = vpop.trf.xlu0
    %v730 = vpop.trf.xlu0
    %v731 = vpop.trf.xlu0
    %v732 = vpop.trf.xlu0
    %v733 = vpop.trf.xlu0
    %v734 = vpop.trf.xlu0
    %v735 = vpop.trf.xlu0
    %v736 = vpop.trf.xlu0
    %v737 = vpop.trf.xlu0
    %v738 = vpop.trf.xlu0
    %739 = vxpose.xlu0.b32.start [1/16] %v572, 128
    %740 = vxpose.xlu0.b32.cont [2/16] 0.0, 128
    %741 = vxpose.xlu0.b32.cont [3/16] 0.0, 128
    %742 = vxpose.xlu0.b32.cont [4/16] 0.0, 128
    %743 = vxpose.xlu0.b32.cont [5/16] 0.0, 128
    %744 = vxpose.xlu0.b32.cont [6/16] 0.0, 128
    %745 = vxpose.xlu0.b32.cont [7/16] 0.0, 128
    %746 = vxpose.xlu0.b32.cont [8/16] 0.0, 128
    %747 = vxpose.xlu0.b32.cont [9/16] 0.0, 128
    %748 = vxpose.xlu0.b32.cont [10/16] 0.0, 128
    %749 = vxpose.xlu0.b32.cont [11/16] 0.0, 128
    %750 = vxpose.xlu0.b32.cont [12/16] 0.0, 128
    %751 = vxpose.xlu0.b32.cont [13/16] 0.0, 128
    %752 = vxpose.xlu0.b32.cont [14/16] 0.0, 128
    %753 = vxpose.xlu0.b32.cont [15/16] 0.0, 128
    %754 = vxpose.xlu0.b32.end [16/16] 0.0, 128
    %v755 = vpop.trf.xlu0
    %v756 = vpop.trf.xlu0
    %v757 = vpop.trf.xlu0
    %v758 = vpop.trf.xlu0
    %v759 = vpop.trf.xlu0
    %v760 = vpop.trf.xlu0
    %v761 = vpop.trf.xlu0
    %v762 = vpop.trf.xlu0
    %v763 = vpop.trf.xlu0
    %v764 = vpop.trf.xlu0
    %v765 = vpop.trf.xlu0
    %v766 = vpop.trf.xlu0
    %v767 = vpop.trf.xlu0
    %v768 = vpop.trf.xlu0
    %v769 = vpop.trf.xlu0
    %v770 = vpop.trf.xlu0
    %771 = vxpose.xlu0.b32.start [1/16] %v563, 128
    %772 = vxpose.xlu0.b32.cont [2/16] 0.0, 128
    %773 = vxpose.xlu0.b32.cont [3/16] 0.0, 128
    %774 = vxpose.xlu0.b32.cont [4/16] 0.0, 128
    %775 = vxpose.xlu0.b32.cont [5/16] 0.0, 128
    %776 = vxpose.xlu0.b32.cont [6/16] 0.0, 128
    %777 = vxpose.xlu0.b32.cont [7/16] 0.0, 128
    %778 = vxpose.xlu0.b32.cont [8/16] 0.0, 128
    %779 = vxpose.xlu0.b32.cont [9/16] 0.0, 128
    %780 = vxpose.xlu0.b32.cont [10/16] 0.0, 128
    %781 = vxpose.xlu0.b32.cont [11/16] 0.0, 128
    %782 = vxpose.xlu0.b32.cont [12/16] 0.0, 128
    %783 = vxpose.xlu0.b32.cont [13/16] 0.0, 128
    %784 = vxpose.xlu0.b32.cont [14/16] 0.0, 128
    %785 = vxpose.xlu0.b32.cont [15/16] 0.0, 128
    %786 = vxpose.xlu0.b32.end [16/16] 0.0, 128
    %v787 = vpop.trf.xlu0
    %v788 = vpop.trf.xlu0
    %v789 = vpop.trf.xlu0
    %v790 = vpop.trf.xlu0
    %v791 = vpop.trf.xlu0
    %v792 = vpop.trf.xlu0
    %v793 = vpop.trf.xlu0
    %v794 = vpop.trf.xlu0
    %v795 = vpop.trf.xlu0
    %v796 = vpop.trf.xlu0
    %v797 = vpop.trf.xlu0
    %v798 = vpop.trf.xlu0
    %v799 = vpop.trf.xlu0
    %v800 = vpop.trf.xlu0
    %v801 = vpop.trf.xlu0
    %v802 = vpop.trf.xlu0
    %803 = vxpose.xlu0.b32.start [1/16] %v573, 128
    %804 = vxpose.xlu0.b32.cont [2/16] 0.0, 128
    %805 = vxpose.xlu0.b32.cont [3/16] 0.0, 128
    %806 = vxpose.xlu0.b32.cont [4/16] 0.0, 128
    %807 = vxpose.xlu0.b32.cont [5/16] 0.0, 128
    %808 = vxpose.xlu0.b32.cont [6/16] 0.0, 128
    %809 = vxpose.xlu0.b32.cont [7/16] 0.0, 128
    %810 = vxpose.xlu0.b32.cont [8/16] 0.0, 128
    %811 = vxpose.xlu0.b32.cont [9/16] 0.0, 128
    %812 = vxpose.xlu0.b32.cont [10/16] 0.0, 128
    %813 = vxpose.xlu0.b32.cont [11/16] 0.0, 128
    %814 = vxpose.xlu0.b32.cont [12/16] 0.0, 128
    %815 = vxpose.xlu0.b32.cont [13/16] 0.0, 128
    %816 = vxpose.xlu0.b32.cont [14/16] 0.0, 128
    %817 = vxpose.xlu0.b32.cont [15/16] 0.0, 128
    %818 = vxpose.xlu0.b32.end [16/16] 0.0, 128
    %v819 = vpop.trf.xlu0
    %v820 = vpop.trf.xlu0
    %v821 = vpop.trf.xlu0
    %v822 = vpop.trf.xlu0
    %v823 = vpop.trf.xlu0
    %v824 = vpop.trf.xlu0
    %v825 = vpop.trf.xlu0
    %v826 = vpop.trf.xlu0
    %v827 = vpop.trf.xlu0
    %v828 = vpop.trf.xlu0
    %v829 = vpop.trf.xlu0
    %v830 = vpop.trf.xlu0
    %v831 = vpop.trf.xlu0
    %v832 = vpop.trf.xlu0
    %v833 = vpop.trf.xlu0
    %v834 = vpop.trf.xlu0
    %835 = vxpose.xlu0.b32.start [1/16] %v570, 128
    %836 = vxpose.xlu0.b32.cont [2/16] 0.0, 128
    %837 = vxpose.xlu0.b32.cont [3/16] 0.0, 128
    %838 = vxpose.xlu0.b32.cont [4/16] 0.0, 128
    %839 = vxpose.xlu0.b32.cont [5/16] 0.0, 128
    %840 = vxpose.xlu0.b32.cont [6/16] 0.0, 128
    %841 = vxpose.xlu0.b32.cont [7/16] 0.0, 128
    %842 = vxpose.xlu0.b32.cont [8/16] 0.0, 128
    %843 = vxpose.xlu0.b32.cont [9/16] 0.0, 128
    %844 = vxpose.xlu0.b32.cont [10/16] 0.0, 128
    %845 = vxpose.xlu0.b32.cont [11/16] 0.0, 128
    %846 = vxpose.xlu0.b32.cont [12/16] 0.0, 128
    %847 = vxpose.xlu0.b32.cont [13/16] 0.0, 128
    %848 = vxpose.xlu0.b32.cont [14/16] 0.0, 128
    %849 = vxpose.xlu0.b32.cont [15/16] 0.0, 128
    %850 = vxpose.xlu0.b32.end [16/16] 0.0, 128
    %v851 = vpop.trf.xlu0
    %v852 = vpop.trf.xlu0
    %v853 = vpop.trf.xlu0
    %v854 = vpop.trf.xlu0
    %v855 = vpop.trf.xlu0
    %v856 = vpop.trf.xlu0
    %v857 = vpop.trf.xlu0
    %v858 = vpop.trf.xlu0
    %v859 = vpop.trf.xlu0
    %v860 = vpop.trf.xlu0
    %v861 = vpop.trf.xlu0
    %v862 = vpop.trf.xlu0
    %v863 = vpop.trf.xlu0
    %v864 = vpop.trf.xlu0
    %v865 = vpop.trf.xlu0
    %v866 = vpop.trf.xlu0
    %867 = vxpose.xlu0.b32.start [1/16] %v574, 128
    %868 = vxpose.xlu0.b32.cont [2/16] 0.0, 128
    %869 = vxpose.xlu0.b32.cont [3/16] 0.0, 128
    %870 = vxpose.xlu0.b32.cont [4/16] 0.0, 128
    %871 = vxpose.xlu0.b32.cont [5/16] 0.0, 128
    %872 = vxpose.xlu0.b32.cont [6/16] 0.0, 128
    %873 = vxpose.xlu0.b32.cont [7/16] 0.0, 128
    %874 = vxpose.xlu0.b32.cont [8/16] 0.0, 128
    %875 = vxpose.xlu0.b32.cont [9/16] 0.0, 128
    %876 = vxpose.xlu0.b32.cont [10/16] 0.0, 128
    %877 = vxpose.xlu0.b32.cont [11/16] 0.0, 128
    %878 = vxpose.xlu0.b32.cont [12/16] 0.0, 128
    %879 = vxpose.xlu0.b32.cont [13/16] 0.0, 128
    %880 = vxpose.xlu0.b32.cont [14/16] 0.0, 128
    %881 = vxpose.xlu0.b32.cont [15/16] 0.0, 128
    %882 = vxpose.xlu0.b32.end [16/16] 0.0, 128
    %v883 = vpop.trf.xlu0
    %v884 = vpop.trf.xlu0
    %v885 = vpop.trf.xlu0
    %v886 = vpop.trf.xlu0
    %v887 = vpop.trf.xlu0
    %v888 = vpop.trf.xlu0
    %v889 = vpop.trf.xlu0
    %v890 = vpop.trf.xlu0
    %v891 = vpop.trf.xlu0
    %v892 = vpop.trf.xlu0
    %v893 = vpop.trf.xlu0
    %v894 = vpop.trf.xlu0
    %v895 = vpop.trf.xlu0
    %v896 = vpop.trf.xlu0
    %v897 = vpop.trf.xlu0
    %v898 = vpop.trf.xlu0
    %899 = vxpose.xlu0.b32.start [1/16] %v615, 128
    %900 = vxpose.xlu0.b32.cont [2/16] 0.0, 128
    %901 = vxpose.xlu0.b32.cont [3/16] 0.0, 128
    %902 = vxpose.xlu0.b32.cont [4/16] 0.0, 128
    %903 = vxpose.xlu0.b32.cont [5/16] 0.0, 128
    %904 = vxpose.xlu0.b32.cont [6/16] 0.0, 128
    %905 = vxpose.xlu0.b32.cont [7/16] 0.0, 128
    %906 = vxpose.xlu0.b32.cont [8/16] 0.0, 128
    %907 = vxpose.xlu0.b32.cont [9/16] 0.0, 128
    %908 = vxpose.xlu0.b32.cont [10/16] 0.0, 128
    %909 = vxpose.xlu0.b32.cont [11/16] 0.0, 128
    %910 = vxpose.xlu0.b32.cont [12/16] 0.0, 128
    %911 = vxpose.xlu0.b32.cont [13/16] 0.0, 128
    %912 = vxpose.xlu0.b32.cont [14/16] 0.0, 128
    %913 = vxpose.xlu0.b32.cont [15/16] 0.0, 128
    %914 = vxpose.xlu0.b32.end [16/16] 0.0, 128
    %v915 = vpop.trf.xlu0
    %v916 = vpop.trf.xlu0
    %v917 = vpop.trf.xlu0
    %v918 = vpop.trf.xlu0
    %v919 = vpop.trf.xlu0
    %v920 = vpop.trf.xlu0
    %v921 = vpop.trf.xlu0
    %v922 = vpop.trf.xlu0
    %v923 = vpop.trf.xlu0
    %v924 = vpop.trf.xlu0
    %v925 = vpop.trf.xlu0
    %v926 = vpop.trf.xlu0
    %v927 = vpop.trf.xlu0
    %v928 = vpop.trf.xlu0
    %v929 = vpop.trf.xlu0
    %v930 = vpop.trf.xlu0
    %931 = vxpose.xlu0.b32.start [1/16] %v639, 128
    %932 = vxpose.xlu0.b32.cont [2/16] 0.0, 128
    %933 = vxpose.xlu0.b32.cont [3/16] 0.0, 128
    %934 = vxpose.xlu0.b32.cont [4/16] 0.0, 128
    %935 = vxpose.xlu0.b32.cont [5/16] 0.0, 128
    %936 = vxpose.xlu0.b32.cont [6/16] 0.0, 128
    %937 = vxpose.xlu0.b32.cont [7/16] 0.0, 128
    %938 = vxpose.xlu0.b32.cont [8/16] 0.0, 128
    %939 = vxpose.xlu0.b32.cont [9/16] 0.0, 128
    %940 = vxpose.xlu0.b32.cont [10/16] 0.0, 128
    %941 = vxpose.xlu0.b32.cont [11/16] 0.0, 128
    %942 = vxpose.xlu0.b32.cont [12/16] 0.0, 128
    %943 = vxpose.xlu0.b32.cont [13/16] 0.0, 128
    %944 = vxpose.xlu0.b32.cont [14/16] 0.0, 128
    %945 = vxpose.xlu0.b32.cont [15/16] 0.0, 128
    %946 = vxpose.xlu0.b32.end [16/16] 0.0, 128
    %v947 = vpop.trf.xlu0
    %v948 = vpop.trf.xlu0
    %v949 = vpop.trf.xlu0
    %v950 = vpop.trf.xlu0
    %v951 = vpop.trf.xlu0
    %v952 = vpop.trf.xlu0
    %v953 = vpop.trf.xlu0
    %v954 = vpop.trf.xlu0
    %v955 = vpop.trf.xlu0
    %v956 = vpop.trf.xlu0
    %v957 = vpop.trf.xlu0
    %v958 = vpop.trf.xlu0
    %v959 = vpop.trf.xlu0
    %v960 = vpop.trf.xlu0
    %v961 = vpop.trf.xlu0
    %v962 = vpop.trf.xlu0
    %963 = vxpose.xlu0.b32.start [1/16] %v622, 128
    %964 = vxpose.xlu0.b32.cont [2/16] 0.0, 128
    %965 = vxpose.xlu0.b32.cont [3/16] 0.0, 128
    %966 = vxpose.xlu0.b32.cont [4/16] 0.0, 128
    %967 = vxpose.xlu0.b32.cont [5/16] 0.0, 128
    %968 = vxpose.xlu0.b32.cont [6/16] 0.0, 128
    %969 = vxpose.xlu0.b32.cont [7/16] 0.0, 128
    %970 = vxpose.xlu0.b32.cont [8/16] 0.0, 128
    %971 = vxpose.xlu0.b32.cont [9/16] 0.0, 128
    %972 = vxpose.xlu0.b32.cont [10/16] 0.0, 128
    %973 = vxpose.xlu0.b32.cont [11/16] 0.0, 128
    %974 = vxpose.xlu0.b32.cont [12/16] 0.0, 128
    %975 = vxpose.xlu0.b32.cont [13/16] 0.0, 128
    %976 = vxpose.xlu0.b32.cont [14/16] 0.0, 128
    %977 = vxpose.xlu0.b32.cont [15/16] 0.0, 128
    %978 = vxpose.xlu0.b32.end [16/16] 0.0, 128
    %v979 = vpop.trf.xlu0
    %v980 = vpop.trf.xlu0
    %v981 = vpop.trf.xlu0
    %v982 = vpop.trf.xlu0
    %v983 = vpop.trf.xlu0
    %v984 = vpop.trf.xlu0
    %v985 = vpop.trf.xlu0
    %v986 = vpop.trf.xlu0
    %v987 = vpop.trf.xlu0
    %v988 = vpop.trf.xlu0
    %v989 = vpop.trf.xlu0
    %v990 = vpop.trf.xlu0
    %v991 = vpop.trf.xlu0
    %v992 = vpop.trf.xlu0
    %v993 = vpop.trf.xlu0
    %v994 = vpop.trf.xlu0
    %995 = vxpose.xlu0.b32.start [1/16] %v640, 128
    %996 = vxpose.xlu0.b32.cont [2/16] 0.0, 128
    %997 = vxpose.xlu0.b32.cont [3/16] 0.0, 128
    %998 = vxpose.xlu0.b32.cont [4/16] 0.0, 128
    %999 = vxpose.xlu0.b32.cont [5/16] 0.0, 128
    %1000 = vxpose.xlu0.b32.cont [6/16] 0.0, 128
    %1001 = vxpose.xlu0.b32.cont [7/16] 0.0, 128
    %1002 = vxpose.xlu0.b32.cont [8/16] 0.0, 128
    %1003 = vxpose.xlu0.b32.cont [9/16] 0.0, 128
    %1004 = vxpose.xlu0.b32.cont [10/16] 0.0, 128
    %1005 = vxpose.xlu0.b32.cont [11/16] 0.0, 128
    %1006 = vxpose.xlu0.b32.cont [12/16] 0.0, 128
    %1007 = vxpose.xlu0.b32.cont [13/16] 0.0, 128
    %1008 = vxpose.xlu0.b32.cont [14/16] 0.0, 128
    %1009 = vxpose.xlu0.b32.cont [15/16] 0.0, 128
    %1010 = vxpose.xlu0.b32.end [16/16] 0.0, 128
    %v1011 = vpop.trf.xlu0
    %v1012 = vpop.trf.xlu0
    %v1013 = vpop.trf.xlu0
    %v1014 = vpop.trf.xlu0
    %v1015 = vpop.trf.xlu0
    %v1016 = vpop.trf.xlu0
    %v1017 = vpop.trf.xlu0
    %v1018 = vpop.trf.xlu0
    %v1019 = vpop.trf.xlu0
    %v1020 = vpop.trf.xlu0
    %v1021 = vpop.trf.xlu0
    %v1022 = vpop.trf.xlu0
    %v1023 = vpop.trf.xlu0
    %v1024 = vpop.trf.xlu0
    %v1025 = vpop.trf.xlu0
    %v1026 = vpop.trf.xlu0
    %1027 = vxpose.xlu0.b32.start [1/16] %v631, 128
    %1028 = vxpose.xlu0.b32.cont [2/16] 0.0, 128
    %1029 = vxpose.xlu0.b32.cont [3/16] 0.0, 128
    %1030 = vxpose.xlu0.b32.cont [4/16] 0.0, 128
    %1031 = vxpose.xlu0.b32.cont [5/16] 0.0, 128
    %1032 = vxpose.xlu0.b32.cont [6/16] 0.0, 128
    %1033 = vxpose.xlu0.b32.cont [7/16] 0.0, 128
    %1034 = vxpose.xlu0.b32.cont [8/16] 0.0, 128
    %1035 = vxpose.xlu0.b32.cont [9/16] 0.0, 128
    %1036 = vxpose.xlu0.b32.cont [10/16] 0.0, 128
    %1037 = vxpose.xlu0.b32.cont [11/16] 0.0, 128
    %1038 = vxpose.xlu0.b32.cont [12/16] 0.0, 128
    %1039 = vxpose.xlu0.b32.cont [13/16] 0.0, 128
    %1040 = vxpose.xlu0.b32.cont [14/16] 0.0, 128
    %1041 = vxpose.xlu0.b32.cont [15/16] 0.0, 128
    %1042 = vxpose.xlu0.b32.end [16/16] 0.0, 128
    %v1043 = vpop.trf.xlu0
    %v1044 = vpop.trf.xlu0
    %v1045 = vpop.trf.xlu0
    %v1046 = vpop.trf.xlu0
    %v1047 = vpop.trf.xlu0
    %v1048 = vpop.trf.xlu0
    %v1049 = vpop.trf.xlu0
    %v1050 = vpop.trf.xlu0
    %v1051 = vpop.trf.xlu0
    %v1052 = vpop.trf.xlu0
    %v1053 = vpop.trf.xlu0
    %v1054 = vpop.trf.xlu0
    %v1055 = vpop.trf.xlu0
    %v1056 = vpop.trf.xlu0
    %v1057 = vpop.trf.xlu0
    %v1058 = vpop.trf.xlu0
    %1059 = vxpose.xlu0.b32.start [1/16] %v641, 128
    %1060 = vxpose.xlu0.b32.cont [2/16] 0.0, 128
    %1061 = vxpose.xlu0.b32.cont [3/16] 0.0, 128
    %1062 = vxpose.xlu0.b32.cont [4/16] 0.0, 128
    %1063 = vxpose.xlu0.b32.cont [5/16] 0.0, 128
    %1064 = vxpose.xlu0.b32.cont [6/16] 0.0, 128
    %1065 = vxpose.xlu0.b32.cont [7/16] 0.0, 128
    %1066 = vxpose.xlu0.b32.cont [8/16] 0.0, 128
    %1067 = vxpose.xlu0.b32.cont [9/16] 0.0, 128
    %1068 = vxpose.xlu0.b32.cont [10/16] 0.0, 128
    %1069 = vxpose.xlu0.b32.cont [11/16] 0.0, 128
    %1070 = vxpose.xlu0.b32.cont [12/16] 0.0, 128
    %1071 = vxpose.xlu0.b32.cont [13/16] 0.0, 128
    %1072 = vxpose.xlu0.b32.cont [14/16] 0.0, 128
    %1073 = vxpose.xlu0.b32.cont [15/16] 0.0, 128
    %1074 = vxpose.xlu0.b32.end [16/16] 0.0, 128
    %v1075 = vpop.trf.xlu0
    %v1076 = vpop.trf.xlu0
    %v1077 = vpop.trf.xlu0
    %v1078 = vpop.trf.xlu0
    %v1079 = vpop.trf.xlu0
    %v1080 = vpop.trf.xlu0
    %v1081 = vpop.trf.xlu0
    %v1082 = vpop.trf.xlu0
    %v1083 = vpop.trf.xlu0
    %v1084 = vpop.trf.xlu0
    %v1085 = vpop.trf.xlu0
    %v1086 = vpop.trf.xlu0
    %v1087 = vpop.trf.xlu0
    %v1088 = vpop.trf.xlu0
    %v1089 = vpop.trf.xlu0
    %v1090 = vpop.trf.xlu0
    %1091 = vxpose.xlu0.b32.start [1/16] %v638, 128
    %1092 = vxpose.xlu0.b32.cont [2/16] 0.0, 128
    %1093 = vxpose.xlu0.b32.cont [3/16] 0.0, 128
    %1094 = vxpose.xlu0.b32.cont [4/16] 0.0, 128
    %1095 = vxpose.xlu0.b32.cont [5/16] 0.0, 128
    %1096 = vxpose.xlu0.b32.cont [6/16] 0.0, 128
    %1097 = vxpose.xlu0.b32.cont [7/16] 0.0, 128
    %1098 = vxpose.xlu0.b32.cont [8/16] 0.0, 128
    %1099 = vxpose.xlu0.b32.cont [9/16] 0.0, 128
    %1100 = vxpose.xlu0.b32.cont [10/16] 0.0, 128
    %1101 = vxpose.xlu0.b32.cont [11/16] 0.0, 128
    %1102 = vxpose.xlu0.b32.cont [12/16] 0.0, 128
    %1103 = vxpose.xlu0.b32.cont [13/16] 0.0, 128
    %1104 = vxpose.xlu0.b32.cont [14/16] 0.0, 128
    %1105 = vxpose.xlu0.b32.cont [15/16] 0.0, 128
    %1106 = vxpose.xlu0.b32.end [16/16] 0.0, 128
    %v1107 = vpop.trf.xlu0
    %v1108 = vpop.trf.xlu0
    %v1109 = vpop.trf.xlu0
    %v1110 = vpop.trf.xlu0
    %v1111 = vpop.trf.xlu0
    %v1112 = vpop.trf.xlu0
    %v1113 = vpop.trf.xlu0
    %v1114 = vpop.trf.xlu0
    %v1115 = vpop.trf.xlu0
    %v1116 = vpop.trf.xlu0
    %v1117 = vpop.trf.xlu0
    %v1118 = vpop.trf.xlu0
    %v1119 = vpop.trf.xlu0
    %v1120 = vpop.trf.xlu0
    %v1121 = vpop.trf.xlu0
    %v1122 = vpop.trf.xlu0
    %1123 = vxpose.xlu0.b32.start [1/16] %v642, 128
    %1124 = vxpose.xlu0.b32.cont [2/16] 0.0, 128
    %1125 = vxpose.xlu0.b32.cont [3/16] 0.0, 128
    %1126 = vxpose.xlu0.b32.cont [4/16] 0.0, 128
    %1127 = vxpose.xlu0.b32.cont [5/16] 0.0, 128
    %1128 = vxpose.xlu0.b32.cont [6/16] 0.0, 128
    %1129 = vxpose.xlu0.b32.cont [7/16] 0.0, 128
    %1130 = vxpose.xlu0.b32.cont [8/16] 0.0, 128
    %1131 = vxpose.xlu0.b32.cont [9/16] 0.0, 128
    %1132 = vxpose.xlu0.b32.cont [10/16] 0.0, 128
    %1133 = vxpose.xlu0.b32.cont [11/16] 0.0, 128
    %1134 = vxpose.xlu0.b32.cont [12/16] 0.0, 128
    %1135 = vxpose.xlu0.b32.cont [13/16] 0.0, 128
    %1136 = vxpose.xlu0.b32.cont [14/16] 0.0, 128
    %1137 = vxpose.xlu0.b32.cont [15/16] 0.0, 128
    %1138 = vxpose.xlu0.b32.end [16/16] 0.0, 128
    %v1139 = vpop.trf.xlu0
    %v1140 = vpop.trf.xlu0
    %v1141 = vpop.trf.xlu0
    %v1142 = vpop.trf.xlu0
    %v1143 = vpop.trf.xlu0
    %v1144 = vpop.trf.xlu0
    %v1145 = vpop.trf.xlu0
    %v1146 = vpop.trf.xlu0
    %v1147 = vpop.trf.xlu0
    %v1148 = vpop.trf.xlu0
    %v1149 = vpop.trf.xlu0
    %v1150 = vpop.trf.xlu0
    %v1151 = vpop.trf.xlu0
    %v1152 = vpop.trf.xlu0
    %v1153 = vpop.trf.xlu0
    %v1154 = vpop.trf.xlu0
    %v1155 = vcombine.low %v659, %v723
    %v1156 = vcombine.high %v659, %v723
    %v1158 = vunpack.c.l.s4 1983009808
    %v1159 = vunpack.c.0.s8 %v1158
    %v1160 = vlaneseq
    %v1161 = vshrl.u32 %v1160, 7
    %v1162 = vsub.s32 %v1159, %v1161
    %v1163 = vrot.slane %v1155, %v1162
    %v1165 = vunpack.c.l.s4 1983009808
    %v1166 = vunpack.c.0.s8 %v1165
    %v1167 = vlaneseq
    %v1168 = vshrl.u32 %v1167, 7
    %v1169 = vsub.s32 %v1166, %v1168
    %v1170 = vrot.slane %v1156, %v1169
    %v1171 = vcombine.low %v691, %v755
    %v1172 = vcombine.high %v691, %v755
    %v1174 = vunpack.c.l.s4 1983009808
    %v1175 = vunpack.c.0.s8 %v1174
    %v1176 = vlaneseq
    %v1177 = vshrl.u32 %v1176, 7
    %v1178 = vsub.s32 %v1175, %v1177
    %v1179 = vrot.slane %v1171, %v1178
    %v1181 = vunpack.c.l.s4 1983009808
    %v1182 = vunpack.c.0.s8 %v1181
    %v1183 = vlaneseq
    %v1184 = vshrl.u32 %v1183, 7
    %v1185 = vsub.s32 %v1182, %v1184
    %v1186 = vrot.slane %v1172, %v1185
    %v1187 = vcombine.low %v787, %v851
    %v1188 = vcombine.high %v787, %v851
    %v1190 = vunpack.c.l.s4 1983009808
    %v1191 = vunpack.c.0.s8 %v1190
    %v1192 = vlaneseq
    %v1193 = vshrl.u32 %v1192, 7
    %v1194 = vsub.s32 %v1191, %v1193
    %v1195 = vrot.slane %v1187, %v1194
    %v1197 = vunpack.c.l.s4 1983009808
    %v1198 = vunpack.c.0.s8 %v1197
    %v1199 = vlaneseq
    %v1200 = vshrl.u32 %v1199, 7
    %v1201 = vsub.s32 %v1198, %v1200
    %v1202 = vrot.slane %v1188, %v1201
    %v1203 = vcombine.low %v819, %v883
    %v1204 = vcombine.high %v819, %v883
    %v1206 = vunpack.c.l.s4 1983009808
    %v1207 = vunpack.c.0.s8 %v1206
    %v1208 = vlaneseq
    %v1209 = vshrl.u32 %v1208, 7
    %v1210 = vsub.s32 %v1207, %v1209
    %v1211 = vrot.slane %v1203, %v1210
    %v1213 = vunpack.c.l.s4 1983009808
    %v1214 = vunpack.c.0.s8 %v1213
    %v1215 = vlaneseq
    %v1216 = vshrl.u32 %v1215, 7
    %v1217 = vsub.s32 %v1214, %v1216
    %v1218 = vrot.slane %v1204, %v1217
    %v1219 = vcombine.low %v1163, %v1179
    %v1220 = vcombine.high %v1163, %v1179
    %v1222 = vunpack.c.l.s4 1934713408
    %v1223 = vunpack.c.0.s8 %v1222
    %v1224 = vlaneseq
    %v1225 = vshrl.u32 %v1224, 7
    %v1226 = vsub.s32 %v1223, %v1225
    %v1227 = vrot.slane %v1219, %v1226
    %v1229 = vunpack.c.l.s4 1934713408
    %v1230 = vunpack.c.0.s8 %v1229
    %v1231 = vlaneseq
    %v1232 = vshrl.u32 %v1231, 7
    %v1233 = vsub.s32 %v1230, %v1232
    %v1234 = vrot.slane %v1220, %v1233
    %v1235 = vcombine.low %v1170, %v1186
    %v1236 = vcombine.high %v1170, %v1186
    %v1238 = vunpack.c.l.s4 1934713408
    %v1239 = vunpack.c.0.s8 %v1238
    %v1240 = vlaneseq
    %v1241 = vshrl.u32 %v1240, 7
    %v1242 = vsub.s32 %v1239, %v1241
    %v1243 = vrot.slane %v1235, %v1242
    %v1245 = vunpack.c.l.s4 1934713408
    %v1246 = vunpack.c.0.s8 %v1245
    %v1247 = vlaneseq
    %v1248 = vshrl.u32 %v1247, 7
    %v1249 = vsub.s32 %v1246, %v1248
    %v1250 = vrot.slane %v1236, %v1249
    %v1251 = vcombine.low %v1195, %v1211
    %v1252 = vcombine.high %v1195, %v1211
    %v1254 = vunpack.c.l.s4 1934713408
    %v1255 = vunpack.c.0.s8 %v1254
    %v1256 = vlaneseq
    %v1257 = vshrl.u32 %v1256, 7
    %v1258 = vsub.s32 %v1255, %v1257
    %v1259 = vrot.slane %v1251, %v1258
    %v1261 = vunpack.c.l.s4 1934713408
    %v1262 = vunpack.c.0.s8 %v1261
    %v1263 = vlaneseq
    %v1264 = vshrl.u32 %v1263, 7
    %v1265 = vsub.s32 %v1262, %v1264
    %v1266 = vrot.slane %v1252, %v1265
    %v1267 = vcombine.low %v1202, %v1218
    %v1268 = vcombine.high %v1202, %v1218
    %v1270 = vunpack.c.l.s4 1934713408
    %v1271 = vunpack.c.0.s8 %v1270
    %v1272 = vlaneseq
    %v1273 = vshrl.u32 %v1272, 7
    %v1274 = vsub.s32 %v1271, %v1273
    %v1275 = vrot.slane %v1267, %v1274
    %v1277 = vunpack.c.l.s4 1934713408
    %v1278 = vunpack.c.0.s8 %v1277
    %v1279 = vlaneseq
    %v1280 = vshrl.u32 %v1279, 7
    %v1281 = vsub.s32 %v1278, %v1280
    %v1282 = vrot.slane %v1268, %v1281
    %v1283 = vcombine.low %v1227, %v1259
    %v1284 = vcombine.high %v1227, %v1259
    %v1285 = vcombine.low %v1234, %v1266
    %v1286 = vcombine.high %v1234, %v1266
    %v1287 = vcombine.low %v1243, %v1275
    %v1288 = vcombine.high %v1243, %v1275
    %v1289 = vcombine.low %v1250, %v1282
    %v1290 = vcombine.high %v1250, %v1282
    %v1291 = vcombine.low %v915, %v979
    %v1292 = vcombine.high %v915, %v979
    %v1294 = vunpack.c.l.s4 1983009808
    %v1295 = vunpack.c.0.s8 %v1294
    %v1296 = vlaneseq
    %v1297 = vshrl.u32 %v1296, 7
    %v1298 = vsub.s32 %v1295, %v1297
    %v1299 = vrot.slane %v1291, %v1298
    %v1301 = vunpack.c.l.s4 1983009808
    %v1302 = vunpack.c.0.s8 %v1301
    %v1303 = vlaneseq
    %v1304 = vshrl.u32 %v1303, 7
    %v1305 = vsub.s32 %v1302, %v1304
    %v1306 = vrot.slane %v1292, %v1305
    %v1307 = vcombine.low %v947, %v1011
    %v1308 = vcombine.high %v947, %v1011
    %v1310 = vunpack.c.l.s4 1983009808
    %v1311 = vunpack.c.0.s8 %v1310
    %v1312 = vlaneseq
    %v1313 = vshrl.u32 %v1312, 7
    %v1314 = vsub.s32 %v1311, %v1313
    %v1315 = vrot.slane %v1307, %v1314
    %v1317 = vunpack.c.l.s4 1983009808
    %v1318 = vunpack.c.0.s8 %v1317
    %v1319 = vlaneseq
    %v1320 = vshrl.u32 %v1319, 7
    %v1321 = vsub.s32 %v1318, %v1320
    %v1322 = vrot.slane %v1308, %v1321
    %v1323 = vcombine.low %v1043, %v1107
    %v1324 = vcombine.high %v1043, %v1107
    %v1326 = vunpack.c.l.s4 1983009808
    %v1327 = vunpack.c.0.s8 %v1326
    %v1328 = vlaneseq
    %v1329 = vshrl.u32 %v1328, 7
    %v1330 = vsub.s32 %v1327, %v1329
    %v1331 = vrot.slane %v1323, %v1330
    %v1333 = vunpack.c.l.s4 1983009808
    %v1334 = vunpack.c.0.s8 %v1333
    %v1335 = vlaneseq
    %v1336 = vshrl.u32 %v1335, 7
    %v1337 = vsub.s32 %v1334, %v1336
    %v1338 = vrot.slane %v1324, %v1337
    %v1339 = vcombine.low %v1075, %v1139
    %v1340 = vcombine.high %v1075, %v1139
    %v1342 = vunpack.c.l.s4 1983009808
    %v1343 = vunpack.c.0.s8 %v1342
    %v1344 = vlaneseq
    %v1345 = vshrl.u32 %v1344, 7
    %v1346 = vsub.s32 %v1343, %v1345
    %v1347 = vrot.slane %v1339, %v1346
    %v1349 = vunpack.c.l.s4 1983009808
    %v1350 = vunpack.c.0.s8 %v1349
    %v1351 = vlaneseq
    %v1352 = vshrl.u32 %v1351, 7
    %v1353 = vsub.s32 %v1350, %v1352
    %v1354 = vrot.slane %v1340, %v1353
    %v1355 = vcombine.low %v1299, %v1315
    %v1356 = vcombine.high %v1299, %v1315
    %v1358 = vunpack.c.l.s4 1934713408
    %v1359 = vunpack.c.0.s8 %v1358
    %v1360 = vlaneseq
    %v1361 = vshrl.u32 %v1360, 7
    %v1362 = vsub.s32 %v1359, %v1361
    %v1363 = vrot.slane %v1355, %v1362
    %v1365 = vunpack.c.l.s4 1934713408
    %v1366 = vunpack.c.0.s8 %v1365
    %v1367 = vlaneseq
    %v1368 = vshrl.u32 %v1367, 7
    %v1369 = vsub.s32 %v1366, %v1368
    %v1370 = vrot.slane %v1356, %v1369
    %v1371 = vcombine.low %v1306, %v1322
    %v1372 = vcombine.high %v1306, %v1322
    %v1374 = vunpack.c.l.s4 1934713408
    %v1375 = vunpack.c.0.s8 %v1374
    %v1376 = vlaneseq
    %v1377 = vshrl.u32 %v1376, 7
    %v1378 = vsub.s32 %v1375, %v1377
    %v1379 = vrot.slane %v1371, %v1378
    %v1381 = vunpack.c.l.s4 1934713408
    %v1382 = vunpack.c.0.s8 %v1381
    %v1383 = vlaneseq
    %v1384 = vshrl.u32 %v1383, 7
    %v1385 = vsub.s32 %v1382, %v1384
    %v1386 = vrot.slane %v1372, %v1385
    %v1387 = vcombine.low %v1331, %v1347
    %v1388 = vcombine.high %v1331, %v1347
    %v1390 = vunpack.c.l.s4 1934713408
    %v1391 = vunpack.c.0.s8 %v1390
    %v1392 = vlaneseq
    %v1393 = vshrl.u32 %v1392, 7
    %v1394 = vsub.s32 %v1391, %v1393
    %v1395 = vrot.slane %v1387, %v1394
    %v1397 = vunpack.c.l.s4 1934713408
    %v1398 = vunpack.c.0.s8 %v1397
    %v1399 = vlaneseq
    %v1400 = vshrl.u32 %v1399, 7
    %v1401 = vsub.s32 %v1398, %v1400
    %v1402 = vrot.slane %v1388, %v1401
    %v1403 = vcombine.low %v1338, %v1354
    %v1404 = vcombine.high %v1338, %v1354
    %v1406 = vunpack.c.l.s4 1934713408
    %v1407 = vunpack.c.0.s8 %v1406
    %v1408 = vlaneseq
    %v1409 = vshrl.u32 %v1408, 7
    %v1410 = vsub.s32 %v1407, %v1409
    %v1411 = vrot.slane %v1403, %v1410
    %v1413 = vunpack.c.l.s4 1934713408
    %v1414 = vunpack.c.0.s8 %v1413
    %v1415 = vlaneseq
    %v1416 = vshrl.u32 %v1415, 7
    %v1417 = vsub.s32 %v1414, %v1416
    %v1418 = vrot.slane %v1404, %v1417
    %v1419 = vcombine.low %v1363, %v1395
    %v1420 = vcombine.high %v1363, %v1395
    %v1421 = vcombine.low %v1370, %v1402
    %v1422 = vcombine.high %v1370, %v1402
    %v1423 = vcombine.low %v1379, %v1411
    %v1424 = vcombine.high %v1379, %v1411
    %v1425 = vcombine.low %v1386, %v1418
    %v1426 = vcombine.high %v1386, %v1418
    %1427 = vxpose.xlu0.b32.start [1/16] %v1283, 128
    %1428 = vxpose.xlu0.b32.cont [2/16] 0.0, 128
    %1429 = vxpose.xlu0.b32.cont [3/16] 0.0, 128
    %1430 = vxpose.xlu0.b32.cont [4/16] 0.0, 128
    %1431 = vxpose.xlu0.b32.cont [5/16] 0.0, 128
    %1432 = vxpose.xlu0.b32.cont [6/16] 0.0, 128
    %1433 = vxpose.xlu0.b32.cont [7/16] 0.0, 128
    %1434 = vxpose.xlu0.b32.cont [8/16] 0.0, 128
    %1435 = vxpose.xlu0.b32.cont [9/16] 0.0, 128
    %1436 = vxpose.xlu0.b32.cont [10/16] 0.0, 128
    %1437 = vxpose.xlu0.b32.cont [11/16] 0.0, 128
    %1438 = vxpose.xlu0.b32.cont [12/16] 0.0, 128
    %1439 = vxpose.xlu0.b32.cont [13/16] 0.0, 128
    %1440 = vxpose.xlu0.b32.cont [14/16] 0.0, 128
    %1441 = vxpose.xlu0.b32.cont [15/16] 0.0, 128
    %1442 = vxpose.xlu0.b32.end [16/16] 0.0, 128
    %v1443 = vpop.trf.xlu0
    %v1444 = vpop.trf.xlu0
    %v1445 = vpop.trf.xlu0
    %v1446 = vpop.trf.xlu0
    %v1447 = vpop.trf.xlu0
    %v1448 = vpop.trf.xlu0
    %v1449 = vpop.trf.xlu0
    %v1450 = vpop.trf.xlu0
    %v1451 = vpop.trf.xlu0
    %v1452 = vpop.trf.xlu0
    %v1453 = vpop.trf.xlu0
    %v1454 = vpop.trf.xlu0
    %v1455 = vpop.trf.xlu0
    %v1456 = vpop.trf.xlu0
    %v1457 = vpop.trf.xlu0
    %v1458 = vpop.trf.xlu0
    %1459 = vxpose.xlu0.b32.start [1/16] %v1284, 128
    %1460 = vxpose.xlu0.b32.cont [2/16] 0.0, 128
    %1461 = vxpose.xlu0.b32.cont [3/16] 0.0, 128
    %1462 = vxpose.xlu0.b32.cont [4/16] 0.0, 128
    %1463 = vxpose.xlu0.b32.cont [5/16] 0.0, 128
    %1464 = vxpose.xlu0.b32.cont [6/16] 0.0, 128
    %1465 = vxpose.xlu0.b32.cont [7/16] 0.0, 128
    %1466 = vxpose.xlu0.b32.cont [8/16] 0.0, 128
    %1467 = vxpose.xlu0.b32.cont [9/16] 0.0, 128
    %1468 = vxpose.xlu0.b32.cont [10/16] 0.0, 128
    %1469 = vxpose.xlu0.b32.cont [11/16] 0.0, 128
    %1470 = vxpose.xlu0.b32.cont [12/16] 0.0, 128
    %1471 = vxpose.xlu0.b32.cont [13/16] 0.0, 128
    %1472 = vxpose.xlu0.b32.cont [14/16] 0.0, 128
    %1473 = vxpose.xlu0.b32.cont [15/16] 0.0, 128
    %1474 = vxpose.xlu0.b32.end [16/16] 0.0, 128
    %v1475 = vpop.trf.xlu0
    %v1476 = vpop.trf.xlu0
    %v1477 = vpop.trf.xlu0
    %v1478 = vpop.trf.xlu0
    %v1479 = vpop.trf.xlu0
    %v1480 = vpop.trf.xlu0
    %v1481 = vpop.trf.xlu0
    %v1482 = vpop.trf.xlu0
    %v1483 = vpop.trf.xlu0
    %v1484 = vpop.trf.xlu0
    %v1485 = vpop.trf.xlu0
    %v1486 = vpop.trf.xlu0
    %v1487 = vpop.trf.xlu0
    %v1488 = vpop.trf.xlu0
    %v1489 = vpop.trf.xlu0
    %v1490 = vpop.trf.xlu0
    %1491 = vxpose.xlu0.b32.start [1/16] %v1285, 128
    %1492 = vxpose.xlu0.b32.cont [2/16] 0.0, 128
    %1493 = vxpose.xlu0.b32.cont [3/16] 0.0, 128
    %1494 = vxpose.xlu0.b32.cont [4/16] 0.0, 128
    %1495 = vxpose.xlu0.b32.cont [5/16] 0.0, 128
    %1496 = vxpose.xlu0.b32.cont [6/16] 0.0, 128
    %1497 = vxpose.xlu0.b32.cont [7/16] 0.0, 128
    %1498 = vxpose.xlu0.b32.cont [8/16] 0.0, 128
    %1499 = vxpose.xlu0.b32.cont [9/16] 0.0, 128
    %1500 = vxpose.xlu0.b32.cont [10/16] 0.0, 128
    %1501 = vxpose.xlu0.b32.cont [11/16] 0.0, 128
    %1502 = vxpose.xlu0.b32.cont [12/16] 0.0, 128
    %1503 = vxpose.xlu0.b32.cont [13/16] 0.0, 128
    %1504 = vxpose.xlu0.b32.cont [14/16] 0.0, 128
    %1505 = vxpose.xlu0.b32.cont [15/16] 0.0, 128
    %1506 = vxpose.xlu0.b32.end [16/16] 0.0, 128
    %v1507 = vpop.trf.xlu0
    %v1508 = vpop.trf.xlu0
    %v1509 = vpop.trf.xlu0
    %v1510 = vpop.trf.xlu0
    %v1511 = vpop.trf.xlu0
    %v1512 = vpop.trf.xlu0
    %v1513 = vpop.trf.xlu0
    %v1514 = vpop.trf.xlu0
    %v1515 = vpop.trf.xlu0
    %v1516 = vpop.trf.xlu0
    %v1517 = vpop.trf.xlu0
    %v1518 = vpop.trf.xlu0
    %v1519 = vpop.trf.xlu0
    %v1520 = vpop.trf.xlu0
    %v1521 = vpop.trf.xlu0
    %v1522 = vpop.trf.xlu0
    %1523 = vxpose.xlu0.b32.start [1/16] %v1286, 128
    %1524 = vxpose.xlu0.b32.cont [2/16] 0.0, 128
    %1525 = vxpose.xlu0.b32.cont [3/16] 0.0, 128
    %1526 = vxpose.xlu0.b32.cont [4/16] 0.0, 128
    %1527 = vxpose.xlu0.b32.cont [5/16] 0.0, 128
    %1528 = vxpose.xlu0.b32.cont [6/16] 0.0, 128
    %1529 = vxpose.xlu0.b32.cont [7/16] 0.0, 128
    %1530 = vxpose.xlu0.b32.cont [8/16] 0.0, 128
    %1531 = vxpose.xlu0.b32.cont [9/16] 0.0, 128
    %1532 = vxpose.xlu0.b32.cont [10/16] 0.0, 128
    %1533 = vxpose.xlu0.b32.cont [11/16] 0.0, 128
    %1534 = vxpose.xlu0.b32.cont [12/16] 0.0, 128
    %1535 = vxpose.xlu0.b32.cont [13/16] 0.0, 128
    %1536 = vxpose.xlu0.b32.cont [14/16] 0.0, 128
    %1537 = vxpose.xlu0.b32.cont [15/16] 0.0, 128
    %1538 = vxpose.xlu0.b32.end [16/16] 0.0, 128
    %v1539 = vpop.trf.xlu0
    %v1540 = vpop.trf.xlu0
    %v1541 = vpop.trf.xlu0
    %v1542 = vpop.trf.xlu0
    %v1543 = vpop.trf.xlu0
    %v1544 = vpop.trf.xlu0
    %v1545 = vpop.trf.xlu0
    %v1546 = vpop.trf.xlu0
    %v1547 = vpop.trf.xlu0
    %v1548 = vpop.trf.xlu0
    %v1549 = vpop.trf.xlu0
    %v1550 = vpop.trf.xlu0
    %v1551 = vpop.trf.xlu0
    %v1552 = vpop.trf.xlu0
    %v1553 = vpop.trf.xlu0
    %v1554 = vpop.trf.xlu0
    %1555 = vxpose.xlu0.b32.start [1/16] %v1287, 128
    %1556 = vxpose.xlu0.b32.cont [2/16] 0.0, 128
    %1557 = vxpose.xlu0.b32.cont [3/16] 0.0, 128
    %1558 = vxpose.xlu0.b32.cont [4/16] 0.0, 128
    %1559 = vxpose.xlu0.b32.cont [5/16] 0.0, 128
    %1560 = vxpose.xlu0.b32.cont [6/16] 0.0, 128
    %1561 = vxpose.xlu0.b32.cont [7/16] 0.0, 128
    %1562 = vxpose.xlu0.b32.cont [8/16] 0.0, 128
    %1563 = vxpose.xlu0.b32.cont [9/16] 0.0, 128
    %1564 = vxpose.xlu0.b32.cont [10/16] 0.0, 128
    %1565 = vxpose.xlu0.b32.cont [11/16] 0.0, 128
    %1566 = vxpose.xlu0.b32.cont [12/16] 0.0, 128
    %1567 = vxpose.xlu0.b32.cont [13/16] 0.0, 128
    %1568 = vxpose.xlu0.b32.cont [14/16] 0.0, 128
    %1569 = vxpose.xlu0.b32.cont [15/16] 0.0, 128
    %1570 = vxpose.xlu0.b32.end [16/16] 0.0, 128
    %v1571 = vpop.trf.xlu0
    %v1572 = vpop.trf.xlu0
    %v1573 = vpop.trf.xlu0
    %v1574 = vpop.trf.xlu0
    %v1575 = vpop.trf.xlu0
    %v1576 = vpop.trf.xlu0
    %v1577 = vpop.trf.xlu0
    %v1578 = vpop.trf.xlu0
    %v1579 = vpop.trf.xlu0
    %v1580 = vpop.trf.xlu0
    %v1581 = vpop.trf.xlu0
    %v1582 = vpop.trf.xlu0
    %v1583 = vpop.trf.xlu0
    %v1584 = vpop.trf.xlu0
    %v1585 = vpop.trf.xlu0
    %v1586 = vpop.trf.xlu0
    %1587 = vxpose.xlu0.b32.start [1/16] %v1288, 128
    %1588 = vxpose.xlu0.b32.cont [2/16] 0.0, 128
    %1589 = vxpose.xlu0.b32.cont [3/16] 0.0, 128
    %1590 = vxpose.xlu0.b32.cont [4/16] 0.0, 128
    %1591 = vxpose.xlu0.b32.cont [5/16] 0.0, 128
    %1592 = vxpose.xlu0.b32.cont [6/16] 0.0, 128
    %1593 = vxpose.xlu0.b32.cont [7/16] 0.0, 128
    %1594 = vxpose.xlu0.b32.cont [8/16] 0.0, 128
    %1595 = vxpose.xlu0.b32.cont [9/16] 0.0, 128
    %1596 = vxpose.xlu0.b32.cont [10/16] 0.0, 128
    %1597 = vxpose.xlu0.b32.cont [11/16] 0.0, 128
    %1598 = vxpose.xlu0.b32.cont [12/16] 0.0, 128
    %1599 = vxpose.xlu0.b32.cont [13/16] 0.0, 128
    %1600 = vxpose.xlu0.b32.cont [14/16] 0.0, 128
    %1601 = vxpose.xlu0.b32.cont [15/16] 0.0, 128
    %1602 = vxpose.xlu0.b32.end [16/16] 0.0, 128
    %v1603 = vpop.trf.xlu0
    %v1604 = vpop.trf.xlu0
    %v1605 = vpop.trf.xlu0
    %v1606 = vpop.trf.xlu0
    %v1607 = vpop.trf.xlu0
    %v1608 = vpop.trf.xlu0
    %v1609 = vpop.trf.xlu0
    %v1610 = vpop.trf.xlu0
    %v1611 = vpop.trf.xlu0
    %v1612 = vpop.trf.xlu0
    %v1613 = vpop.trf.xlu0
    %v1614 = vpop.trf.xlu0
    %v1615 = vpop.trf.xlu0
    %v1616 = vpop.trf.xlu0
    %v1617 = vpop.trf.xlu0
    %v1618 = vpop.trf.xlu0
    %1619 = vxpose.xlu0.b32.start [1/16] %v1289, 128
    %1620 = vxpose.xlu0.b32.cont [2/16] 0.0, 128
    %1621 = vxpose.xlu0.b32.cont [3/16] 0.0, 128
    %1622 = vxpose.xlu0.b32.cont [4/16] 0.0, 128
    %1623 = vxpose.xlu0.b32.cont [5/16] 0.0, 128
    %1624 = vxpose.xlu0.b32.cont [6/16] 0.0, 128
    %1625 = vxpose.xlu0.b32.cont [7/16] 0.0, 128
    %1626 = vxpose.xlu0.b32.cont [8/16] 0.0, 128
    %1627 = vxpose.xlu0.b32.cont [9/16] 0.0, 128
    %1628 = vxpose.xlu0.b32.cont [10/16] 0.0, 128
    %1629 = vxpose.xlu0.b32.cont [11/16] 0.0, 128
    %1630 = vxpose.xlu0.b32.cont [12/16] 0.0, 128
    %1631 = vxpose.xlu0.b32.cont [13/16] 0.0, 128
    %1632 = vxpose.xlu0.b32.cont [14/16] 0.0, 128
    %1633 = vxpose.xlu0.b32.cont [15/16] 0.0, 128
    %1634 = vxpose.xlu0.b32.end [16/16] 0.0, 128
    %v1635 = vpop.trf.xlu0
    %v1636 = vpop.trf.xlu0
    %v1637 = vpop.trf.xlu0
    %v1638 = vpop.trf.xlu0
    %v1639 = vpop.trf.xlu0
    %v1640 = vpop.trf.xlu0
    %v1641 = vpop.trf.xlu0
    %v1642 = vpop.trf.xlu0
    %v1643 = vpop.trf.xlu0
    %v1644 = vpop.trf.xlu0
    %v1645 = vpop.trf.xlu0
    %v1646 = vpop.trf.xlu0
    %v1647 = vpop.trf.xlu0
    %v1648 = vpop.trf.xlu0
    %v1649 = vpop.trf.xlu0
    %v1650 = vpop.trf.xlu0
    %1651 = vxpose.xlu0.b32.start [1/16] %v1290, 128
    %1652 = vxpose.xlu0.b32.cont [2/16] 0.0, 128
    %1653 = vxpose.xlu0.b32.cont [3/16] 0.0, 128
    %1654 = vxpose.xlu0.b32.cont [4/16] 0.0, 128
    %1655 = vxpose.xlu0.b32.cont [5/16] 0.0, 128
    %1656 = vxpose.xlu0.b32.cont [6/16] 0.0, 128
    %1657 = vxpose.xlu0.b32.cont [7/16] 0.0, 128
    %1658 = vxpose.xlu0.b32.cont [8/16] 0.0, 128
    %1659 = vxpose.xlu0.b32.cont [9/16] 0.0, 128
    %1660 = vxpose.xlu0.b32.cont [10/16] 0.0, 128
    %1661 = vxpose.xlu0.b32.cont [11/16] 0.0, 128
    %1662 = vxpose.xlu0.b32.cont [12/16] 0.0, 128
    %1663 = vxpose.xlu0.b32.cont [13/16] 0.0, 128
    %1664 = vxpose.xlu0.b32.cont [14/16] 0.0, 128
    %1665 = vxpose.xlu0.b32.cont [15/16] 0.0, 128
    %1666 = vxpose.xlu0.b32.end [16/16] 0.0, 128
    %v1667 = vpop.trf.xlu0
    %v1668 = vpop.trf.xlu0
    %v1669 = vpop.trf.xlu0
    %v1670 = vpop.trf.xlu0
    %v1671 = vpop.trf.xlu0
    %v1672 = vpop.trf.xlu0
    %v1673 = vpop.trf.xlu0
    %v1674 = vpop.trf.xlu0
    %v1675 = vpop.trf.xlu0
    %v1676 = vpop.trf.xlu0
    %v1677 = vpop.trf.xlu0
    %v1678 = vpop.trf.xlu0
    %v1679 = vpop.trf.xlu0
    %v1680 = vpop.trf.xlu0
    %v1681 = vpop.trf.xlu0
    %v1682 = vpop.trf.xlu0
    %1683 = vxpose.xlu0.b32.start [1/16] %v1419, 128
    %1684 = vxpose.xlu0.b32.cont [2/16] 0.0, 128
    %1685 = vxpose.xlu0.b32.cont [3/16] 0.0, 128
    %1686 = vxpose.xlu0.b32.cont [4/16] 0.0, 128
    %1687 = vxpose.xlu0.b32.cont [5/16] 0.0, 128
    %1688 = vxpose.xlu0.b32.cont [6/16] 0.0, 128
    %1689 = vxpose.xlu0.b32.cont [7/16] 0.0, 128
    %1690 = vxpose.xlu0.b32.cont [8/16] 0.0, 128
    %1691 = vxpose.xlu0.b32.cont [9/16] 0.0, 128
    %1692 = vxpose.xlu0.b32.cont [10/16] 0.0, 128
    %1693 = vxpose.xlu0.b32.cont [11/16] 0.0, 128
    %1694 = vxpose.xlu0.b32.cont [12/16] 0.0, 128
    %1695 = vxpose.xlu0.b32.cont [13/16] 0.0, 128
    %1696 = vxpose.xlu0.b32.cont [14/16] 0.0, 128
    %1697 = vxpose.xlu0.b32.cont [15/16] 0.0, 128
    %1698 = vxpose.xlu0.b32.end [16/16] 0.0, 128
    %v1699 = vpop.trf.xlu0
    %v1700 = vpop.trf.xlu0
    %v1701 = vpop.trf.xlu0
    %v1702 = vpop.trf.xlu0
    %v1703 = vpop.trf.xlu0
    %v1704 = vpop.trf.xlu0
    %v1705 = vpop.trf.xlu0
    %v1706 = vpop.trf.xlu0
    %v1707 = vpop.trf.xlu0
    %v1708 = vpop.trf.xlu0
    %v1709 = vpop.trf.xlu0
    %v1710 = vpop.trf.xlu0
    %v1711 = vpop.trf.xlu0
    %v1712 = vpop.trf.xlu0
    %v1713 = vpop.trf.xlu0
    %v1714 = vpop.trf.xlu0
    %1715 = vxpose.xlu0.b32.start [1/16] %v1420, 128
    %1716 = vxpose.xlu0.b32.cont [2/16] 0.0, 128
    %1717 = vxpose.xlu0.b32.cont [3/16] 0.0, 128
    %1718 = vxpose.xlu0.b32.cont [4/16] 0.0, 128
    %1719 = vxpose.xlu0.b32.cont [5/16] 0.0, 128
    %1720 = vxpose.xlu0.b32.cont [6/16] 0.0, 128
    %1721 = vxpose.xlu0.b32.cont [7/16] 0.0, 128
    %1722 = vxpose.xlu0.b32.cont [8/16] 0.0, 128
    %1723 = vxpose.xlu0.b32.cont [9/16] 0.0, 128
    %1724 = vxpose.xlu0.b32.cont [10/16] 0.0, 128
    %1725 = vxpose.xlu0.b32.cont [11/16] 0.0, 128
    %1726 = vxpose.xlu0.b32.cont [12/16] 0.0, 128
    %1727 = vxpose.xlu0.b32.cont [13/16] 0.0, 128
    %1728 = vxpose.xlu0.b32.cont [14/16] 0.0, 128
    %1729 = vxpose.xlu0.b32.cont [15/16] 0.0, 128
    %1730 = vxpose.xlu0.b32.end [16/16] 0.0, 128
    %v1731 = vpop.trf.xlu0
    %v1732 = vpop.trf.xlu0
    %v1733 = vpop.trf.xlu0
    %v1734 = vpop.trf.xlu0
    %v1735 = vpop.trf.xlu0
    %v1736 = vpop.trf.xlu0
    %v1737 = vpop.trf.xlu0
    %v1738 = vpop.trf.xlu0
    %v1739 = vpop.trf.xlu0
    %v1740 = vpop.trf.xlu0
    %v1741 = vpop.trf.xlu0
    %v1742 = vpop.trf.xlu0
    %v1743 = vpop.trf.xlu0
    %v1744 = vpop.trf.xlu0
    %v1745 = vpop.trf.xlu0
    %v1746 = vpop.trf.xlu0
    %1747 = vxpose.xlu0.b32.start [1/16] %v1421, 128
    %1748 = vxpose.xlu0.b32.cont [2/16] 0.0, 128
    %1749 = vxpose.xlu0.b32.cont [3/16] 0.0, 128
    %1750 = vxpose.xlu0.b32.cont [4/16] 0.0, 128
    %1751 = vxpose.xlu0.b32.cont [5/16] 0.0, 128
    %1752 = vxpose.xlu0.b32.cont [6/16] 0.0, 128
    %1753 = vxpose.xlu0.b32.cont [7/16] 0.0, 128
    %1754 = vxpose.xlu0.b32.cont [8/16] 0.0, 128
    %1755 = vxpose.xlu0.b32.cont [9/16] 0.0, 128
    %1756 = vxpose.xlu0.b32.cont [10/16] 0.0, 128
    %1757 = vxpose.xlu0.b32.cont [11/16] 0.0, 128
    %1758 = vxpose.xlu0.b32.cont [12/16] 0.0, 128
    %1759 = vxpose.xlu0.b32.cont [13/16] 0.0, 128
    %1760 = vxpose.xlu0.b32.cont [14/16] 0.0, 128
    %1761 = vxpose.xlu0.b32.cont [15/16] 0.0, 128
    %1762 = vxpose.xlu0.b32.end [16/16] 0.0, 128
    %v1763 = vpop.trf.xlu0
    %v1764 = vpop.trf.xlu0
    %v1765 = vpop.trf.xlu0
    %v1766 = vpop.trf.xlu0
    %v1767 = vpop.trf.xlu0
    %v1768 = vpop.trf.xlu0
    %v1769 = vpop.trf.xlu0
    %v1770 = vpop.trf.xlu0
    %v1771 = vpop.trf.xlu0
    %v1772 = vpop.trf.xlu0
    %v1773 = vpop.trf.xlu0
    %v1774 = vpop.trf.xlu0
    %v1775 = vpop.trf.xlu0
    %v1776 = vpop.trf.xlu0
    %v1777 = vpop.trf.xlu0
    %v1778 = vpop.trf.xlu0
    %1779 = vxpose.xlu0.b32.start [1/16] %v1422, 128
    %1780 = vxpose.xlu0.b32.cont [2/16] 0.0, 128
    %1781 = vxpose.xlu0.b32.cont [3/16] 0.0, 128
    %1782 = vxpose.xlu0.b32.cont [4/16] 0.0, 128
    %1783 = vxpose.xlu0.b32.cont [5/16] 0.0, 128
    %1784 = vxpose.xlu0.b32.cont [6/16] 0.0, 128
    %1785 = vxpose.xlu0.b32.cont [7/16] 0.0, 128
    %1786 = vxpose.xlu0.b32.cont [8/16] 0.0, 128
    %1787 = vxpose.xlu0.b32.cont [9/16] 0.0, 128
    %1788 = vxpose.xlu0.b32.cont [10/16] 0.0, 128
    %1789 = vxpose.xlu0.b32.cont [11/16] 0.0, 128
    %1790 = vxpose.xlu0.b32.cont [12/16] 0.0, 128
    %1791 = vxpose.xlu0.b32.cont [13/16] 0.0, 128
    %1792 = vxpose.xlu0.b32.cont [14/16] 0.0, 128
    %1793 = vxpose.xlu0.b32.cont [15/16] 0.0, 128
    %1794 = vxpose.xlu0.b32.end [16/16] 0.0, 128
    %v1795 = vpop.trf.xlu0
    %v1796 = vpop.trf.xlu0
    %v1797 = vpop.trf.xlu0
    %v1798 = vpop.trf.xlu0
    %v1799 = vpop.trf.xlu0
    %v1800 = vpop.trf.xlu0
    %v1801 = vpop.trf.xlu0
    %v1802 = vpop.trf.xlu0
    %v1803 = vpop.trf.xlu0
    %v1804 = vpop.trf.xlu0
    %v1805 = vpop.trf.xlu0
    %v1806 = vpop.trf.xlu0
    %v1807 = vpop.trf.xlu0
    %v1808 = vpop.trf.xlu0
    %v1809 = vpop.trf.xlu0
    %v1810 = vpop.trf.xlu0
    %1811 = vxpose.xlu0.b32.start [1/16] %v1423, 128
    %1812 = vxpose.xlu0.b32.cont [2/16] 0.0, 128
    %1813 = vxpose.xlu0.b32.cont [3/16] 0.0, 128
    %1814 = vxpose.xlu0.b32.cont [4/16] 0.0, 128
    %1815 = vxpose.xlu0.b32.cont [5/16] 0.0, 128
    %1816 = vxpose.xlu0.b32.cont [6/16] 0.0, 128
    %1817 = vxpose.xlu0.b32.cont [7/16] 0.0, 128
    %1818 = vxpose.xlu0.b32.cont [8/16] 0.0, 128
    %1819 = vxpose.xlu0.b32.cont [9/16] 0.0, 128
    %1820 = vxpose.xlu0.b32.cont [10/16] 0.0, 128
    %1821 = vxpose.xlu0.b32.cont [11/16] 0.0, 128
    %1822 = vxpose.xlu0.b32.cont [12/16] 0.0, 128
    %1823 = vxpose.xlu0.b32.cont [13/16] 0.0, 128
    %1824 = vxpose.xlu0.b32.cont [14/16] 0.0, 128
    %1825 = vxpose.xlu0.b32.cont [15/16] 0.0, 128
    %1826 = vxpose.xlu0.b32.end [16/16] 0.0, 128
    %v1827 = vpop.trf.xlu0
    %v1828 = vpop.trf.xlu0
    %v1829 = vpop.trf.xlu0
    %v1830 = vpop.trf.xlu0
    %v1831 = vpop.trf.xlu0
    %v1832 = vpop.trf.xlu0
    %v1833 = vpop.trf.xlu0
    %v1834 = vpop.trf.xlu0
    %v1835 = vpop.trf.xlu0
    %v1836 = vpop.trf.xlu0
    %v1837 = vpop.trf.xlu0
    %v1838 = vpop.trf.xlu0
    %v1839 = vpop.trf.xlu0
    %v1840 = vpop.trf.xlu0
    %v1841 = vpop.trf.xlu0
    %v1842 = vpop.trf.xlu0
    %1843 = vxpose.xlu0.b32.start [1/16] %v1424, 128
    %1844 = vxpose.xlu0.b32.cont [2/16] 0.0, 128
    %1845 = vxpose.xlu0.b32.cont [3/16] 0.0, 128
    %1846 = vxpose.xlu0.b32.cont [4/16] 0.0, 128
    %1847 = vxpose.xlu0.b32.cont [5/16] 0.0, 128
    %1848 = vxpose.xlu0.b32.cont [6/16] 0.0, 128
    %1849 = vxpose.xlu0.b32.cont [7/16] 0.0, 128
    %1850 = vxpose.xlu0.b32.cont [8/16] 0.0, 128
    %1851 = vxpose.xlu0.b32.cont [9/16] 0.0, 128
    %1852 = vxpose.xlu0.b32.cont [10/16] 0.0, 128
    %1853 = vxpose.xlu0.b32.cont [11/16] 0.0, 128
    %1854 = vxpose.xlu0.b32.cont [12/16] 0.0, 128
    %1855 = vxpose.xlu0.b32.cont [13/16] 0.0, 128
    %1856 = vxpose.xlu0.b32.cont [14/16] 0.0, 128
    %1857 = vxpose.xlu0.b32.cont [15/16] 0.0, 128
    %1858 = vxpose.xlu0.b32.end [16/16] 0.0, 128
    %v1859 = vpop.trf.xlu0
    %v1860 = vpop.trf.xlu0
    %v1861 = vpop.trf.xlu0
    %v1862 = vpop.trf.xlu0
    %v1863 = vpop.trf.xlu0
    %v1864 = vpop.trf.xlu0
    %v1865 = vpop.trf.xlu0
    %v1866 = vpop.trf.xlu0
    %v1867 = vpop.trf.xlu0
    %v1868 = vpop.trf.xlu0
    %v1869 = vpop.trf.xlu0
    %v1870 = vpop.trf.xlu0
    %v1871 = vpop.trf.xlu0
    %v1872 = vpop.trf.xlu0
    %v1873 = vpop.trf.xlu0
    %v1874 = vpop.trf.xlu0
    %1875 = vxpose.xlu0.b32.start [1/16] %v1425, 128
    %1876 = vxpose.xlu0.b32.cont [2/16] 0.0, 128
    %1877 = vxpose.xlu0.b32.cont [3/16] 0.0, 128
    %1878 = vxpose.xlu0.b32.cont [4/16] 0.0, 128
    %1879 = vxpose.xlu0.b32.cont [5/16] 0.0, 128
    %1880 = vxpose.xlu0.b32.cont [6/16] 0.0, 128
    %1881 = vxpose.xlu0.b32.cont [7/16] 0.0, 128
    %1882 = vxpose.xlu0.b32.cont [8/16] 0.0, 128
    %1883 = vxpose.xlu0.b32.cont [9/16] 0.0, 128
    %1884 = vxpose.xlu0.b32.cont [10/16] 0.0, 128
    %1885 = vxpose.xlu0.b32.cont [11/16] 0.0, 128
    %1886 = vxpose.xlu0.b32.cont [12/16] 0.0, 128
    %1887 = vxpose.xlu0.b32.cont [13/16] 0.0, 128
    %1888 = vxpose.xlu0.b32.cont [14/16] 0.0, 128
    %1889 = vxpose.xlu0.b32.cont [15/16] 0.0, 128
    %1890 = vxpose.xlu0.b32.end [16/16] 0.0, 128
    %v1891 = vpop.trf.xlu0
    %v1892 = vpop.trf.xlu0
    %v1893 = vpop.trf.xlu0
    %v1894 = vpop.trf.xlu0
    %v1895 = vpop.trf.xlu0
    %v1896 = vpop.trf.xlu0
    %v1897 = vpop.trf.xlu0
    %v1898 = vpop.trf.xlu0
    %v1899 = vpop.trf.xlu0
    %v1900 = vpop.trf.xlu0
    %v1901 = vpop.trf.xlu0
    %v1902 = vpop.trf.xlu0
    %v1903 = vpop.trf.xlu0
    %v1904 = vpop.trf.xlu0
    %v1905 = vpop.trf.xlu0
    %v1906 = vpop.trf.xlu0
    %1907 = vxpose.xlu0.b32.start [1/16] %v1426, 128
    %1908 = vxpose.xlu0.b32.cont [2/16] 0.0, 128
    %1909 = vxpose.xlu0.b32.cont [3/16] 0.0, 128
    %1910 = vxpose.xlu0.b32.cont [4/16] 0.0, 128
    %1911 = vxpose.xlu0.b32.cont [5/16] 0.0, 128
    %1912 = vxpose.xlu0.b32.cont [6/16] 0.0, 128
    %1913 = vxpose.xlu0.b32.cont [7/16] 0.0, 128
    %1914 = vxpose.xlu0.b32.cont [8/16] 0.0, 128
    %1915 = vxpose.xlu0.b32.cont [9/16] 0.0, 128
    %1916 = vxpose.xlu0.b32.cont [10/16] 0.0, 128
    %1917 = vxpose.xlu0.b32.cont [11/16] 0.0, 128
    %1918 = vxpose.xlu0.b32.cont [12/16] 0.0, 128
    %1919 = vxpose.xlu0.b32.cont [13/16] 0.0, 128
    %1920 = vxpose.xlu0.b32.cont [14/16] 0.0, 128
    %1921 = vxpose.xlu0.b32.cont [15/16] 0.0, 128
    %1922 = vxpose.xlu0.b32.end [16/16] 0.0, 128
    %v1923 = vpop.trf.xlu0
    %v1924 = vpop.trf.xlu0
    %v1925 = vpop.trf.xlu0
    %v1926 = vpop.trf.xlu0
    %v1927 = vpop.trf.xlu0
    %v1928 = vpop.trf.xlu0
    %v1929 = vpop.trf.xlu0
    %v1930 = vpop.trf.xlu0
    %v1931 = vpop.trf.xlu0
    %v1932 = vpop.trf.xlu0
    %v1933 = vpop.trf.xlu0
    %v1934 = vpop.trf.xlu0
    %v1935 = vpop.trf.xlu0
    %v1936 = vpop.trf.xlu0
    %v1937 = vpop.trf.xlu0
    %v1938 = vpop.trf.xlu0
    %v1939 = vcombine.low %v1443, %v1507
    %v1941 = vunpack.c.l.s4 1983009808
    %v1942 = vunpack.c.0.s8 %v1941
    %v1943 = vlaneseq
    %v1944 = vshrl.u32 %v1943, 7
    %v1945 = vsub.s32 %v1942, %v1944
    %v1946 = vrot.slane %v1939, %v1945
    %v1947 = vcombine.low %v1475, %v1539
    %v1949 = vunpack.c.l.s4 1983009808
    %v1950 = vunpack.c.0.s8 %v1949
    %v1951 = vlaneseq
    %v1952 = vshrl.u32 %v1951, 7
    %v1953 = vsub.s32 %v1950, %v1952
    %v1954 = vrot.slane %v1947, %v1953
    %v1955 = vcombine.low %v1571, %v1635
    %v1957 = vunpack.c.l.s4 1983009808
    %v1958 = vunpack.c.0.s8 %v1957
    %v1959 = vlaneseq
    %v1960 = vshrl.u32 %v1959, 7
    %v1961 = vsub.s32 %v1958, %v1960
    %v1962 = vrot.slane %v1955, %v1961
    %v1963 = vcombine.low %v1603, %v1667
    %v1965 = vunpack.c.l.s4 1983009808
    %v1966 = vunpack.c.0.s8 %v1965
    %v1967 = vlaneseq
    %v1968 = vshrl.u32 %v1967, 7
    %v1969 = vsub.s32 %v1966, %v1968
    %v1970 = vrot.slane %v1963, %v1969
    %v1971 = vcombine.low %v1946, %v1954
    %v1972 = vcombine.high %v1946, %v1954
    %v1974 = vunpack.c.l.s4 1934713408
    %v1975 = vunpack.c.0.s8 %v1974
    %v1976 = vlaneseq
    %v1977 = vshrl.u32 %v1976, 7
    %v1978 = vsub.s32 %v1975, %v1977
    %v1979 = vrot.slane %v1971, %v1978
    %v1981 = vunpack.c.l.s4 1934713408
    %v1982 = vunpack.c.0.s8 %v1981
    %v1983 = vlaneseq
    %v1984 = vshrl.u32 %v1983, 7
    %v1985 = vsub.s32 %v1982, %v1984
    %v1986 = vrot.slane %v1972, %v1985
    %v1987 = vcombine.low %v1962, %v1970
    %v1988 = vcombine.high %v1962, %v1970
    %v1990 = vunpack.c.l.s4 1934713408
    %v1991 = vunpack.c.0.s8 %v1990
    %v1992 = vlaneseq
    %v1993 = vshrl.u32 %v1992, 7
    %v1994 = vsub.s32 %v1991, %v1993
    %v1995 = vrot.slane %v1987, %v1994
    %v1997 = vunpack.c.l.s4 1934713408
    %v1998 = vunpack.c.0.s8 %v1997
    %v1999 = vlaneseq
    %v2000 = vshrl.u32 %v1999, 7
    %v2001 = vsub.s32 %v1998, %v2000
    %v2002 = vrot.slane %v1988, %v2001
    %v2003 = vcombine.low %v1979, %v1995
    %v2004 = vcombine.high %v1979, %v1995
    %v2005 = vcombine.low %v1986, %v2002
    %v2006 = vcombine.high %v1986, %v2002
    %v2007 = vcombine.low %v1699, %v1763
    %v2009 = vunpack.c.l.s4 1983009808
    %v2010 = vunpack.c.0.s8 %v2009
    %v2011 = vlaneseq
    %v2012 = vshrl.u32 %v2011, 7
    %v2013 = vsub.s32 %v2010, %v2012
    %v2014 = vrot.slane %v2007, %v2013
    %v2015 = vcombine.low %v1731, %v1795
    %v2017 = vunpack.c.l.s4 1983009808
    %v2018 = vunpack.c.0.s8 %v2017
    %v2019 = vlaneseq
    %v2020 = vshrl.u32 %v2019, 7
    %v2021 = vsub.s32 %v2018, %v2020
    %v2022 = vrot.slane %v2015, %v2021
    %v2023 = vcombine.low %v1827, %v1891
    %v2025 = vunpack.c.l.s4 1983009808
    %v2026 = vunpack.c.0.s8 %v2025
    %v2027 = vlaneseq
    %v2028 = vshrl.u32 %v2027, 7
    %v2029 = vsub.s32 %v2026, %v2028
    %v2030 = vrot.slane %v2023, %v2029
    %v2031 = vcombine.low %v1859, %v1923
    %v2033 = vunpack.c.l.s4 1983009808
    %v2034 = vunpack.c.0.s8 %v2033
    %v2035 = vlaneseq
    %v2036 = vshrl.u32 %v2035, 7
    %v2037 = vsub.s32 %v2034, %v2036
    %v2038 = vrot.slane %v2031, %v2037
    %v2039 = vcombine.low %v2014, %v2022
    %v2040 = vcombine.high %v2014, %v2022
    %v2042 = vunpack.c.l.s4 1934713408
    %v2043 = vunpack.c.0.s8 %v2042
    %v2044 = vlaneseq
    %v2045 = vshrl.u32 %v2044, 7
    %v2046 = vsub.s32 %v2043, %v2045
    %v2047 = vrot.slane %v2039, %v2046
    %v2049 = vunpack.c.l.s4 1934713408
    %v2050 = vunpack.c.0.s8 %v2049
    %v2051 = vlaneseq
    %v2052 = vshrl.u32 %v2051, 7
    %v2053 = vsub.s32 %v2050, %v2052
    %v2054 = vrot.slane %v2040, %v2053
    %v2055 = vcombine.low %v2030, %v2038
    %v2056 = vcombine.high %v2030, %v2038
    %v2058 = vunpack.c.l.s4 1934713408
    %v2059 = vunpack.c.0.s8 %v2058
    %v2060 = vlaneseq
    %v2061 = vshrl.u32 %v2060, 7
    %v2062 = vsub.s32 %v2059, %v2061
    %v2063 = vrot.slane %v2055, %v2062
    %v2065 = vunpack.c.l.s4 1934713408
    %v2066 = vunpack.c.0.s8 %v2065
    %v2067 = vlaneseq
    %v2068 = vshrl.u32 %v2067, 7
    %v2069 = vsub.s32 %v2066, %v2068
    %v2070 = vrot.slane %v2056, %v2069
    %v2071 = vcombine.low %v2047, %v2063
    %v2072 = vcombine.high %v2047, %v2063
    %v2073 = vcombine.low %v2054, %v2070
    %v2074 = vcombine.high %v2054, %v2070
    %2075 = vrot.lane.b32.xlu0 %v183, 64
    %v2076 = vpop.permute.xlu0 %2075
    %2077 = vrot.lane.b32.xlu0 %v188, 64
    %v2078 = vpop.permute.xlu0 %2077
    %2079 = vrot.lane.b32.xlu0 %v194, 64
    %v2080 = vpop.permute.xlu0 %2079
    %2081 = vrot.lane.b32.xlu0 %v196, 64
    %v2082 = vpop.permute.xlu0 %2081
    %2083 = vrot.lane.b32.xlu0 %v200, 64
    %v2084 = vpop.permute.xlu0 %2083
    %2085 = vrot.lane.b32.xlu0 %v202, 64
    %v2086 = vpop.permute.xlu0 %2085
    %2087 = vrot.lane.b32.xlu0 %v206, 64
    %v2088 = vpop.permute.xlu0 %2087
    %2089 = vrot.lane.b32.xlu0 %v208, 64
    %v2090 = vpop.permute.xlu0 %2089
    %v2099 = vcombine.low %v2076, %v2084
    %v2100 = vcombine.high %v2076, %v2084
    %v2102 = vunpack.c.l.s4 1983009808
    %v2103 = vunpack.c.0.s8 %v2102
    %v2104 = vlaneseq
    %v2105 = vshrl.u32 %v2104, 7
    %v2106 = vsub.s32 %v2103, %v2105
    %v2107 = vrot.slane %v2099, %v2106
    %v2109 = vunpack.c.l.s4 1983009808
    %v2110 = vunpack.c.0.s8 %v2109
    %v2111 = vlaneseq
    %v2112 = vshrl.u32 %v2111, 7
    %v2113 = vsub.s32 %v2110, %v2112
    %v2114 = vrot.slane %v2100, %v2113
    %v2115 = vcombine.low %v2080, %v2088
    %v2116 = vcombine.high %v2080, %v2088
    %v2118 = vunpack.c.l.s4 1983009808
    %v2119 = vunpack.c.0.s8 %v2118
    %v2120 = vlaneseq
    %v2121 = vshrl.u32 %v2120, 7
    %v2122 = vsub.s32 %v2119, %v2121
    %v2123 = vrot.slane %v2115, %v2122
    %v2125 = vunpack.c.l.s4 1983009808
    %v2126 = vunpack.c.0.s8 %v2125
    %v2127 = vlaneseq
    %v2128 = vshrl.u32 %v2127, 7
    %v2129 = vsub.s32 %v2126, %v2128
    %v2130 = vrot.slane %v2116, %v2129
    %v2131 = vcombine.low %v2107, %v2123
    %v2132 = vcombine.high %v2107, %v2123
    %v2134 = vunpack.c.l.s4 1934713408
    %v2135 = vunpack.c.0.s8 %v2134
    %v2136 = vlaneseq
    %v2137 = vshrl.u32 %v2136, 7
    %v2138 = vsub.s32 %v2135, %v2137
    %v2139 = vrot.slane %v2131, %v2138
    %v2141 = vunpack.c.l.s4 1934713408
    %v2142 = vunpack.c.0.s8 %v2141
    %v2143 = vlaneseq
    %v2144 = vshrl.u32 %v2143, 7
    %v2145 = vsub.s32 %v2142, %v2144
    %v2146 = vrot.slane %v2132, %v2145
    %v2147 = vcombine.low %v2114, %v2130
    %v2148 = vcombine.high %v2114, %v2130
    %v2150 = vunpack.c.l.s4 1934713408
    %v2151 = vunpack.c.0.s8 %v2150
    %v2152 = vlaneseq
    %v2153 = vshrl.u32 %v2152, 7
    %v2154 = vsub.s32 %v2151, %v2153
    %v2155 = vrot.slane %v2147, %v2154
    %v2157 = vunpack.c.l.s4 1934713408
    %v2158 = vunpack.c.0.s8 %v2157
    %v2159 = vlaneseq
    %v2160 = vshrl.u32 %v2159, 7
    %v2161 = vsub.s32 %v2158, %v2160
    %v2162 = vrot.slane %v2148, %v2161
    %v2163 = vcombine.high %v2139, 0.0
    %v2164 = vcombine.high %v2146, 0.0
    %v2165 = vcombine.high %v2155, 0.0
    %v2166 = vcombine.high %v2162, 0.0
    %v2167 = vcombine.low %v2078, %v2086
    %v2168 = vcombine.high %v2078, %v2086
    %v2170 = vunpack.c.l.s4 1983009808
    %v2171 = vunpack.c.0.s8 %v2170
    %v2172 = vlaneseq
    %v2173 = vshrl.u32 %v2172, 7
    %v2174 = vsub.s32 %v2171, %v2173
    %v2175 = vrot.slane %v2167, %v2174
    %v2177 = vunpack.c.l.s4 1983009808
    %v2178 = vunpack.c.0.s8 %v2177
    %v2179 = vlaneseq
    %v2180 = vshrl.u32 %v2179, 7
    %v2181 = vsub.s32 %v2178, %v2180
    %v2182 = vrot.slane %v2168, %v2181
    %v2183 = vcombine.low %v2082, %v2090
    %v2184 = vcombine.high %v2082, %v2090
    %v2186 = vunpack.c.l.s4 1983009808
    %v2187 = vunpack.c.0.s8 %v2186
    %v2188 = vlaneseq
    %v2189 = vshrl.u32 %v2188, 7
    %v2190 = vsub.s32 %v2187, %v2189
    %v2191 = vrot.slane %v2183, %v2190
    %v2193 = vunpack.c.l.s4 1983009808
    %v2194 = vunpack.c.0.s8 %v2193
    %v2195 = vlaneseq
    %v2196 = vshrl.u32 %v2195, 7
    %v2197 = vsub.s32 %v2194, %v2196
    %v2198 = vrot.slane %v2184, %v2197
    %v2199 = vcombine.low %v2175, %v2191
    %v2200 = vcombine.high %v2175, %v2191
    %v2202 = vunpack.c.l.s4 1934713408
    %v2203 = vunpack.c.0.s8 %v2202
    %v2204 = vlaneseq
    %v2205 = vshrl.u32 %v2204, 7
    %v2206 = vsub.s32 %v2203, %v2205
    %v2207 = vrot.slane %v2199, %v2206
    %v2209 = vunpack.c.l.s4 1934713408
    %v2210 = vunpack.c.0.s8 %v2209
    %v2211 = vlaneseq
    %v2212 = vshrl.u32 %v2211, 7
    %v2213 = vsub.s32 %v2210, %v2212
    %v2214 = vrot.slane %v2200, %v2213
    %v2215 = vcombine.low %v2182, %v2198
    %v2216 = vcombine.high %v2182, %v2198
    %v2218 = vunpack.c.l.s4 1934713408
    %v2219 = vunpack.c.0.s8 %v2218
    %v2220 = vlaneseq
    %v2221 = vshrl.u32 %v2220, 7
    %v2222 = vsub.s32 %v2219, %v2221
    %v2223 = vrot.slane %v2215, %v2222
    %v2225 = vunpack.c.l.s4 1934713408
    %v2226 = vunpack.c.0.s8 %v2225
    %v2227 = vlaneseq
    %v2228 = vshrl.u32 %v2227, 7
    %v2229 = vsub.s32 %v2226, %v2228
    %v2230 = vrot.slane %v2216, %v2229
    %v2231 = vcombine.high %v2207, 0.0
    %v2232 = vcombine.high %v2214, 0.0
    %v2233 = vcombine.high %v2223, 0.0
    %v2234 = vcombine.high %v2230, 0.0
    %v2235 = vcombine.low %v2139, %v2146
    %v2237 = vunpack.c.l.s4 1983009808
    %v2238 = vunpack.c.0.s8 %v2237
    %v2239 = vlaneseq
    %v2240 = vshrl.u32 %v2239, 7
    %v2241 = vsub.s32 %v2238, %v2240
    %v2242 = vrot.slane %v2235, %v2241
    %v2243 = vcombine.low %v2163, %v2164
    %v2245 = vunpack.c.l.s4 1983009808
    %v2246 = vunpack.c.0.s8 %v2245
    %v2247 = vlaneseq
    %v2248 = vshrl.u32 %v2247, 7
    %v2249 = vsub.s32 %v2246, %v2248
    %v2250 = vrot.slane %v2243, %v2249
    %v2251 = vcombine.low %v2155, %v2162
    %v2253 = vunpack.c.l.s4 1983009808
    %v2254 = vunpack.c.0.s8 %v2253
    %v2255 = vlaneseq
    %v2256 = vshrl.u32 %v2255, 7
    %v2257 = vsub.s32 %v2254, %v2256
    %v2258 = vrot.slane %v2251, %v2257
    %v2259 = vcombine.low %v2165, %v2166
    %v2261 = vunpack.c.l.s4 1983009808
    %v2262 = vunpack.c.0.s8 %v2261
    %v2263 = vlaneseq
    %v2264 = vshrl.u32 %v2263, 7
    %v2265 = vsub.s32 %v2262, %v2264
    %v2266 = vrot.slane %v2259, %v2265
    %v2267 = vcombine.low %v2242, %v2250
    %v2268 = vcombine.high %v2242, %v2250
    %v2270 = vunpack.c.l.s4 1934713408
    %v2271 = vunpack.c.0.s8 %v2270
    %v2272 = vlaneseq
    %v2273 = vshrl.u32 %v2272, 7
    %v2274 = vsub.s32 %v2271, %v2273
    %v2275 = vrot.slane %v2267, %v2274
    %v2277 = vunpack.c.l.s4 1934713408
    %v2278 = vunpack.c.0.s8 %v2277
    %v2279 = vlaneseq
    %v2280 = vshrl.u32 %v2279, 7
    %v2281 = vsub.s32 %v2278, %v2280
    %v2282 = vrot.slane %v2268, %v2281
    %v2283 = vcombine.low %v2258, %v2266
    %v2284 = vcombine.high %v2258, %v2266
    %v2286 = vunpack.c.l.s4 1934713408
    %v2287 = vunpack.c.0.s8 %v2286
    %v2288 = vlaneseq
    %v2289 = vshrl.u32 %v2288, 7
    %v2290 = vsub.s32 %v2287, %v2289
    %v2291 = vrot.slane %v2283, %v2290
    %v2293 = vunpack.c.l.s4 1934713408
    %v2294 = vunpack.c.0.s8 %v2293
    %v2295 = vlaneseq
    %v2296 = vshrl.u32 %v2295, 7
    %v2297 = vsub.s32 %v2294, %v2296
    %v2298 = vrot.slane %v2284, %v2297
    %v2299 = vcombine.low %v2275, %v2291
    %v2300 = vcombine.high %v2275, %v2291
    %v2301 = vcombine.low %v2282, %v2298
    %v2302 = vcombine.high %v2282, %v2298
    %v2303 = vcombine.low %v2207, %v2214
    %v2305 = vunpack.c.l.s4 1983009808
    %v2306 = vunpack.c.0.s8 %v2305
    %v2307 = vlaneseq
    %v2308 = vshrl.u32 %v2307, 7
    %v2309 = vsub.s32 %v2306, %v2308
    %v2310 = vrot.slane %v2303, %v2309
    %v2311 = vcombine.low %v2231, %v2232
    %v2313 = vunpack.c.l.s4 1983009808
    %v2314 = vunpack.c.0.s8 %v2313
    %v2315 = vlaneseq
    %v2316 = vshrl.u32 %v2315, 7
    %v2317 = vsub.s32 %v2314, %v2316
    %v2318 = vrot.slane %v2311, %v2317
    %v2319 = vcombine.low %v2223, %v2230
    %v2321 = vunpack.c.l.s4 1983009808
    %v2322 = vunpack.c.0.s8 %v2321
    %v2323 = vlaneseq
    %v2324 = vshrl.u32 %v2323, 7
    %v2325 = vsub.s32 %v2322, %v2324
    %v2326 = vrot.slane %v2319, %v2325
    %v2327 = vcombine.low %v2233, %v2234
    %v2329 = vunpack.c.l.s4 1983009808
    %v2330 = vunpack.c.0.s8 %v2329
    %v2331 = vlaneseq
    %v2332 = vshrl.u32 %v2331, 7
    %v2333 = vsub.s32 %v2330, %v2332
    %v2334 = vrot.slane %v2327, %v2333
    %v2335 = vcombine.low %v2310, %v2318
    %v2336 = vcombine.high %v2310, %v2318
    %v2338 = vunpack.c.l.s4 1934713408
    %v2339 = vunpack.c.0.s8 %v2338
    %v2340 = vlaneseq
    %v2341 = vshrl.u32 %v2340, 7
    %v2342 = vsub.s32 %v2339, %v2341
    %v2343 = vrot.slane %v2335, %v2342
    %v2345 = vunpack.c.l.s4 1934713408
    %v2346 = vunpack.c.0.s8 %v2345
    %v2347 = vlaneseq
    %v2348 = vshrl.u32 %v2347, 7
    %v2349 = vsub.s32 %v2346, %v2348
    %v2350 = vrot.slane %v2336, %v2349
    %v2351 = vcombine.low %v2326, %v2334
    %v2352 = vcombine.high %v2326, %v2334
    %v2354 = vunpack.c.l.s4 1934713408
    %v2355 = vunpack.c.0.s8 %v2354
    %v2356 = vlaneseq
    %v2357 = vshrl.u32 %v2356, 7
    %v2358 = vsub.s32 %v2355, %v2357
    %v2359 = vrot.slane %v2351, %v2358
    %v2361 = vunpack.c.l.s4 1934713408
    %v2362 = vunpack.c.0.s8 %v2361
    %v2363 = vlaneseq
    %v2364 = vshrl.u32 %v2363, 7
    %v2365 = vsub.s32 %v2362, %v2364
    %v2366 = vrot.slane %v2352, %v2365
    %v2367 = vcombine.low %v2343, %v2359
    %v2368 = vcombine.high %v2343, %v2359
    %v2369 = vcombine.low %v2350, %v2366
    %v2370 = vcombine.high %v2350, %v2366
    %vm2371 = vcmask 64512
    %v2373 = vsel %vm2371, %v411, 0
    %2375 = vmatprep.subr.mxu0 0.0
    %2376 = vmatpush1.msra.mxu0 0.0
    %2377 = vmatprep.subr.mxu0 0.0
    %2378 = vmatpush1.msra.mxu0 0.0
    %2379 = vmatprep.subr.mxu0 0.0
    %2380 = vmatpush1.msra.mxu0 0.0
    %2381 = vmatprep.subr.mxu0 0.0
    %2382 = vmatpush1.msra.mxu0 0.0
    %2383 = vmatprep.subr.mxu0 0.0
    %2384 = vmatpush1.msra.mxu0 0.0
    %2385 = vmatprep.subr.mxu0 0.0
    %2386 = vmatpush1.msra.mxu0 0.0
    %2387 = vmatprep.subr.mxu0 0.0
    %2388 = vmatpush1.msra.mxu0 0.0
    %2389 = vmatprep.subr.mxu0 0.0
    %2390 = vmatpush1.msra.mxu0 0.0
    %2391 = vmatprep.subr.mxu0 0.0
    %2392 = vmatpush1.msra.mxu0 0.0
    %2393 = vmatprep.subr.mxu0 0.0
    %2394 = vmatpush1.msra.mxu0 0.0
    %2395 = vmatprep.subr.mxu0 0.0
    %2396 = vmatpush1.msra.mxu0 0.0
    %2397 = vmatprep.subr.mxu0 0.0
    %2398 = vmatpush1.msra.mxu0 0.0
    %2399 = vmatprep.subr.mxu0 0.0
    %2400 = vmatpush1.msra.mxu0 0.0
    %2401 = vmatprep.subr.mxu0 0.0
    %2402 = vmatpush1.msra.mxu0 0.0
    %2403 = vmatprep.subr.mxu0 0.0
    %2404 = vmatpush1.msra.mxu0 0.0
    %2405 = vmatprep.subr.mxu0 0.0
    %2406 = vmatpush1.msra.mxu0 %v2003
    %2407 = vmatprep.subr.mxu0 0.0
    %2408 = vmatpush2.msra.mxu0 0.0
    %2409 = vmatprep.subr.mxu0 0.0
    %2410 = vmatpush2.msra.mxu0 0.0
    %2411 = vmatprep.subr.mxu0 0.0
    %2412 = vmatpush2.msra.mxu0 0.0
    %2413 = vmatprep.subr.mxu0 0.0
    %2414 = vmatpush2.msra.mxu0 0.0
    %2415 = vmatprep.subr.mxu0 0.0
    %2416 = vmatpush2.msra.mxu0 0.0
    %2417 = vmatprep.subr.mxu0 0.0
    %2418 = vmatpush2.msra.mxu0 0.0
    %2419 = vmatprep.subr.mxu0 0.0
    %2420 = vmatpush2.msra.mxu0 0.0
    %2421 = vmatprep.subr.mxu0 0.0
    %2422 = vmatpush2.msra.mxu0 0.0
    %2423 = vmatprep.subr.mxu0 0.0
    %2424 = vmatpush2.msra.mxu0 0.0
    %2425 = vmatprep.subr.mxu0 0.0
    %2426 = vmatpush2.msra.mxu0 0.0
    %2427 = vmatprep.subr.mxu0 0.0
    %2428 = vmatpush2.msra.mxu0 0.0
    %2429 = vmatprep.subr.mxu0 0.0
    %2430 = vmatpush2.msra.mxu0 0.0
    %2431 = vmatprep.subr.mxu0 0.0
    %2432 = vmatpush2.msra.mxu0 0.0
    %2433 = vmatprep.subr.mxu0 0.0
    %2434 = vmatpush2.msra.mxu0 0.0
    %2435 = vmatprep.subr.mxu0 0.0
    %2436 = vmatpush2.msra.mxu0 0.0
    %2437 = vmatprep.subr.mxu0 0.0
    %2438 = vmatpush2.msra.mxu0 0.0
    %2439 = vmatprep.mubr.f32.mxu0 0.0
    %2440 = vmatmul.mubr.f32.gmra.mxu0 %v2373
    %v2441 = vpop.f32.mrf.mxu0
    %v2442 = vadd.f32 0.0, %v2441
    %v2443 = vpop.f32.mrf.mxu0
    %2444 = vdwg.mxu0
    %v2446 = vsel %vm2371, %v412, 0
    %2448 = vmatprep.subr.mxu0 0.0
    %2449 = vmatpush1.msra.mxu0 0.0
    %2450 = vmatprep.subr.mxu0 0.0
    %2451 = vmatpush1.msra.mxu0 0.0
    %2452 = vmatprep.subr.mxu0 0.0
    %2453 = vmatpush1.msra.mxu0 0.0
    %2454 = vmatprep.subr.mxu0 0.0
    %2455 = vmatpush1.msra.mxu0 0.0
    %2456 = vmatprep.subr.mxu0 0.0
    %2457 = vmatpush1.msra.mxu0 0.0
    %2458 = vmatprep.subr.mxu0 0.0
    %2459 = vmatpush1.msra.mxu0 0.0
    %2460 = vmatprep.subr.mxu0 0.0
    %2461 = vmatpush1.msra.mxu0 0.0
    %2462 = vmatprep.subr.mxu0 0.0
    %2463 = vmatpush1.msra.mxu0 0.0
    %2464 = vmatprep.subr.mxu0 0.0
    %2465 = vmatpush1.msra.mxu0 0.0
    %2466 = vmatprep.subr.mxu0 0.0
    %2467 = vmatpush1.msra.mxu0 0.0
    %2468 = vmatprep.subr.mxu0 0.0
    %2469 = vmatpush1.msra.mxu0 0.0
    %2470 = vmatprep.subr.mxu0 0.0
    %2471 = vmatpush1.msra.mxu0 0.0
    %2472 = vmatprep.subr.mxu0 0.0
    %2473 = vmatpush1.msra.mxu0 0.0
    %2474 = vmatprep.subr.mxu0 0.0
    %2475 = vmatpush1.msra.mxu0 0.0
    %2476 = vmatprep.subr.mxu0 0.0
    %2477 = vmatpush1.msra.mxu0 0.0
    %2478 = vmatprep.subr.mxu0 0.0
    %2479 = vmatpush1.msra.mxu0 %v2004
    %2480 = vmatprep.subr.mxu0 0.0
    %2481 = vmatpush2.msra.mxu0 0.0
    %2482 = vmatprep.subr.mxu0 0.0
    %2483 = vmatpush2.msra.mxu0 0.0
    %2484 = vmatprep.subr.mxu0 0.0
    %2485 = vmatpush2.msra.mxu0 0.0
    %2486 = vmatprep.subr.mxu0 0.0
    %2487 = vmatpush2.msra.mxu0 0.0
    %2488 = vmatprep.subr.mxu0 0.0
    %2489 = vmatpush2.msra.mxu0 0.0
    %2490 = vmatprep.subr.mxu0 0.0
    %2491 = vmatpush2.msra.mxu0 0.0
    %2492 = vmatprep.subr.mxu0 0.0
    %2493 = vmatpush2.msra.mxu0 0.0
    %2494 = vmatprep.subr.mxu0 0.0
    %2495 = vmatpush2.msra.mxu0 0.0
    %2496 = vmatprep.subr.mxu0 0.0
    %2497 = vmatpush2.msra.mxu0 0.0
    %2498 = vmatprep.subr.mxu0 0.0
    %2499 = vmatpush2.msra.mxu0 0.0
    %2500 = vmatprep.subr.mxu0 0.0
    %2501 = vmatpush2.msra.mxu0 0.0
    %2502 = vmatprep.subr.mxu0 0.0
    %2503 = vmatpush2.msra.mxu0 0.0
    %2504 = vmatprep.subr.mxu0 0.0
    %2505 = vmatpush2.msra.mxu0 0.0
    %2506 = vmatprep.subr.mxu0 0.0
    %2507 = vmatpush2.msra.mxu0 0.0
    %2508 = vmatprep.subr.mxu0 0.0
    %2509 = vmatpush2.msra.mxu0 0.0
    %2510 = vmatprep.subr.mxu0 0.0
    %2511 = vmatpush2.msra.mxu0 0.0
    %2512 = vmatprep.mubr.f32.mxu0 0.0
    %2513 = vmatmul.mubr.f32.gmra.mxu0 %v2446
    %v2514 = vpop.f32.mrf.mxu0
    %v2515 = vadd.f32 0.0, %v2514
    %v2516 = vpop.f32.mrf.mxu0
    %2517 = vdwg.mxu0
    %v2519 = vsel %vm2371, %v413, 0
    %2521 = vmatprep.subr.mxu0 0.0
    %2522 = vmatpush1.msra.mxu0 0.0
    %2523 = vmatprep.subr.mxu0 0.0
    %2524 = vmatpush1.msra.mxu0 0.0
    %2525 = vmatprep.subr.mxu0 0.0
    %2526 = vmatpush1.msra.mxu0 0.0
    %2527 = vmatprep.subr.mxu0 0.0
    %2528 = vmatpush1.msra.mxu0 0.0
    %2529 = vmatprep.subr.mxu0 0.0
    %2530 = vmatpush1.msra.mxu0 0.0
    %2531 = vmatprep.subr.mxu0 0.0
    %2532 = vmatpush1.msra.mxu0 0.0
    %2533 = vmatprep.subr.mxu0 0.0
    %2534 = vmatpush1.msra.mxu0 0.0
    %2535 = vmatprep.subr.mxu0 0.0
    %2536 = vmatpush1.msra.mxu0 0.0
    %2537 = vmatprep.subr.mxu0 0.0
    %2538 = vmatpush1.msra.mxu0 0.0
    %2539 = vmatprep.subr.mxu0 0.0
    %2540 = vmatpush1.msra.mxu0 0.0
    %2541 = vmatprep.subr.mxu0 0.0
    %2542 = vmatpush1.msra.mxu0 0.0
    %2543 = vmatprep.subr.mxu0 0.0
    %2544 = vmatpush1.msra.mxu0 0.0
    %2545 = vmatprep.subr.mxu0 0.0
    %2546 = vmatpush1.msra.mxu0 0.0
    %2547 = vmatprep.subr.mxu0 0.0
    %2548 = vmatpush1.msra.mxu0 0.0
    %2549 = vmatprep.subr.mxu0 0.0
    %2550 = vmatpush1.msra.mxu0 0.0
    %2551 = vmatprep.subr.mxu0 0.0
    %2552 = vmatpush1.msra.mxu0 %v2005
    %2553 = vmatprep.subr.mxu0 0.0
    %2554 = vmatpush2.msra.mxu0 0.0
    %2555 = vmatprep.subr.mxu0 0.0
    %2556 = vmatpush2.msra.mxu0 0.0
    %2557 = vmatprep.subr.mxu0 0.0
    %2558 = vmatpush2.msra.mxu0 0.0
    %2559 = vmatprep.subr.mxu0 0.0
    %2560 = vmatpush2.msra.mxu0 0.0
    %2561 = vmatprep.subr.mxu0 0.0
    %2562 = vmatpush2.msra.mxu0 0.0
    %2563 = vmatprep.subr.mxu0 0.0
    %2564 = vmatpush2.msra.mxu0 0.0
    %2565 = vmatprep.subr.mxu0 0.0
    %2566 = vmatpush2.msra.mxu0 0.0
    %2567 = vmatprep.subr.mxu0 0.0
    %2568 = vmatpush2.msra.mxu0 0.0
    %2569 = vmatprep.subr.mxu0 0.0
    %2570 = vmatpush2.msra.mxu0 0.0
    %2571 = vmatprep.subr.mxu0 0.0
    %2572 = vmatpush2.msra.mxu0 0.0
    %2573 = vmatprep.subr.mxu0 0.0
    %2574 = vmatpush2.msra.mxu0 0.0
    %2575 = vmatprep.subr.mxu0 0.0
    %2576 = vmatpush2.msra.mxu0 0.0
    %2577 = vmatprep.subr.mxu0 0.0
    %2578 = vmatpush2.msra.mxu0 0.0
    %2579 = vmatprep.subr.mxu0 0.0
    %2580 = vmatpush2.msra.mxu0 0.0
    %2581 = vmatprep.subr.mxu0 0.0
    %2582 = vmatpush2.msra.mxu0 0.0
    %2583 = vmatprep.subr.mxu0 0.0
    %2584 = vmatpush2.msra.mxu0 0.0
    %2585 = vmatprep.mubr.f32.mxu0 0.0
    %2586 = vmatmul.mubr.f32.gmra.mxu0 %v2519
    %v2587 = vpop.f32.mrf.mxu0
    %v2588 = vadd.f32 0.0, %v2587
    %v2589 = vpop.f32.mrf.mxu0
    %2590 = vdwg.mxu0
    %v2592 = vsel %vm2371, %v414, 0
    %2594 = vmatprep.subr.mxu0 0.0
    %2595 = vmatpush1.msra.mxu0 0.0
    %2596 = vmatprep.subr.mxu0 0.0
    %2597 = vmatpush1.msra.mxu0 0.0
    %2598 = vmatprep.subr.mxu0 0.0
    %2599 = vmatpush1.msra.mxu0 0.0
    %2600 = vmatprep.subr.mxu0 0.0
    %2601 = vmatpush1.msra.mxu0 0.0
    %2602 = vmatprep.subr.mxu0 0.0
    %2603 = vmatpush1.msra.mxu0 0.0
    %2604 = vmatprep.subr.mxu0 0.0
    %2605 = vmatpush1.msra.mxu0 0.0
    %2606 = vmatprep.subr.mxu0 0.0
    %2607 = vmatpush1.msra.mxu0 0.0
    %2608 = vmatprep.subr.mxu0 0.0
    %2609 = vmatpush1.msra.mxu0 0.0
    %2610 = vmatprep.subr.mxu0 0.0
    %2611 = vmatpush1.msra.mxu0 0.0
    %2612 = vmatprep.subr.mxu0 0.0
    %2613 = vmatpush1.msra.mxu0 0.0
    %2614 = vmatprep.subr.mxu0 0.0
    %2615 = vmatpush1.msra.mxu0 0.0
    %2616 = vmatprep.subr.mxu0 0.0
    %2617 = vmatpush1.msra.mxu0 0.0
    %2618 = vmatprep.subr.mxu0 0.0
    %2619 = vmatpush1.msra.mxu0 0.0
    %2620 = vmatprep.subr.mxu0 0.0
    %2621 = vmatpush1.msra.mxu0 0.0
    %2622 = vmatprep.subr.mxu0 0.0
    %2623 = vmatpush1.msra.mxu0 0.0
    %2624 = vmatprep.subr.mxu0 0.0
    %2625 = vmatpush1.msra.mxu0 %v2006
    %2626 = vmatprep.subr.mxu0 0.0
    %2627 = vmatpush2.msra.mxu0 0.0
    %2628 = vmatprep.subr.mxu0 0.0
    %2629 = vmatpush2.msra.mxu0 0.0
    %2630 = vmatprep.subr.mxu0 0.0
    %2631 = vmatpush2.msra.mxu0 0.0
    %2632 = vmatprep.subr.mxu0 0.0
    %2633 = vmatpush2.msra.mxu0 0.0
    %2634 = vmatprep.subr.mxu0 0.0
    %2635 = vmatpush2.msra.mxu0 0.0
    %2636 = vmatprep.subr.mxu0 0.0
    %2637 = vmatpush2.msra.mxu0 0.0
    %2638 = vmatprep.subr.mxu0 0.0
    %2639 = vmatpush2.msra.mxu0 0.0
    %2640 = vmatprep.subr.mxu0 0.0
    %2641 = vmatpush2.msra.mxu0 0.0
    %2642 = vmatprep.subr.mxu0 0.0
    %2643 = vmatpush2.msra.mxu0 0.0
    %2644 = vmatprep.subr.mxu0 0.0
    %2645 = vmatpush2.msra.mxu0 0.0
    %2646 = vmatprep.subr.mxu0 0.0
    %2647 = vmatpush2.msra.mxu0 0.0
    %2648 = vmatprep.subr.mxu0 0.0
    %2649 = vmatpush2.msra.mxu0 0.0
    %2650 = vmatprep.subr.mxu0 0.0
    %2651 = vmatpush2.msra.mxu0 0.0
    %2652 = vmatprep.subr.mxu0 0.0
    %2653 = vmatpush2.msra.mxu0 0.0
    %2654 = vmatprep.subr.mxu0 0.0
    %2655 = vmatpush2.msra.mxu0 0.0
    %2656 = vmatprep.subr.mxu0 0.0
    %2657 = vmatpush2.msra.mxu0 0.0
    %2658 = vmatprep.mubr.f32.mxu0 0.0
    %2659 = vmatmul.mubr.f32.gmra.mxu0 %v2592
    %v2660 = vpop.f32.mrf.mxu0
    %v2661 = vadd.f32 0.0, %v2660
    %v2662 = vpop.f32.mrf.mxu0
    %2663 = vdwg.mxu0
    %v2665 = vsel %vm2371, %v479, 0
    %2667 = vmatprep.subr.mxu0 0.0
    %2668 = vmatpush1.msra.mxu0 0.0
    %2669 = vmatprep.subr.mxu0 0.0
    %2670 = vmatpush1.msra.mxu0 0.0
    %2671 = vmatprep.subr.mxu0 0.0
    %2672 = vmatpush1.msra.mxu0 0.0
    %2673 = vmatprep.subr.mxu0 0.0
    %2674 = vmatpush1.msra.mxu0 0.0
    %2675 = vmatprep.subr.mxu0 0.0
    %2676 = vmatpush1.msra.mxu0 0.0
    %2677 = vmatprep.subr.mxu0 0.0
    %2678 = vmatpush1.msra.mxu0 0.0
    %2679 = vmatprep.subr.mxu0 0.0
    %2680 = vmatpush1.msra.mxu0 0.0
    %2681 = vmatprep.subr.mxu0 0.0
    %2682 = vmatpush1.msra.mxu0 0.0
    %2683 = vmatprep.subr.mxu0 0.0
    %2684 = vmatpush1.msra.mxu0 0.0
    %2685 = vmatprep.subr.mxu0 0.0
    %2686 = vmatpush1.msra.mxu0 0.0
    %2687 = vmatprep.subr.mxu0 0.0
    %2688 = vmatpush1.msra.mxu0 0.0
    %2689 = vmatprep.subr.mxu0 0.0
    %2690 = vmatpush1.msra.mxu0 0.0
    %2691 = vmatprep.subr.mxu0 0.0
    %2692 = vmatpush1.msra.mxu0 0.0
    %2693 = vmatprep.subr.mxu0 0.0
    %2694 = vmatpush1.msra.mxu0 0.0
    %2695 = vmatprep.subr.mxu0 0.0
    %2696 = vmatpush1.msra.mxu0 0.0
    %2697 = vmatprep.subr.mxu0 0.0
    %2698 = vmatpush1.msra.mxu0 %v2071
    %2699 = vmatprep.subr.mxu0 0.0
    %2700 = vmatpush2.msra.mxu0 0.0
    %2701 = vmatprep.subr.mxu0 0.0
    %2702 = vmatpush2.msra.mxu0 0.0
    %2703 = vmatprep.subr.mxu0 0.0
    %2704 = vmatpush2.msra.mxu0 0.0
    %2705 = vmatprep.subr.mxu0 0.0
    %2706 = vmatpush2.msra.mxu0 0.0
    %2707 = vmatprep.subr.mxu0 0.0
    %2708 = vmatpush2.msra.mxu0 0.0
    %2709 = vmatprep.subr.mxu0 0.0
    %2710 = vmatpush2.msra.mxu0 0.0
    %2711 = vmatprep.subr.mxu0 0.0
    %2712 = vmatpush2.msra.mxu0 0.0
    %2713 = vmatprep.subr.mxu0 0.0
    %2714 = vmatpush2.msra.mxu0 0.0
    %2715 = vmatprep.subr.mxu0 0.0
    %2716 = vmatpush2.msra.mxu0 0.0
    %2717 = vmatprep.subr.mxu0 0.0
    %2718 = vmatpush2.msra.mxu0 0.0
    %2719 = vmatprep.subr.mxu0 0.0
    %2720 = vmatpush2.msra.mxu0 0.0
    %2721 = vmatprep.subr.mxu0 0.0
    %2722 = vmatpush2.msra.mxu0 0.0
    %2723 = vmatprep.subr.mxu0 0.0
    %2724 = vmatpush2.msra.mxu0 0.0
    %2725 = vmatprep.subr.mxu0 0.0
    %2726 = vmatpush2.msra.mxu0 0.0
    %2727 = vmatprep.subr.mxu0 0.0
    %2728 = vmatpush2.msra.mxu0 0.0
    %2729 = vmatprep.subr.mxu0 0.0
    %2730 = vmatpush2.msra.mxu0 0.0
    %2731 = vmatprep.mubr.f32.mxu0 0.0
    %2732 = vmatmul.mubr.f32.gmra.mxu0 %v2665
    %v2733 = vpop.f32.mrf.mxu0
    %v2734 = vadd.f32 0.0, %v2733
    %v2735 = vpop.f32.mrf.mxu0
    %2736 = vdwg.mxu0
    %v2738 = vsel %vm2371, %v480, 0
    %2740 = vmatprep.subr.mxu0 0.0
    %2741 = vmatpush1.msra.mxu0 0.0
    %2742 = vmatprep.subr.mxu0 0.0
    %2743 = vmatpush1.msra.mxu0 0.0
    %2744 = vmatprep.subr.mxu0 0.0
    %2745 = vmatpush1.msra.mxu0 0.0
    %2746 = vmatprep.subr.mxu0 0.0
    %2747 = vmatpush1.msra.mxu0 0.0
    %2748 = vmatprep.subr.mxu0 0.0
    %2749 = vmatpush1.msra.mxu0 0.0
    %2750 = vmatprep.subr.mxu0 0.0
    %2751 = vmatpush1.msra.mxu0 0.0
    %2752 = vmatprep.subr.mxu0 0.0
    %2753 = vmatpush1.msra.mxu0 0.0
    %2754 = vmatprep.subr.mxu0 0.0
    %2755 = vmatpush1.msra.mxu0 0.0
    %2756 = vmatprep.subr.mxu0 0.0
    %2757 = vmatpush1.msra.mxu0 0.0
    %2758 = vmatprep.subr.mxu0 0.0
    %2759 = vmatpush1.msra.mxu0 0.0
    %2760 = vmatprep.subr.mxu0 0.0
    %2761 = vmatpush1.msra.mxu0 0.0
    %2762 = vmatprep.subr.mxu0 0.0
    %2763 = vmatpush1.msra.mxu0 0.0
    %2764 = vmatprep.subr.mxu0 0.0
    %2765 = vmatpush1.msra.mxu0 0.0
    %2766 = vmatprep.subr.mxu0 0.0
    %2767 = vmatpush1.msra.mxu0 0.0
    %2768 = vmatprep.subr.mxu0 0.0
    %2769 = vmatpush1.msra.mxu0 0.0
    %2770 = vmatprep.subr.mxu0 0.0
    %2771 = vmatpush1.msra.mxu0 %v2072
    %2772 = vmatprep.subr.mxu0 0.0
    %2773 = vmatpush2.msra.mxu0 0.0
    %2774 = vmatprep.subr.mxu0 0.0
    %2775 = vmatpush2.msra.mxu0 0.0
    %2776 = vmatprep.subr.mxu0 0.0
    %2777 = vmatpush2.msra.mxu0 0.0
    %2778 = vmatprep.subr.mxu0 0.0
    %2779 = vmatpush2.msra.mxu0 0.0
    %2780 = vmatprep.subr.mxu0 0.0
    %2781 = vmatpush2.msra.mxu0 0.0
    %2782 = vmatprep.subr.mxu0 0.0
    %2783 = vmatpush2.msra.mxu0 0.0
    %2784 = vmatprep.subr.mxu0 0.0
    %2785 = vmatpush2.msra.mxu0 0.0
    %2786 = vmatprep.subr.mxu0 0.0
    %2787 = vmatpush2.msra.mxu0 0.0
    %2788 = vmatprep.subr.mxu0 0.0
    %2789 = vmatpush2.msra.mxu0 0.0
    %2790 = vmatprep.subr.mxu0 0.0
    %2791 = vmatpush2.msra.mxu0 0.0
    %2792 = vmatprep.subr.mxu0 0.0
    %2793 = vmatpush2.msra.mxu0 0.0
    %2794 = vmatprep.subr.mxu0 0.0
    %2795 = vmatpush2.msra.mxu0 0.0
    %2796 = vmatprep.subr.mxu0 0.0
    %2797 = vmatpush2.msra.mxu0 0.0
    %2798 = vmatprep.subr.mxu0 0.0
    %2799 = vmatpush2.msra.mxu0 0.0
    %2800 = vmatprep.subr.mxu0 0.0
    %2801 = vmatpush2.msra.mxu0 0.0
    %2802 = vmatprep.subr.mxu0 0.0
    %2803 = vmatpush2.msra.mxu0 0.0
    %2804 = vmatprep.mubr.f32.mxu0 0.0
    %2805 = vmatmul.mubr.f32.gmra.mxu0 %v2738
    %v2806 = vpop.f32.mrf.mxu0
    %v2807 = vadd.f32 0.0, %v2806
    %v2808 = vpop.f32.mrf.mxu0
    %2809 = vdwg.mxu0
    %v2811 = vsel %vm2371, %v481, 0
    %2813 = vmatprep.subr.mxu0 0.0
    %2814 = vmatpush1.msra.mxu0 0.0
    %2815 = vmatprep.subr.mxu0 0.0
    %2816 = vmatpush1.msra.mxu0 0.0
    %2817 = vmatprep.subr.mxu0 0.0
    %2818 = vmatpush1.msra.mxu0 0.0
    %2819 = vmatprep.subr.mxu0 0.0
    %2820 = vmatpush1.msra.mxu0 0.0
    %2821 = vmatprep.subr.mxu0 0.0
    %2822 = vmatpush1.msra.mxu0 0.0
    %2823 = vmatprep.subr.mxu0 0.0
    %2824 = vmatpush1.msra.mxu0 0.0
    %2825 = vmatprep.subr.mxu0 0.0
    %2826 = vmatpush1.msra.mxu0 0.0
    %2827 = vmatprep.subr.mxu0 0.0
    %2828 = vmatpush1.msra.mxu0 0.0
    %2829 = vmatprep.subr.mxu0 0.0
    %2830 = vmatpush1.msra.mxu0 0.0
    %2831 = vmatprep.subr.mxu0 0.0
    %2832 = vmatpush1.msra.mxu0 0.0
    %2833 = vmatprep.subr.mxu0 0.0
    %2834 = vmatpush1.msra.mxu0 0.0
    %2835 = vmatprep.subr.mxu0 0.0
    %2836 = vmatpush1.msra.mxu0 0.0
    %2837 = vmatprep.subr.mxu0 0.0
    %2838 = vmatpush1.msra.mxu0 0.0
    %2839 = vmatprep.subr.mxu0 0.0
    %2840 = vmatpush1.msra.mxu0 0.0
    %2841 = vmatprep.subr.mxu0 0.0
    %2842 = vmatpush1.msra.mxu0 0.0
    %2843 = vmatprep.subr.mxu0 0.0
    %2844 = vmatpush1.msra.mxu0 %v2073
    %2845 = vmatprep.subr.mxu0 0.0
    %2846 = vmatpush2.msra.mxu0 0.0
    %2847 = vmatprep.subr.mxu0 0.0
    %2848 = vmatpush2.msra.mxu0 0.0
    %2849 = vmatprep.subr.mxu0 0.0
    %2850 = vmatpush2.msra.mxu0 0.0
    %2851 = vmatprep.subr.mxu0 0.0
    %2852 = vmatpush2.msra.mxu0 0.0
    %2853 = vmatprep.subr.mxu0 0.0
    %2854 = vmatpush2.msra.mxu0 0.0
    %2855 = vmatprep.subr.mxu0 0.0
    %2856 = vmatpush2.msra.mxu0 0.0
    %2857 = vmatprep.subr.mxu0 0.0
    %2858 = vmatpush2.msra.mxu0 0.0
    %2859 = vmatprep.subr.mxu0 0.0
    %2860 = vmatpush2.msra.mxu0 0.0
    %2861 = vmatprep.subr.mxu0 0.0
    %2862 = vmatpush2.msra.mxu0 0.0
    %2863 = vmatprep.subr.mxu0 0.0
    %2864 = vmatpush2.msra.mxu0 0.0
    %2865 = vmatprep.subr.mxu0 0.0
    %2866 = vmatpush2.msra.mxu0 0.0
    %2867 = vmatprep.subr.mxu0 0.0
    %2868 = vmatpush2.msra.mxu0 0.0
    %2869 = vmatprep.subr.mxu0 0.0
    %2870 = vmatpush2.msra.mxu0 0.0
    %2871 = vmatprep.subr.mxu0 0.0
    %2872 = vmatpush2.msra.mxu0 0.0
    %2873 = vmatprep.subr.mxu0 0.0
    %2874 = vmatpush2.msra.mxu0 0.0
    %2875 = vmatprep.subr.mxu0 0.0
    %2876 = vmatpush2.msra.mxu0 0.0
    %2877 = vmatprep.mubr.f32.mxu0 0.0
    %2878 = vmatmul.mubr.f32.gmra.mxu0 %v2811
    %v2879 = vpop.f32.mrf.mxu0
    %v2880 = vadd.f32 0.0, %v2879
    %v2881 = vpop.f32.mrf.mxu0
    %2882 = vdwg.mxu0
    %v2884 = vsel %vm2371, %v482, 0
    %2886 = vmatprep.subr.mxu0 0.0
    %2887 = vmatpush1.msra.mxu0 0.0
    %2888 = vmatprep.subr.mxu0 0.0
    %2889 = vmatpush1.msra.mxu0 0.0
    %2890 = vmatprep.subr.mxu0 0.0
    %2891 = vmatpush1.msra.mxu0 0.0
    %2892 = vmatprep.subr.mxu0 0.0
    %2893 = vmatpush1.msra.mxu0 0.0
    %2894 = vmatprep.subr.mxu0 0.0
    %2895 = vmatpush1.msra.mxu0 0.0
    %2896 = vmatprep.subr.mxu0 0.0
    %2897 = vmatpush1.msra.mxu0 0.0
    %2898 = vmatprep.subr.mxu0 0.0
    %2899 = vmatpush1.msra.mxu0 0.0
    %2900 = vmatprep.subr.mxu0 0.0
    %2901 = vmatpush1.msra.mxu0 0.0
    %2902 = vmatprep.subr.mxu0 0.0
    %2903 = vmatpush1.msra.mxu0 0.0
    %2904 = vmatprep.subr.mxu0 0.0
    %2905 = vmatpush1.msra.mxu0 0.0
    %2906 = vmatprep.subr.mxu0 0.0
    %2907 = vmatpush1.msra.mxu0 0.0
    %2908 = vmatprep.subr.mxu0 0.0
    %2909 = vmatpush1.msra.mxu0 0.0
    %2910 = vmatprep.subr.mxu0 0.0
    %2911 = vmatpush1.msra.mxu0 0.0
    %2912 = vmatprep.subr.mxu0 0.0
    %2913 = vmatpush1.msra.mxu0 0.0
    %2914 = vmatprep.subr.mxu0 0.0
    %2915 = vmatpush1.msra.mxu0 0.0
    %2916 = vmatprep.subr.mxu0 0.0
    %2917 = vmatpush1.msra.mxu0 %v2074
    %2918 = vmatprep.subr.mxu0 0.0
    %2919 = vmatpush2.msra.mxu0 0.0
    %2920 = vmatprep.subr.mxu0 0.0
    %2921 = vmatpush2.msra.mxu0 0.0
    %2922 = vmatprep.subr.mxu0 0.0
    %2923 = vmatpush2.msra.mxu0 0.0
    %2924 = vmatprep.subr.mxu0 0.0
    %2925 = vmatpush2.msra.mxu0 0.0
    %2926 = vmatprep.subr.mxu0 0.0
    %2927 = vmatpush2.msra.mxu0 0.0
    %2928 = vmatprep.subr.mxu0 0.0
    %2929 = vmatpush2.msra.mxu0 0.0
    %2930 = vmatprep.subr.mxu0 0.0
    %2931 = vmatpush2.msra.mxu0 0.0
    %2932 = vmatprep.subr.mxu0 0.0
    %2933 = vmatpush2.msra.mxu0 0.0
    %2934 = vmatprep.subr.mxu0 0.0
    %2935 = vmatpush2.msra.mxu0 0.0
    %2936 = vmatprep.subr.mxu0 0.0
    %2937 = vmatpush2.msra.mxu0 0.0
    %2938 = vmatprep.subr.mxu0 0.0
    %2939 = vmatpush2.msra.mxu0 0.0
    %2940 = vmatprep.subr.mxu0 0.0
    %2941 = vmatpush2.msra.mxu0 0.0
    %2942 = vmatprep.subr.mxu0 0.0
    %2943 = vmatpush2.msra.mxu0 0.0
    %2944 = vmatprep.subr.mxu0 0.0
    %2945 = vmatpush2.msra.mxu0 0.0
    %2946 = vmatprep.subr.mxu0 0.0
    %2947 = vmatpush2.msra.mxu0 0.0
    %2948 = vmatprep.subr.mxu0 0.0
    %2949 = vmatpush2.msra.mxu0 0.0
    %2950 = vmatprep.mubr.f32.mxu0 0.0
    %2951 = vmatmul.mubr.f32.gmra.mxu0 %v2884
    %v2952 = vpop.f32.mrf.mxu0
    %v2953 = vadd.f32 0.0, %v2952
    %v2954 = vpop.f32.mrf.mxu0
    %2955 = vdwg.mxu0
    %v2956 = vsel %vm2371, %v2442, -inf
    %2957 = vmax.xlane.f32.xlu0 %v2956
    %v2958 = vpop.xlane.xlu0 %2957
    %v2959 = vsel %vm2371, %v2515, -inf
    %2960 = vmax.xlane.f32.xlu0 %v2959
    %v2961 = vpop.xlane.xlu0 %2960
    %v2962 = vsel %vm2371, %v2588, -inf
    %2963 = vmax.xlane.f32.xlu0 %v2962
    %v2964 = vpop.xlane.xlu0 %2963
    %v2965 = vsel %vm2371, %v2661, -inf
    %2966 = vmax.xlane.f32.xlu0 %v2965
    %v2967 = vpop.xlane.xlu0 %2966
    %v2968 = vsel %vm2371, %v2734, -inf
    %2969 = vmax.xlane.f32.xlu0 %v2968
    %v2970 = vpop.xlane.xlu0 %2969
    %v2971 = vsel %vm2371, %v2807, -inf
    %2972 = vmax.xlane.f32.xlu0 %v2971
    %v2973 = vpop.xlane.xlu0 %2972
    %v2974 = vsel %vm2371, %v2880, -inf
    %2975 = vmax.xlane.f32.xlu0 %v2974
    %v2976 = vpop.xlane.xlu0 %2975
    %v2977 = vsel %vm2371, %v2953, -inf
    %2978 = vmax.xlane.f32.xlu0 %v2977
    %v2979 = vpop.xlane.xlu0 %2978
    %v2980 = vsub.f32 %v2442, %v2958
    %v2981 = vsub.f32 %v2515, %v2961
    %v2982 = vsub.f32 %v2588, %v2964
    %v2983 = vsub.f32 %v2661, %v2967
    %v2984 = vsub.f32 %v2734, %v2970
    %v2985 = vsub.f32 %v2807, %v2973
    %v2986 = vsub.f32 %v2880, %v2976
    %v2987 = vsub.f32 %v2953, %v2979
    %v2988 = vmul.f32 %v2980, 1.442695
    %v2989 = vpow.pop %v2988
    %v2990 = vmul.f32 %v2981, 1.442695
    %v2991 = vpow.pop %v2990
    %v2992 = vmul.f32 %v2982, 1.442695
    %v2993 = vpow.pop %v2992
    %v2994 = vmul.f32 %v2983, 1.442695
    %v2995 = vpow.pop %v2994
    %v2996 = vmul.f32 %v2984, 1.442695
    %v2997 = vpow.pop %v2996
    %v2998 = vmul.f32 %v2985, 1.442695
    %v2999 = vpow.pop %v2998
    %v3000 = vmul.f32 %v2986, 1.442695
    %v3001 = vpow.pop %v3000
    %v3002 = vmul.f32 %v2987, 1.442695
    %v3003 = vpow.pop %v3002
    %v3004 = vsel %vm2371, %v2989, 0.0
    %3005 = vadd.xlane.f32.xlu0 %v3004
    %v3006 = vpop.xlane.xlu0 %3005
    %v3007 = vsel %vm2371, %v2991, 0.0
    %3008 = vadd.xlane.f32.xlu0 %v3007
    %v3009 = vpop.xlane.xlu0 %3008
    %v3010 = vsel %vm2371, %v2993, 0.0
    %3011 = vadd.xlane.f32.xlu0 %v3010
    %v3012 = vpop.xlane.xlu0 %3011
    %v3013 = vsel %vm2371, %v2995, 0.0
    %3014 = vadd.xlane.f32.xlu0 %v3013
    %v3015 = vpop.xlane.xlu0 %3014
    %v3016 = vsel %vm2371, %v2997, 0.0
    %3017 = vadd.xlane.f32.xlu0 %v3016
    %v3018 = vpop.xlane.xlu0 %3017
    %v3019 = vsel %vm2371, %v2999, 0.0
    %3020 = vadd.xlane.f32.xlu0 %v3019
    %v3021 = vpop.xlane.xlu0 %3020
    %v3022 = vsel %vm2371, %v3001, 0.0
    %3023 = vadd.xlane.f32.xlu0 %v3022
    %v3024 = vpop.xlane.xlu0 %3023
    %v3025 = vsel %vm2371, %v3003, 0.0
    %3026 = vadd.xlane.f32.xlu0 %v3025
    %v3027 = vpop.xlane.xlu0 %3026
    %v3028 = vrcp.pop %v3006
    %v3029 = vrcp.pop %v3009
    %v3030 = vrcp.pop %v3012
    %v3031 = vrcp.pop %v3015
    %v3032 = vrcp.pop %v3018
    %v3033 = vrcp.pop %v3021
    %v3034 = vrcp.pop %v3024
    %v3035 = vrcp.pop %v3027
    %v3036 = vmul.f32 %v2989, %v3028
    %v3037 = vmul.f32 %v2991, %v3029
    %v3038 = vmul.f32 %v2993, %v3030
    %v3039 = vmul.f32 %v2995, %v3031
    %v3040 = vmul.f32 %v2997, %v3032
    %v3041 = vmul.f32 %v2999, %v3033
    %v3042 = vmul.f32 %v3001, %v3034
    %v3043 = vmul.f32 %v3003, %v3035
    %v3045 = vsel %vm2371, %v3036, 0
    %3047 = vmatprep.subr.mxu0 0.0
    %3048 = vmatpush1.msra.mxu0 0.0
    %3049 = vmatprep.subr.mxu0 0.0
    %3050 = vmatpush1.msra.mxu0 0.0
    %3051 = vmatprep.subr.mxu0 0.0
    %3052 = vmatpush1.msra.mxu0 0.0
    %3053 = vmatprep.subr.mxu0 0.0
    %3054 = vmatpush1.msra.mxu0 0.0
    %3055 = vmatprep.subr.mxu0 0.0
    %3056 = vmatpush1.msra.mxu0 0.0
    %3057 = vmatprep.subr.mxu0 0.0
    %3058 = vmatpush1.msra.mxu0 0.0
    %3059 = vmatprep.subr.mxu0 0.0
    %3060 = vmatpush1.msra.mxu0 0.0
    %3061 = vmatprep.subr.mxu0 0.0
    %3062 = vmatpush1.msra.mxu0 0.0
    %3063 = vmatprep.subr.mxu0 0.0
    %3064 = vmatpush1.msra.mxu0 0.0
    %3065 = vmatprep.subr.mxu0 0.0
    %3066 = vmatpush1.msra.mxu0 0.0
    %3067 = vmatprep.subr.mxu0 0.0
    %3068 = vmatpush1.msra.mxu0 0.0
    %3069 = vmatprep.subr.mxu0 0.0
    %3070 = vmatpush1.msra.mxu0 0.0
    %3071 = vmatprep.subr.mxu0 0.0
    %3072 = vmatpush1.msra.mxu0 0.0
    %3073 = vmatprep.subr.mxu0 0.0
    %3074 = vmatpush1.msra.mxu0 0.0
    %3075 = vmatprep.subr.mxu0 0.0
    %3076 = vmatpush1.msra.mxu0 0.0
    %3077 = vmatprep.subr.mxu0 0.0
    %3078 = vmatpush1.msra.mxu0 %v2299
    %3079 = vmatprep.subr.mxu0 0.0
    %3080 = vmatpush2.msra.mxu0 0.0
    %3081 = vmatprep.subr.mxu0 0.0
    %3082 = vmatpush2.msra.mxu0 0.0
    %3083 = vmatprep.subr.mxu0 0.0
    %3084 = vmatpush2.msra.mxu0 0.0
    %3085 = vmatprep.subr.mxu0 0.0
    %3086 = vmatpush2.msra.mxu0 0.0
    %3087 = vmatprep.subr.mxu0 0.0
    %3088 = vmatpush2.msra.mxu0 0.0
    %3089 = vmatprep.subr.mxu0 0.0
    %3090 = vmatpush2.msra.mxu0 0.0
    %3091 = vmatprep.subr.mxu0 0.0
    %3092 = vmatpush2.msra.mxu0 0.0
    %3093 = vmatprep.subr.mxu0 0.0
    %3094 = vmatpush2.msra.mxu0 0.0
    %3095 = vmatprep.subr.mxu0 0.0
    %3096 = vmatpush2.msra.mxu0 0.0
    %3097 = vmatprep.subr.mxu0 0.0
    %3098 = vmatpush2.msra.mxu0 0.0
    %3099 = vmatprep.subr.mxu0 0.0
    %3100 = vmatpush2.msra.mxu0 0.0
    %3101 = vmatprep.subr.mxu0 0.0
    %3102 = vmatpush2.msra.mxu0 0.0
    %3103 = vmatprep.subr.mxu0 0.0
    %3104 = vmatpush2.msra.mxu0 0.0
    %3105 = vmatprep.subr.mxu0 0.0
    %3106 = vmatpush2.msra.mxu0 0.0
    %3107 = vmatprep.subr.mxu0 0.0
    %3108 = vmatpush2.msra.mxu0 0.0
    %3109 = vmatprep.subr.mxu0 0.0
    %3110 = vmatpush2.msra.mxu0 0.0
    %3111 = vmatprep.mubr.f32.mxu0 0.0
    %3112 = vmatmul.mubr.f32.gmra.mxu0 %v3045
    %v3113 = vpop.f32.mrf.mxu0
    %v3114 = vadd.f32 0.0, %v3113
    %v3115 = vpop.f32.mrf.mxu0
    %3116 = vdwg.mxu0
    %v3118 = vsel %vm2371, %v3037, 0
    %3120 = vmatprep.subr.mxu0 0.0
    %3121 = vmatpush1.msra.mxu0 0.0
    %3122 = vmatprep.subr.mxu0 0.0
    %3123 = vmatpush1.msra.mxu0 0.0
    %3124 = vmatprep.subr.mxu0 0.0
    %3125 = vmatpush1.msra.mxu0 0.0
    %3126 = vmatprep.subr.mxu0 0.0
    %3127 = vmatpush1.msra.mxu0 0.0
    %3128 = vmatprep.subr.mxu0 0.0
    %3129 = vmatpush1.msra.mxu0 0.0
    %3130 = vmatprep.subr.mxu0 0.0
    %3131 = vmatpush1.msra.mxu0 0.0
    %3132 = vmatprep.subr.mxu0 0.0
    %3133 = vmatpush1.msra.mxu0 0.0
    %3134 = vmatprep.subr.mxu0 0.0
    %3135 = vmatpush1.msra.mxu0 0.0
    %3136 = vmatprep.subr.mxu0 0.0
    %3137 = vmatpush1.msra.mxu0 0.0
    %3138 = vmatprep.subr.mxu0 0.0
    %3139 = vmatpush1.msra.mxu0 0.0
    %3140 = vmatprep.subr.mxu0 0.0
    %3141 = vmatpush1.msra.mxu0 0.0
    %3142 = vmatprep.subr.mxu0 0.0
    %3143 = vmatpush1.msra.mxu0 0.0
    %3144 = vmatprep.subr.mxu0 0.0
    %3145 = vmatpush1.msra.mxu0 0.0
    %3146 = vmatprep.subr.mxu0 0.0
    %3147 = vmatpush1.msra.mxu0 0.0
    %3148 = vmatprep.subr.mxu0 0.0
    %3149 = vmatpush1.msra.mxu0 0.0
    %3150 = vmatprep.subr.mxu0 0.0
    %3151 = vmatpush1.msra.mxu0 %v2300
    %3152 = vmatprep.subr.mxu0 0.0
    %3153 = vmatpush2.msra.mxu0 0.0
    %3154 = vmatprep.subr.mxu0 0.0
    %3155 = vmatpush2.msra.mxu0 0.0
    %3156 = vmatprep.subr.mxu0 0.0
    %3157 = vmatpush2.msra.mxu0 0.0
    %3158 = vmatprep.subr.mxu0 0.0
    %3159 = vmatpush2.msra.mxu0 0.0
    %3160 = vmatprep.subr.mxu0 0.0
    %3161 = vmatpush2.msra.mxu0 0.0
    %3162 = vmatprep.subr.mxu0 0.0
    %3163 = vmatpush2.msra.mxu0 0.0
    %3164 = vmatprep.subr.mxu0 0.0
    %3165 = vmatpush2.msra.mxu0 0.0
    %3166 = vmatprep.subr.mxu0 0.0
    %3167 = vmatpush2.msra.mxu0 0.0
    %3168 = vmatprep.subr.mxu0 0.0
    %3169 = vmatpush2.msra.mxu0 0.0
    %3170 = vmatprep.subr.mxu0 0.0
    %3171 = vmatpush2.msra.mxu0 0.0
    %3172 = vmatprep.subr.mxu0 0.0
    %3173 = vmatpush2.msra.mxu0 0.0
    %3174 = vmatprep.subr.mxu0 0.0
    %3175 = vmatpush2.msra.mxu0 0.0
    %3176 = vmatprep.subr.mxu0 0.0
    %3177 = vmatpush2.msra.mxu0 0.0
    %3178 = vmatprep.subr.mxu0 0.0
    %3179 = vmatpush2.msra.mxu0 0.0
    %3180 = vmatprep.subr.mxu0 0.0
    %3181 = vmatpush2.msra.mxu0 0.0
    %3182 = vmatprep.subr.mxu0 0.0
    %3183 = vmatpush2.msra.mxu0 0.0
    %3184 = vmatprep.mubr.f32.mxu0 0.0
    %3185 = vmatmul.mubr.f32.gmra.mxu0 %v3118
    %v3186 = vpop.f32.mrf.mxu0
    %v3187 = vadd.f32 0.0, %v3186
    %v3188 = vpop.f32.mrf.mxu0
    %3189 = vdwg.mxu0
    %v3191 = vsel %vm2371, %v3038, 0
    %3193 = vmatprep.subr.mxu0 0.0
    %3194 = vmatpush1.msra.mxu0 0.0
    %3195 = vmatprep.subr.mxu0 0.0
    %3196 = vmatpush1.msra.mxu0 0.0
    %3197 = vmatprep.subr.mxu0 0.0
    %3198 = vmatpush1.msra.mxu0 0.0
    %3199 = vmatprep.subr.mxu0 0.0
    %3200 = vmatpush1.msra.mxu0 0.0
    %3201 = vmatprep.subr.mxu0 0.0
    %3202 = vmatpush1.msra.mxu0 0.0
    %3203 = vmatprep.subr.mxu0 0.0
    %3204 = vmatpush1.msra.mxu0 0.0
    %3205 = vmatprep.subr.mxu0 0.0
    %3206 = vmatpush1.msra.mxu0 0.0
    %3207 = vmatprep.subr.mxu0 0.0
    %3208 = vmatpush1.msra.mxu0 0.0
    %3209 = vmatprep.subr.mxu0 0.0
    %3210 = vmatpush1.msra.mxu0 0.0
    %3211 = vmatprep.subr.mxu0 0.0
    %3212 = vmatpush1.msra.mxu0 0.0
    %3213 = vmatprep.subr.mxu0 0.0
    %3214 = vmatpush1.msra.mxu0 0.0
    %3215 = vmatprep.subr.mxu0 0.0
    %3216 = vmatpush1.msra.mxu0 0.0
    %3217 = vmatprep.subr.mxu0 0.0
    %3218 = vmatpush1.msra.mxu0 0.0
    %3219 = vmatprep.subr.mxu0 0.0
    %3220 = vmatpush1.msra.mxu0 0.0
    %3221 = vmatprep.subr.mxu0 0.0
    %3222 = vmatpush1.msra.mxu0 0.0
    %3223 = vmatprep.subr.mxu0 0.0
    %3224 = vmatpush1.msra.mxu0 %v2301
    %3225 = vmatprep.subr.mxu0 0.0
    %3226 = vmatpush2.msra.mxu0 0.0
    %3227 = vmatprep.subr.mxu0 0.0
    %3228 = vmatpush2.msra.mxu0 0.0
    %3229 = vmatprep.subr.mxu0 0.0
    %3230 = vmatpush2.msra.mxu0 0.0
    %3231 = vmatprep.subr.mxu0 0.0
    %3232 = vmatpush2.msra.mxu0 0.0
    %3233 = vmatprep.subr.mxu0 0.0
    %3234 = vmatpush2.msra.mxu0 0.0
    %3235 = vmatprep.subr.mxu0 0.0
    %3236 = vmatpush2.msra.mxu0 0.0
    %3237 = vmatprep.subr.mxu0 0.0
    %3238 = vmatpush2.msra.mxu0 0.0
    %3239 = vmatprep.subr.mxu0 0.0
    %3240 = vmatpush2.msra.mxu0 0.0
    %3241 = vmatprep.subr.mxu0 0.0
    %3242 = vmatpush2.msra.mxu0 0.0
    %3243 = vmatprep.subr.mxu0 0.0
    %3244 = vmatpush2.msra.mxu0 0.0
    %3245 = vmatprep.subr.mxu0 0.0
    %3246 = vmatpush2.msra.mxu0 0.0
    %3247 = vmatprep.subr.mxu0 0.0
    %3248 = vmatpush2.msra.mxu0 0.0
    %3249 = vmatprep.subr.mxu0 0.0
    %3250 = vmatpush2.msra.mxu0 0.0
    %3251 = vmatprep.subr.mxu0 0.0
    %3252 = vmatpush2.msra.mxu0 0.0
    %3253 = vmatprep.subr.mxu0 0.0
    %3254 = vmatpush2.msra.mxu0 0.0
    %3255 = vmatprep.subr.mxu0 0.0
    %3256 = vmatpush2.msra.mxu0 0.0
    %3257 = vmatprep.mubr.f32.mxu0 0.0
    %3258 = vmatmul.mubr.f32.gmra.mxu0 %v3191
    %v3259 = vpop.f32.mrf.mxu0
    %v3260 = vadd.f32 0.0, %v3259
    %v3261 = vpop.f32.mrf.mxu0
    %3262 = vdwg.mxu0
    %v3264 = vsel %vm2371, %v3039, 0
    %3266 = vmatprep.subr.mxu0 0.0
    %3267 = vmatpush1.msra.mxu0 0.0
    %3268 = vmatprep.subr.mxu0 0.0
    %3269 = vmatpush1.msra.mxu0 0.0
    %3270 = vmatprep.subr.mxu0 0.0
    %3271 = vmatpush1.msra.mxu0 0.0
    %3272 = vmatprep.subr.mxu0 0.0
    %3273 = vmatpush1.msra.mxu0 0.0
    %3274 = vmatprep.subr.mxu0 0.0
    %3275 = vmatpush1.msra.mxu0 0.0
    %3276 = vmatprep.subr.mxu0 0.0
    %3277 = vmatpush1.msra.mxu0 0.0
    %3278 = vmatprep.subr.mxu0 0.0
    %3279 = vmatpush1.msra.mxu0 0.0
    %3280 = vmatprep.subr.mxu0 0.0
    %3281 = vmatpush1.msra.mxu0 0.0
    %3282 = vmatprep.subr.mxu0 0.0
    %3283 = vmatpush1.msra.mxu0 0.0
    %3284 = vmatprep.subr.mxu0 0.0
    %3285 = vmatpush1.msra.mxu0 0.0
    %3286 = vmatprep.subr.mxu0 0.0
    %3287 = vmatpush1.msra.mxu0 0.0
    %3288 = vmatprep.subr.mxu0 0.0
    %3289 = vmatpush1.msra.mxu0 0.0
    %3290 = vmatprep.subr.mxu0 0.0
    %3291 = vmatpush1.msra.mxu0 0.0
    %3292 = vmatprep.subr.mxu0 0.0
    %3293 = vmatpush1.msra.mxu0 0.0
    %3294 = vmatprep.subr.mxu0 0.0
    %3295 = vmatpush1.msra.mxu0 0.0
    %3296 = vmatprep.subr.mxu0 0.0
    %3297 = vmatpush1.msra.mxu0 %v2302
    %3298 = vmatprep.subr.mxu0 0.0
    %3299 = vmatpush2.msra.mxu0 0.0
    %3300 = vmatprep.subr.mxu0 0.0
    %3301 = vmatpush2.msra.mxu0 0.0
    %3302 = vmatprep.subr.mxu0 0.0
    %3303 = vmatpush2.msra.mxu0 0.0
    %3304 = vmatprep.subr.mxu0 0.0
    %3305 = vmatpush2.msra.mxu0 0.0
    %3306 = vmatprep.subr.mxu0 0.0
    %3307 = vmatpush2.msra.mxu0 0.0
    %3308 = vmatprep.subr.mxu0 0.0
    %3309 = vmatpush2.msra.mxu0 0.0
    %3310 = vmatprep.subr.mxu0 0.0
    %3311 = vmatpush2.msra.mxu0 0.0
    %3312 = vmatprep.subr.mxu0 0.0
    %3313 = vmatpush2.msra.mxu0 0.0
    %3314 = vmatprep.subr.mxu0 0.0
    %3315 = vmatpush2.msra.mxu0 0.0
    %3316 = vmatprep.subr.mxu0 0.0
    %3317 = vmatpush2.msra.mxu0 0.0
    %3318 = vmatprep.subr.mxu0 0.0
    %3319 = vmatpush2.msra.mxu0 0.0
    %3320 = vmatprep.subr.mxu0 0.0
    %3321 = vmatpush2.msra.mxu0 0.0
    %3322 = vmatprep.subr.mxu0 0.0
    %3323 = vmatpush2.msra.mxu0 0.0
    %3324 = vmatprep.subr.mxu0 0.0
    %3325 = vmatpush2.msra.mxu0 0.0
    %3326 = vmatprep.subr.mxu0 0.0
    %3327 = vmatpush2.msra.mxu0 0.0
    %3328 = vmatprep.subr.mxu0 0.0
    %3329 = vmatpush2.msra.mxu0 0.0
    %3330 = vmatprep.mubr.f32.mxu0 0.0
    %3331 = vmatmul.mubr.f32.gmra.mxu0 %v3264
    %v3332 = vpop.f32.mrf.mxu0
    %v3333 = vadd.f32 0.0, %v3332
    %v3334 = vpop.f32.mrf.mxu0
    %3335 = vdwg.mxu0
    %v3337 = vsel %vm2371, %v3040, 0
    %3339 = vmatprep.subr.mxu0 0.0
    %3340 = vmatpush1.msra.mxu0 0.0
    %3341 = vmatprep.subr.mxu0 0.0
    %3342 = vmatpush1.msra.mxu0 0.0
    %3343 = vmatprep.subr.mxu0 0.0
    %3344 = vmatpush1.msra.mxu0 0.0
    %3345 = vmatprep.subr.mxu0 0.0
    %3346 = vmatpush1.msra.mxu0 0.0
    %3347 = vmatprep.subr.mxu0 0.0
    %3348 = vmatpush1.msra.mxu0 0.0
    %3349 = vmatprep.subr.mxu0 0.0
    %3350 = vmatpush1.msra.mxu0 0.0
    %3351 = vmatprep.subr.mxu0 0.0
    %3352 = vmatpush1.msra.mxu0 0.0
    %3353 = vmatprep.subr.mxu0 0.0
    %3354 = vmatpush1.msra.mxu0 0.0
    %3355 = vmatprep.subr.mxu0 0.0
    %3356 = vmatpush1.msra.mxu0 0.0
    %3357 = vmatprep.subr.mxu0 0.0
    %3358 = vmatpush1.msra.mxu0 0.0
    %3359 = vmatprep.subr.mxu0 0.0
    %3360 = vmatpush1.msra.mxu0 0.0
    %3361 = vmatprep.subr.mxu0 0.0
    %3362 = vmatpush1.msra.mxu0 0.0
    %3363 = vmatprep.subr.mxu0 0.0
    %3364 = vmatpush1.msra.mxu0 0.0
    %3365 = vmatprep.subr.mxu0 0.0
    %3366 = vmatpush1.msra.mxu0 0.0
    %3367 = vmatprep.subr.mxu0 0.0
    %3368 = vmatpush1.msra.mxu0 0.0
    %3369 = vmatprep.subr.mxu0 0.0
    %3370 = vmatpush1.msra.mxu0 %v2367
    %3371 = vmatprep.subr.mxu0 0.0
    %3372 = vmatpush2.msra.mxu0 0.0
    %3373 = vmatprep.subr.mxu0 0.0
    %3374 = vmatpush2.msra.mxu0 0.0
    %3375 = vmatprep.subr.mxu0 0.0
    %3376 = vmatpush2.msra.mxu0 0.0
    %3377 = vmatprep.subr.mxu0 0.0
    %3378 = vmatpush2.msra.mxu0 0.0
    %3379 = vmatprep.subr.mxu0 0.0
    %3380 = vmatpush2.msra.mxu0 0.0
    %3381 = vmatprep.subr.mxu0 0.0
    %3382 = vmatpush2.msra.mxu0 0.0
    %3383 = vmatprep.subr.mxu0 0.0
    %3384 = vmatpush2.msra.mxu0 0.0
    %3385 = vmatprep.subr.mxu0 0.0
    %3386 = vmatpush2.msra.mxu0 0.0
    %3387 = vmatprep.subr.mxu0 0.0
    %3388 = vmatpush2.msra.mxu0 0.0
    %3389 = vmatprep.subr.mxu0 0.0
    %3390 = vmatpush2.msra.mxu0 0.0
    %3391 = vmatprep.subr.mxu0 0.0
    %3392 = vmatpush2.msra.mxu0 0.0
    %3393 = vmatprep.subr.mxu0 0.0
    %3394 = vmatpush2.msra.mxu0 0.0
    %3395 = vmatprep.subr.mxu0 0.0
    %3396 = vmatpush2.msra.mxu0 0.0
    %3397 = vmatprep.subr.mxu0 0.0
    %3398 = vmatpush2.msra.mxu0 0.0
    %3399 = vmatprep.subr.mxu0 0.0
    %3400 = vmatpush2.msra.mxu0 0.0
    %3401 = vmatprep.subr.mxu0 0.0
    %3402 = vmatpush2.msra.mxu0 0.0
    %3403 = vmatprep.mubr.f32.mxu0 0.0
    %3404 = vmatmul.mubr.f32.gmra.mxu0 %v3337
    %v3405 = vpop.f32.mrf.mxu0
    %v3406 = vadd.f32 0.0, %v3405
    %v3407 = vpop.f32.mrf.mxu0
    %3408 = vdwg.mxu0
    %v3410 = vsel %vm2371, %v3041, 0
    %3412 = vmatprep.subr.mxu0 0.0
    %3413 = vmatpush1.msra.mxu0 0.0
    %3414 = vmatprep.subr.mxu0 0.0
    %3415 = vmatpush1.msra.mxu0 0.0
    %3416 = vmatprep.subr.mxu0 0.0
    %3417 = vmatpush1.msra.mxu0 0.0
    %3418 = vmatprep.subr.mxu0 0.0
    %3419 = vmatpush1.msra.mxu0 0.0
    %3420 = vmatprep.subr.mxu0 0.0
    %3421 = vmatpush1.msra.mxu0 0.0
    %3422 = vmatprep.subr.mxu0 0.0
    %3423 = vmatpush1.msra.mxu0 0.0
    %3424 = vmatprep.subr.mxu0 0.0
    %3425 = vmatpush1.msra.mxu0 0.0
    %3426 = vmatprep.subr.mxu0 0.0
    %3427 = vmatpush1.msra.mxu0 0.0
    %3428 = vmatprep.subr.mxu0 0.0
    %3429 = vmatpush1.msra.mxu0 0.0
    %3430 = vmatprep.subr.mxu0 0.0
    %3431 = vmatpush1.msra.mxu0 0.0
    %3432 = vmatprep.subr.mxu0 0.0
    %3433 = vmatpush1.msra.mxu0 0.0
    %3434 = vmatprep.subr.mxu0 0.0
    %3435 = vmatpush1.msra.mxu0 0.0
    %3436 = vmatprep.subr.mxu0 0.0
    %3437 = vmatpush1.msra.mxu0 0.0
    %3438 = vmatprep.subr.mxu0 0.0
    %3439 = vmatpush1.msra.mxu0 0.0
    %3440 = vmatprep.subr.mxu0 0.0
    %3441 = vmatpush1.msra.mxu0 0.0
    %3442 = vmatprep.subr.mxu0 0.0
    %3443 = vmatpush1.msra.mxu0 %v2368
    %3444 = vmatprep.subr.mxu0 0.0
    %3445 = vmatpush2.msra.mxu0 0.0
    %3446 = vmatprep.subr.mxu0 0.0
    %3447 = vmatpush2.msra.mxu0 0.0
    %3448 = vmatprep.subr.mxu0 0.0
    %3449 = vmatpush2.msra.mxu0 0.0
    %3450 = vmatprep.subr.mxu0 0.0
    %3451 = vmatpush2.msra.mxu0 0.0
    %3452 = vmatprep.subr.mxu0 0.0
    %3453 = vmatpush2.msra.mxu0 0.0
    %3454 = vmatprep.subr.mxu0 0.0
    %3455 = vmatpush2.msra.mxu0 0.0
    %3456 = vmatprep.subr.mxu0 0.0
    %3457 = vmatpush2.msra.mxu0 0.0
    %3458 = vmatprep.subr.mxu0 0.0
    %3459 = vmatpush2.msra.mxu0 0.0
    %3460 = vmatprep.subr.mxu0 0.0
    %3461 = vmatpush2.msra.mxu0 0.0
    %3462 = vmatprep.subr.mxu0 0.0
    %3463 = vmatpush2.msra.mxu0 0.0
    %3464 = vmatprep.subr.mxu0 0.0
    %3465 = vmatpush2.msra.mxu0 0.0
    %3466 = vmatprep.subr.mxu0 0.0
    %3467 = vmatpush2.msra.mxu0 0.0
    %3468 = vmatprep.subr.mxu0 0.0
    %3469 = vmatpush2.msra.mxu0 0.0
    %3470 = vmatprep.subr.mxu0 0.0
    %3471 = vmatpush2.msra.mxu0 0.0
    %3472 = vmatprep.subr.mxu0 0.0
    %3473 = vmatpush2.msra.mxu0 0.0
    %3474 = vmatprep.subr.mxu0 0.0
    %3475 = vmatpush2.msra.mxu0 0.0
    %3476 = vmatprep.mubr.f32.mxu0 0.0
    %3477 = vmatmul.mubr.f32.gmra.mxu0 %v3410
    %v3478 = vpop.f32.mrf.mxu0
    %v3479 = vadd.f32 0.0, %v3478
    %v3480 = vpop.f32.mrf.mxu0
    %3481 = vdwg.mxu0
    %v3483 = vsel %vm2371, %v3042, 0
    %3485 = vmatprep.subr.mxu0 0.0
    %3486 = vmatpush1.msra.mxu0 0.0
    %3487 = vmatprep.subr.mxu0 0.0
    %3488 = vmatpush1.msra.mxu0 0.0
    %3489 = vmatprep.subr.mxu0 0.0
    %3490 = vmatpush1.msra.mxu0 0.0
    %3491 = vmatprep.subr.mxu0 0.0
    %3492 = vmatpush1.msra.mxu0 0.0
    %3493 = vmatprep.subr.mxu0 0.0
    %3494 = vmatpush1.msra.mxu0 0.0
    %3495 = vmatprep.subr.mxu0 0.0
    %3496 = vmatpush1.msra.mxu0 0.0
    %3497 = vmatprep.subr.mxu0 0.0
    %3498 = vmatpush1.msra.mxu0 0.0
    %3499 = vmatprep.subr.mxu0 0.0
    %3500 = vmatpush1.msra.mxu0 0.0
    %3501 = vmatprep.subr.mxu0 0.0
    %3502 = vmatpush1.msra.mxu0 0.0
    %3503 = vmatprep.subr.mxu0 0.0
    %3504 = vmatpush1.msra.mxu0 0.0
    %3505 = vmatprep.subr.mxu0 0.0
    %3506 = vmatpush1.msra.mxu0 0.0
    %3507 = vmatprep.subr.mxu0 0.0
    %3508 = vmatpush1.msra.mxu0 0.0
    %3509 = vmatprep.subr.mxu0 0.0
    %3510 = vmatpush1.msra.mxu0 0.0
    %3511 = vmatprep.subr.mxu0 0.0
    %3512 = vmatpush1.msra.mxu0 0.0
    %3513 = vmatprep.subr.mxu0 0.0
    %3514 = vmatpush1.msra.mxu0 0.0
    %3515 = vmatprep.subr.mxu0 0.0
    %3516 = vmatpush1.msra.mxu0 %v2369
    %3517 = vmatprep.subr.mxu0 0.0
    %3518 = vmatpush2.msra.mxu0 0.0
    %3519 = vmatprep.subr.mxu0 0.0
    %3520 = vmatpush2.msra.mxu0 0.0
    %3521 = vmatprep.subr.mxu0 0.0
    %3522 = vmatpush2.msra.mxu0 0.0
    %3523 = vmatprep.subr.mxu0 0.0
    %3524 = vmatpush2.msra.mxu0 0.0
    %3525 = vmatprep.subr.mxu0 0.0
    %3526 = vmatpush2.msra.mxu0 0.0
    %3527 = vmatprep.subr.mxu0 0.0
    %3528 = vmatpush2.msra.mxu0 0.0
    %3529 = vmatprep.subr.mxu0 0.0
    %3530 = vmatpush2.msra.mxu0 0.0
    %3531 = vmatprep.subr.mxu0 0.0
    %3532 = vmatpush2.msra.mxu0 0.0
    %3533 = vmatprep.subr.mxu0 0.0
    %3534 = vmatpush2.msra.mxu0 0.0
    %3535 = vmatprep.subr.mxu0 0.0
    %3536 = vmatpush2.msra.mxu0 0.0
    %3537 = vmatprep.subr.mxu0 0.0
    %3538 = vmatpush2.msra.mxu0 0.0
    %3539 = vmatprep.subr.mxu0 0.0
    %3540 = vmatpush2.msra.mxu0 0.0
    %3541 = vmatprep.subr.mxu0 0.0
    %3542 = vmatpush2.msra.mxu0 0.0
    %3543 = vmatprep.subr.mxu0 0.0
    %3544 = vmatpush2.msra.mxu0 0.0
    %3545 = vmatprep.subr.mxu0 0.0
    %3546 = vmatpush2.msra.mxu0 0.0
    %3547 = vmatprep.subr.mxu0 0.0
    %3548 = vmatpush2.msra.mxu0 0.0
    %3549 = vmatprep.mubr.f32.mxu0 0.0
    %3550 = vmatmul.mubr.f32.gmra.mxu0 %v3483
    %v3551 = vpop.f32.mrf.mxu0
    %v3552 = vadd.f32 0.0, %v3551
    %v3553 = vpop.f32.mrf.mxu0
    %3554 = vdwg.mxu0
    %v3556 = vsel %vm2371, %v3043, 0
    %3558 = vmatprep.subr.mxu0 0.0
    %3559 = vmatpush1.msra.mxu0 0.0
    %3560 = vmatprep.subr.mxu0 0.0
    %3561 = vmatpush1.msra.mxu0 0.0
    %3562 = vmatprep.subr.mxu0 0.0
    %3563 = vmatpush1.msra.mxu0 0.0
    %3564 = vmatprep.subr.mxu0 0.0
    %3565 = vmatpush1.msra.mxu0 0.0
    %3566 = vmatprep.subr.mxu0 0.0
    %3567 = vmatpush1.msra.mxu0 0.0
    %3568 = vmatprep.subr.mxu0 0.0
    %3569 = vmatpush1.msra.mxu0 0.0
    %3570 = vmatprep.subr.mxu0 0.0
    %3571 = vmatpush1.msra.mxu0 0.0
    %3572 = vmatprep.subr.mxu0 0.0
    %3573 = vmatpush1.msra.mxu0 0.0
    %3574 = vmatprep.subr.mxu0 0.0
    %3575 = vmatpush1.msra.mxu0 0.0
    %3576 = vmatprep.subr.mxu0 0.0
    %3577 = vmatpush1.msra.mxu0 0.0
    %3578 = vmatprep.subr.mxu0 0.0
    %3579 = vmatpush1.msra.mxu0 0.0
    %3580 = vmatprep.subr.mxu0 0.0
    %3581 = vmatpush1.msra.mxu0 0.0
    %3582 = vmatprep.subr.mxu0 0.0
    %3583 = vmatpush1.msra.mxu0 0.0
    %3584 = vmatprep.subr.mxu0 0.0
    %3585 = vmatpush1.msra.mxu0 0.0
    %3586 = vmatprep.subr.mxu0 0.0
    %3587 = vmatpush1.msra.mxu0 0.0
    %3588 = vmatprep.subr.mxu0 0.0
    %3589 = vmatpush1.msra.mxu0 %v2370
    %3590 = vmatprep.subr.mxu0 0.0
    %3591 = vmatpush2.msra.mxu0 0.0
    %3592 = vmatprep.subr.mxu0 0.0
    %3593 = vmatpush2.msra.mxu0 0.0
    %3594 = vmatprep.subr.mxu0 0.0
    %3595 = vmatpush2.msra.mxu0 0.0
    %3596 = vmatprep.subr.mxu0 0.0
    %3597 = vmatpush2.msra.mxu0 0.0
    %3598 = vmatprep.subr.mxu0 0.0
    %3599 = vmatpush2.msra.mxu0 0.0
    %3600 = vmatprep.subr.mxu0 0.0
    %3601 = vmatpush2.msra.mxu0 0.0
    %3602 = vmatprep.subr.mxu0 0.0
    %3603 = vmatpush2.msra.mxu0 0.0
    %3604 = vmatprep.subr.mxu0 0.0
    %3605 = vmatpush2.msra.mxu0 0.0
    %3606 = vmatprep.subr.mxu0 0.0
    %3607 = vmatpush2.msra.mxu0 0.0
    %3608 = vmatprep.subr.mxu0 0.0
    %3609 = vmatpush2.msra.mxu0 0.0
    %3610 = vmatprep.subr.mxu0 0.0
    %3611 = vmatpush2.msra.mxu0 0.0
    %3612 = vmatprep.subr.mxu0 0.0
    %3613 = vmatpush2.msra.mxu0 0.0
    %3614 = vmatprep.subr.mxu0 0.0
    %3615 = vmatpush2.msra.mxu0 0.0
    %3616 = vmatprep.subr.mxu0 0.0
    %3617 = vmatpush2.msra.mxu0 0.0
    %3618 = vmatprep.subr.mxu0 0.0
    %3619 = vmatpush2.msra.mxu0 0.0
    %3620 = vmatprep.subr.mxu0 0.0
    %3621 = vmatpush2.msra.mxu0 0.0
    %3622 = vmatprep.mubr.f32.mxu0 0.0
    %3623 = vmatmul.mubr.f32.gmra.mxu0 %v3556
    %v3624 = vpop.f32.mrf.mxu0
    %v3625 = vadd.f32 0.0, %v3624
    %v3626 = vpop.f32.mrf.mxu0
    %3627 = vdwg.mxu0
    %v3628 = vcombine.low %v3114, %v3260
    %v3629 = vcombine.high %v3114, %v3260
    %v3631 = vunpack.c.l.s4 1983009808
    %v3632 = vunpack.c.0.s8 %v3631
    %v3633 = vlaneseq
    %v3634 = vshrl.u32 %v3633, 7
    %v3635 = vsub.s32 %v3632, %v3634
    %v3636 = vrot.slane %v3628, %v3635
    %v3638 = vunpack.c.l.s4 1983009808
    %v3639 = vunpack.c.0.s8 %v3638
    %v3640 = vlaneseq
    %v3641 = vshrl.u32 %v3640, 7
    %v3642 = vsub.s32 %v3639, %v3641
    %v3643 = vrot.slane %v3629, %v3642
    %v3644 = vcombine.low %v3187, %v3333
    %v3645 = vcombine.high %v3187, %v3333
    %v3647 = vunpack.c.l.s4 1983009808
    %v3648 = vunpack.c.0.s8 %v3647
    %v3649 = vlaneseq
    %v3650 = vshrl.u32 %v3649, 7
    %v3651 = vsub.s32 %v3648, %v3650
    %v3652 = vrot.slane %v3644, %v3651
    %v3654 = vunpack.c.l.s4 1983009808
    %v3655 = vunpack.c.0.s8 %v3654
    %v3656 = vlaneseq
    %v3657 = vshrl.u32 %v3656, 7
    %v3658 = vsub.s32 %v3655, %v3657
    %v3659 = vrot.slane %v3645, %v3658
    %v3660 = vcombine.low %v3636, %v3652
    %v3661 = vcombine.high %v3636, %v3652
    %v3663 = vunpack.c.l.s4 1934713408
    %v3664 = vunpack.c.0.s8 %v3663
    %v3665 = vlaneseq
    %v3666 = vshrl.u32 %v3665, 7
    %v3667 = vsub.s32 %v3664, %v3666
    %v3668 = vrot.slane %v3660, %v3667
    %v3670 = vunpack.c.l.s4 1934713408
    %v3671 = vunpack.c.0.s8 %v3670
    %v3672 = vlaneseq
    %v3673 = vshrl.u32 %v3672, 7
    %v3674 = vsub.s32 %v3671, %v3673
    %v3675 = vrot.slane %v3661, %v3674
    %v3676 = vcombine.low %v3643, %v3659
    %v3677 = vcombine.high %v3643, %v3659
    %v3679 = vunpack.c.l.s4 1934713408
    %v3680 = vunpack.c.0.s8 %v3679
    %v3681 = vlaneseq
    %v3682 = vshrl.u32 %v3681, 7
    %v3683 = vsub.s32 %v3680, %v3682
    %v3684 = vrot.slane %v3676, %v3683
    %v3686 = vunpack.c.l.s4 1934713408
    %v3687 = vunpack.c.0.s8 %v3686
    %v3688 = vlaneseq
    %v3689 = vshrl.u32 %v3688, 7
    %v3690 = vsub.s32 %v3687, %v3689
    %v3691 = vrot.slane %v3677, %v3690
    %v3692 = vcombine.high %v3668, 0.0
    %v3693 = vcombine.high %v3675, 0.0
    %v3694 = vcombine.high %v3684, 0.0
    %v3695 = vcombine.high %v3691, 0.0
    %v3696 = vcombine.low %v3406, %v3552
    %v3697 = vcombine.high %v3406, %v3552
    %v3699 = vunpack.c.l.s4 1983009808
    %v3700 = vunpack.c.0.s8 %v3699
    %v3701 = vlaneseq
    %v3702 = vshrl.u32 %v3701, 7
    %v3703 = vsub.s32 %v3700, %v3702
    %v3704 = vrot.slane %v3696, %v3703
    %v3706 = vunpack.c.l.s4 1983009808
    %v3707 = vunpack.c.0.s8 %v3706
    %v3708 = vlaneseq
    %v3709 = vshrl.u32 %v3708, 7
    %v3710 = vsub.s32 %v3707, %v3709
    %v3711 = vrot.slane %v3697, %v3710
    %v3712 = vcombine.low %v3479, %v3625
    %v3713 = vcombine.high %v3479, %v3625
    %v3715 = vunpack.c.l.s4 1983009808
    %v3716 = vunpack.c.0.s8 %v3715
    %v3717 = vlaneseq
    %v3718 = vshrl.u32 %v3717, 7
    %v3719 = vsub.s32 %v3716, %v3718
    %v3720 = vrot.slane %v3712, %v3719
    %v3722 = vunpack.c.l.s4 1983009808
    %v3723 = vunpack.c.0.s8 %v3722
    %v3724 = vlaneseq
    %v3725 = vshrl.u32 %v3724, 7
    %v3726 = vsub.s32 %v3723, %v3725
    %v3727 = vrot.slane %v3713, %v3726
    %v3728 = vcombine.low %v3704, %v3720
    %v3729 = vcombine.high %v3704, %v3720
    %v3731 = vunpack.c.l.s4 1934713408
    %v3732 = vunpack.c.0.s8 %v3731
    %v3733 = vlaneseq
    %v3734 = vshrl.u32 %v3733, 7
    %v3735 = vsub.s32 %v3732, %v3734
    %v3736 = vrot.slane %v3728, %v3735
    %v3738 = vunpack.c.l.s4 1934713408
    %v3739 = vunpack.c.0.s8 %v3738
    %v3740 = vlaneseq
    %v3741 = vshrl.u32 %v3740, 7
    %v3742 = vsub.s32 %v3739, %v3741
    %v3743 = vrot.slane %v3729, %v3742
    %v3744 = vcombine.low %v3711, %v3727
    %v3745 = vcombine.high %v3711, %v3727
    %v3747 = vunpack.c.l.s4 1934713408
    %v3748 = vunpack.c.0.s8 %v3747
    %v3749 = vlaneseq
    %v3750 = vshrl.u32 %v3749, 7
    %v3751 = vsub.s32 %v3748, %v3750
    %v3752 = vrot.slane %v3744, %v3751
    %v3754 = vunpack.c.l.s4 1934713408
    %v3755 = vunpack.c.0.s8 %v3754
    %v3756 = vlaneseq
    %v3757 = vshrl.u32 %v3756, 7
    %v3758 = vsub.s32 %v3755, %v3757
    %v3759 = vrot.slane %v3745, %v3758
    %v3760 = vcombine.high %v3736, 0.0
    %v3761 = vcombine.high %v3743, 0.0
    %v3762 = vcombine.high %v3752, 0.0
    %v3763 = vcombine.high %v3759, 0.0
    %v3764 = vcombine.low %v3668, %v3675
    %v3766 = vunpack.c.l.s4 1983009808
    %v3767 = vunpack.c.0.s8 %v3766
    %v3768 = vlaneseq
    %v3769 = vshrl.u32 %v3768, 7
    %v3770 = vsub.s32 %v3767, %v3769
    %v3771 = vrot.slane %v3764, %v3770
    %v3772 = vcombine.low %v3692, %v3693
    %v3774 = vunpack.c.l.s4 1983009808
    %v3775 = vunpack.c.0.s8 %v3774
    %v3776 = vlaneseq
    %v3777 = vshrl.u32 %v3776, 7
    %v3778 = vsub.s32 %v3775, %v3777
    %v3779 = vrot.slane %v3772, %v3778
    %v3780 = vcombine.low %v3684, %v3691
    %v3782 = vunpack.c.l.s4 1983009808
    %v3783 = vunpack.c.0.s8 %v3782
    %v3784 = vlaneseq
    %v3785 = vshrl.u32 %v3784, 7
    %v3786 = vsub.s32 %v3783, %v3785
    %v3787 = vrot.slane %v3780, %v3786
    %v3788 = vcombine.low %v3694, %v3695
    %v3790 = vunpack.c.l.s4 1983009808
    %v3791 = vunpack.c.0.s8 %v3790
    %v3792 = vlaneseq
    %v3793 = vshrl.u32 %v3792, 7
    %v3794 = vsub.s32 %v3791, %v3793
    %v3795 = vrot.slane %v3788, %v3794
    %v3796 = vcombine.low %v3771, %v3779
    %v3797 = vcombine.high %v3771, %v3779
    %v3799 = vunpack.c.l.s4 1934713408
    %v3800 = vunpack.c.0.s8 %v3799
    %v3801 = vlaneseq
    %v3802 = vshrl.u32 %v3801, 7
    %v3803 = vsub.s32 %v3800, %v3802
    %v3804 = vrot.slane %v3796, %v3803
    %v3806 = vunpack.c.l.s4 1934713408
    %v3807 = vunpack.c.0.s8 %v3806
    %v3808 = vlaneseq
    %v3809 = vshrl.u32 %v3808, 7
    %v3810 = vsub.s32 %v3807, %v3809
    %v3811 = vrot.slane %v3797, %v3810
    %v3812 = vcombine.low %v3787, %v3795
    %v3813 = vcombine.high %v3787, %v3795
    %v3815 = vunpack.c.l.s4 1934713408
    %v3816 = vunpack.c.0.s8 %v3815
    %v3817 = vlaneseq
    %v3818 = vshrl.u32 %v3817, 7
    %v3819 = vsub.s32 %v3816, %v3818
    %v3820 = vrot.slane %v3812, %v3819
    %v3822 = vunpack.c.l.s4 1934713408
    %v3823 = vunpack.c.0.s8 %v3822
    %v3824 = vlaneseq
    %v3825 = vshrl.u32 %v3824, 7
    %v3826 = vsub.s32 %v3823, %v3825
    %v3827 = vrot.slane %v3813, %v3826
    %v3828 = vcombine.low %v3804, %v3820
    %v3829 = vcombine.high %v3804, %v3820
    %v3830 = vcombine.low %v3811, %v3827
    %v3831 = vcombine.high %v3811, %v3827
    %v3832 = vcombine.low %v3736, %v3743
    %v3834 = vunpack.c.l.s4 1983009808
    %v3835 = vunpack.c.0.s8 %v3834
    %v3836 = vlaneseq
    %v3837 = vshrl.u32 %v3836, 7
    %v3838 = vsub.s32 %v3835, %v3837
    %v3839 = vrot.slane %v3832, %v3838
    %v3840 = vcombine.low %v3760, %v3761
    %v3842 = vunpack.c.l.s4 1983009808
    %v3843 = vunpack.c.0.s8 %v3842
    %v3844 = vlaneseq
    %v3845 = vshrl.u32 %v3844, 7
    %v3846 = vsub.s32 %v3843, %v3845
    %v3847 = vrot.slane %v3840, %v3846
    %v3848 = vcombine.low %v3752, %v3759
    %v3850 = vunpack.c.l.s4 1983009808
    %v3851 = vunpack.c.0.s8 %v3850
    %v3852 = vlaneseq
    %v3853 = vshrl.u32 %v3852, 7
    %v3854 = vsub.s32 %v3851, %v3853
    %v3855 = vrot.slane %v3848, %v3854
    %v3856 = vcombine.low %v3762, %v3763
    %v3858 = vunpack.c.l.s4 1983009808
    %v3859 = vunpack.c.0.s8 %v3858
    %v3860 = vlaneseq
    %v3861 = vshrl.u32 %v3860, 7
    %v3862 = vsub.s32 %v3859, %v3861
    %v3863 = vrot.slane %v3856, %v3862
    %v3864 = vcombine.low %v3839, %v3847
    %v3865 = vcombine.high %v3839, %v3847
    %v3867 = vunpack.c.l.s4 1934713408
    %v3868 = vunpack.c.0.s8 %v3867
    %v3869 = vlaneseq
    %v3870 = vshrl.u32 %v3869, 7
    %v3871 = vsub.s32 %v3868, %v3870
    %v3872 = vrot.slane %v3864, %v3871
    %v3874 = vunpack.c.l.s4 1934713408
    %v3875 = vunpack.c.0.s8 %v3874
    %v3876 = vlaneseq
    %v3877 = vshrl.u32 %v3876, 7
    %v3878 = vsub.s32 %v3875, %v3877
    %v3879 = vrot.slane %v3865, %v3878
    %v3880 = vcombine.low %v3855, %v3863
    %v3881 = vcombine.high %v3855, %v3863
    %v3883 = vunpack.c.l.s4 1934713408
    %v3884 = vunpack.c.0.s8 %v3883
    %v3885 = vlaneseq
    %v3886 = vshrl.u32 %v3885, 7
    %v3887 = vsub.s32 %v3884, %v3886
    %v3888 = vrot.slane %v3880, %v3887
    %v3890 = vunpack.c.l.s4 1934713408
    %v3891 = vunpack.c.0.s8 %v3890
    %v3892 = vlaneseq
    %v3893 = vshrl.u32 %v3892, 7
    %v3894 = vsub.s32 %v3891, %v3893
    %v3895 = vrot.slane %v3881, %v3894
    %v3896 = vcombine.low %v3872, %v3888
    %v3897 = vcombine.high %v3872, %v3888
    %v3898 = vcombine.low %v3879, %v3895
    %v3899 = vcombine.high %v3879, %v3895
    %3902 = vrot.lane.b32.xlu0 %v3829, 8
    %v3903 = vpop.permute.xlu0 %3902
    %3904 = vrot.lane.b32.xlu0 %v3897, 8
    %v3905 = vpop.permute.xlu0 %3904
    %3910 = vrot.lane.b32.xlu0 %v3830, 16
    %v3911 = vpop.permute.xlu0 %3910
    %3912 = vrot.lane.b32.xlu0 %v3898, 16
    %v3913 = vpop.permute.xlu0 %3912
    %3918 = vrot.lane.b32.xlu0 %v3831, 24
    %v3919 = vpop.permute.xlu0 %3918
    %3920 = vrot.lane.b32.xlu0 %v3899, 24
    %v3921 = vpop.permute.xlu0 %3920
    %v3924 = vsel %vm2371, %v3828, %v3903
    %v3925 = vsel %vm2371, %v3896, %v3905
    %vm3926 = vcmask 130048
    %v3927 = vsel %vm3926, %v3924, %v3911
    %v3928 = vsel %vm3926, %v3925, %v3913
    %vm3929 = vcmask 195584
    %v3930 = vsel %vm3929, %v3927, %v3919
    %v3931 = vsel %vm3929, %v3928, %v3921
    %v3932 = vld [vmem:[%s5] sm:$0xff]
    %v3933 = vld [vmem:[%s5 + $0x8] sm:$0xff]
    %v3934 = vld [vmem:[%s5 + $0x10] sm:$0xff]
    %v3935 = vld [vmem:[%s5 + $0x18] sm:$0xff]
    %v3936 = vld [vmem:[%s6] sm:$0x1]
    %v3938 = vlaneseq
    %v3939 = vshrl.u32 %v3938, 7
    %v3940 = vsub.s32 0, %v3939
    %v3941 = vrot.slane %v3936, %v3940
    %v3944 = vsel %vm55, %v3930, 0
    %v3947 = vsel %vm55, %v3931, 0
    %3949 = vmatprep.subr.mxu0 0.0
    %3950 = vmatpush1.msra.mxu0 0.0
    %3951 = vmatprep.subr.mxu0 0.0
    %3952 = vmatpush1.msra.mxu0 0.0
    %3953 = vmatprep.subr.mxu0 0.0
    %3954 = vmatpush1.msra.mxu0 0.0
    %3955 = vmatprep.subr.mxu0 0.0
    %3956 = vmatpush1.msra.mxu0 0.0
    %3957 = vmatprep.subr.mxu0 0.0
    %3958 = vmatpush1.msra.mxu0 0.0
    %3959 = vmatprep.subr.mxu0 0.0
    %3960 = vmatpush1.msra.mxu0 0.0
    %3961 = vmatprep.subr.mxu0 0.0
    %3962 = vmatpush1.msra.mxu0 0.0
    %3963 = vmatprep.subr.mxu0 0.0
    %3964 = vmatpush1.msra.mxu0 0.0
    %3965 = vmatprep.subr.mxu0 0.0
    %3966 = vmatpush1.msra.mxu0 0.0
    %3967 = vmatprep.subr.mxu0 0.0
    %3968 = vmatpush1.msra.mxu0 0.0
    %3969 = vmatprep.subr.mxu0 0.0
    %3970 = vmatpush1.msra.mxu0 0.0
    %3971 = vmatprep.subr.mxu0 0.0
    %3972 = vmatpush1.msra.mxu0 0.0
    %3973 = vmatprep.subr.mxu0 0.0
    %3974 = vmatpush1.msra.mxu0 %v3935
    %3975 = vmatprep.subr.mxu0 0.0
    %3976 = vmatpush1.msra.mxu0 %v3934
    %3977 = vmatprep.subr.mxu0 0.0
    %3978 = vmatpush1.msra.mxu0 %v3933
    %3979 = vmatprep.subr.mxu0 0.0
    %3980 = vmatpush1.msra.mxu0 %v3932
    %3981 = vmatprep.subr.mxu0 0.0
    %3982 = vmatpush2.msra.mxu0 0.0
    %3983 = vmatprep.subr.mxu0 0.0
    %3984 = vmatpush2.msra.mxu0 0.0
    %3985 = vmatprep.subr.mxu0 0.0
    %3986 = vmatpush2.msra.mxu0 0.0
    %3987 = vmatprep.subr.mxu0 0.0
    %3988 = vmatpush2.msra.mxu0 0.0
    %3989 = vmatprep.subr.mxu0 0.0
    %3990 = vmatpush2.msra.mxu0 0.0
    %3991 = vmatprep.subr.mxu0 0.0
    %3992 = vmatpush2.msra.mxu0 0.0
    %3993 = vmatprep.subr.mxu0 0.0
    %3994 = vmatpush2.msra.mxu0 0.0
    %3995 = vmatprep.subr.mxu0 0.0
    %3996 = vmatpush2.msra.mxu0 0.0
    %3997 = vmatprep.subr.mxu0 0.0
    %3998 = vmatpush2.msra.mxu0 0.0
    %3999 = vmatprep.subr.mxu0 0.0
    %4000 = vmatpush2.msra.mxu0 0.0
    %4001 = vmatprep.subr.mxu0 0.0
    %4002 = vmatpush2.msra.mxu0 0.0
    %4003 = vmatprep.subr.mxu0 0.0
    %4004 = vmatpush2.msra.mxu0 0.0
    %4005 = vmatprep.subr.mxu0 0.0
    %4006 = vmatpush2.msra.mxu0 0.0
    %4007 = vmatprep.subr.mxu0 0.0
    %4008 = vmatpush2.msra.mxu0 0.0
    %4009 = vmatprep.subr.mxu0 0.0
    %4010 = vmatpush2.msra.mxu0 0.0
    %4011 = vmatprep.subr.mxu0 0.0
    %4012 = vmatpush2.msra.mxu0 0.0
    %4013 = vmatprep.mubr.f32.mxu0 0.0
    %4014 = vmatmul.mubr.f32.gmra.mxu0 %v3944
    %v4015 = vpop.f32.mrf.mxu0
    %v4016 = vadd.f32 %v3941, %v4015
    %v4017 = vpop.f32.mrf.mxu0
    %4018 = vmatprep.mubr.f32.mxu0 0.0
    %4019 = vmatmul.mubr.f32.gmra.mxu0 %v3947
    %v4020 = vpop.f32.mrf.mxu0
    %v4021 = vadd.f32 %v3941, %v4020
    %v4022 = vpop.f32.mrf.mxu0
    %4023 = vdwg.mxu0
    %v4024 = vld [vmem:[%s13] sm:$0x1]
    %v4026 = vlaneseq
    %v4027 = vshrl.u32 %v4026, 7
    %v4028 = vsub.s32 0, %v4027
    %v4029 = vrot.slane %v4024, %v4028
    %v4031 = vmul.f32 %v4029, %v4016
    %v4032 = vmul.f32 %v4029, %v4021
    %v4033 = vadd.f32 %v51, %v4031
    %v4034 = vadd.f32 %v52, %v4032
    %v4035 = vld [vmem:[%s7] sm:$0x1]
    %v4036 = vld [vmem:[%s8] sm:$0x1]
    %v4037 = vsel %vm55, %v4033, 0.0
    %4038 = vadd.xlane.f32.xlu0 %v4037
    %v4039 = vpop.xlane.xlu0 %4038
    %v4040 = vsel %vm55, %v4034, 0.0
    %4041 = vadd.xlane.f32.xlu0 %v4040
    %v4042 = vpop.xlane.xlu0 %4041
    %v4043 = vmul.f32 %v4039, %v62
    %v4044 = vmul.f32 %v4042, %v62
    %v4045 = vsub.f32 %v4033, %v4043
    %v4046 = vsub.f32 %v4034, %v4044
    %v4047 = vmul.f32 %v4045, %v4045
    %v4048 = vmul.f32 %v4046, %v4046
    %v4049 = vsel %vm55, %v4047, 0.0
    %4050 = vadd.xlane.f32.xlu0 %v4049
    %v4051 = vpop.xlane.xlu0 %4050
    %v4052 = vsel %vm55, %v4048, 0.0
    %4053 = vadd.xlane.f32.xlu0 %v4052
    %v4054 = vpop.xlane.xlu0 %4053
    %v4055 = vmul.f32 %v4051, %v62
    %v4056 = vmul.f32 %v4054, %v62
    %v4057 = vadd.f32 %v4055, 1e-05
    %v4058 = vadd.f32 %v4056, 1e-05
    %v4059 = vrsqrt.pop %v4057
    %v4060 = vrsqrt.pop %v4058
    %v4061 = vmul.f32 %v4045, %v4059
    %v4062 = vmul.f32 %v4046, %v4060
    %v4064 = vlaneseq
    %v4065 = vshrl.u32 %v4064, 7
    %v4066 = vsub.s32 0, %v4065
    %v4067 = vrot.slane %v4035, %v4066
    %v4069 = vmul.f32 %v4061, %v4067
    %v4070 = vmul.f32 %v4062, %v4067
    %v4072 = vlaneseq
    %v4073 = vshrl.u32 %v4072, 7
    %v4074 = vsub.s32 0, %v4073
    %v4075 = vrot.slane %v4036, %v4074
    %v4077 = vadd.f32 %v4069, %v4075
    %v4078 = vadd.f32 %v4070, %v4075
    %v4079 = vld [vmem:[%s9] sm:$0xff]
    %v4080 = vld [vmem:[%s9 + $0x8] sm:$0xff]
    %v4081 = vld [vmem:[%s9 + $0x10] sm:$0xff]
    %v4082 = vld [vmem:[%s9 + $0x18] sm:$0xff]
    %v4083 = vld [vmem:[%s10] sm:$0x1]
    %v4085 = vlaneseq
    %v4086 = vshrl.u32 %v4085, 7
    %v4087 = vsub.s32 0, %v4086
    %v4088 = vrot.slane %v4083, %v4087
    %v4091 = vsel %vm55, %v4077, 0
    %v4094 = vsel %vm55, %v4078, 0
    %4096 = vmatprep.subr.mxu0 0.0
    %4097 = vmatpush1.msra.mxu0 0.0
    %4098 = vmatprep.subr.mxu0 0.0
    %4099 = vmatpush1.msra.mxu0 0.0
    %4100 = vmatprep.subr.mxu0 0.0
    %4101 = vmatpush1.msra.mxu0 0.0
    %4102 = vmatprep.subr.mxu0 0.0
    %4103 = vmatpush1.msra.mxu0 0.0
    %4104 = vmatprep.subr.mxu0 0.0
    %4105 = vmatpush1.msra.mxu0 0.0
    %4106 = vmatprep.subr.mxu0 0.0
    %4107 = vmatpush1.msra.mxu0 0.0
    %4108 = vmatprep.subr.mxu0 0.0
    %4109 = vmatpush1.msra.mxu0 0.0
    %4110 = vmatprep.subr.mxu0 0.0
    %4111 = vmatpush1.msra.mxu0 0.0
    %4112 = vmatprep.subr.mxu0 0.0
    %4113 = vmatpush1.msra.mxu0 0.0
    %4114 = vmatprep.subr.mxu0 0.0
    %4115 = vmatpush1.msra.mxu0 0.0
    %4116 = vmatprep.subr.mxu0 0.0
    %4117 = vmatpush1.msra.mxu0 0.0
    %4118 = vmatprep.subr.mxu0 0.0
    %4119 = vmatpush1.msra.mxu0 0.0
    %4120 = vmatprep.subr.mxu0 0.0
    %4121 = vmatpush1.msra.mxu0 %v4082
    %4122 = vmatprep.subr.mxu0 0.0
    %4123 = vmatpush1.msra.mxu0 %v4081
    %4124 = vmatprep.subr.mxu0 0.0
    %4125 = vmatpush1.msra.mxu0 %v4080
    %4126 = vmatprep.subr.mxu0 0.0
    %4127 = vmatpush1.msra.mxu0 %v4079
    %4128 = vmatprep.subr.mxu0 0.0
    %4129 = vmatpush2.msra.mxu0 0.0
    %4130 = vmatprep.subr.mxu0 0.0
    %4131 = vmatpush2.msra.mxu0 0.0
    %4132 = vmatprep.subr.mxu0 0.0
    %4133 = vmatpush2.msra.mxu0 0.0
    %4134 = vmatprep.subr.mxu0 0.0
    %4135 = vmatpush2.msra.mxu0 0.0
    %4136 = vmatprep.subr.mxu0 0.0
    %4137 = vmatpush2.msra.mxu0 0.0
    %4138 = vmatprep.subr.mxu0 0.0
    %4139 = vmatpush2.msra.mxu0 0.0
    %4140 = vmatprep.subr.mxu0 0.0
    %4141 = vmatpush2.msra.mxu0 0.0
    %4142 = vmatprep.subr.mxu0 0.0
    %4143 = vmatpush2.msra.mxu0 0.0
    %4144 = vmatprep.subr.mxu0 0.0
    %4145 = vmatpush2.msra.mxu0 0.0
    %4146 = vmatprep.subr.mxu0 0.0
    %4147 = vmatpush2.msra.mxu0 0.0
    %4148 = vmatprep.subr.mxu0 0.0
    %4149 = vmatpush2.msra.mxu0 0.0
    %4150 = vmatprep.subr.mxu0 0.0
    %4151 = vmatpush2.msra.mxu0 0.0
    %4152 = vmatprep.subr.mxu0 0.0
    %4153 = vmatpush2.msra.mxu0 0.0
    %4154 = vmatprep.subr.mxu0 0.0
    %4155 = vmatpush2.msra.mxu0 0.0
    %4156 = vmatprep.subr.mxu0 0.0
    %4157 = vmatpush2.msra.mxu0 0.0
    %4158 = vmatprep.subr.mxu0 0.0
    %4159 = vmatpush2.msra.mxu0 0.0
    %4160 = vmatprep.mubr.f32.mxu0 0.0
    %4161 = vmatmul.mubr.f32.gmra.mxu0 %v4091
    %v4162 = vpop.f32.mrf.mxu0
    %v4163 = vadd.f32 %v4088, %v4162
    %v4164 = vpop.f32.mrf.mxu0
    %4165 = vmatprep.mubr.f32.mxu0 0.0
    %4166 = vmatmul.mubr.f32.gmra.mxu0 %v4094
    %v4167 = vpop.f32.mrf.mxu0
    %v4168 = vadd.f32 %v4088, %v4167
    %v4169 = vpop.f32.mrf.mxu0
    %4170 = vdwg.mxu0
    %v4171 = vmul.f32 %v4163, 0.5
    %v4172 = vmul.f32 %v4168, 0.5
    %v4173 = vmul.f32 %v4163, 0.70710677
    %v4174 = vmul.f32 %v4168, 0.70710677
    %v4175 = verf.f32.pop %v4173
    %v4176 = verf.f32.pop %v4174
    %v4177 = vadd.f32 %v4175, 1.0
    %v4178 = vadd.f32 %v4176, 1.0
    %v4179 = vmul.f32 %v4171, %v4177
    %v4180 = vmul.f32 %v4172, %v4178
    %v4181 = vld [vmem:[%s11] sm:$0xff]
    %v4182 = vld [vmem:[%s11 + $0x8] sm:$0xff]
    %v4183 = vld [vmem:[%s11 + $0x10] sm:$0xff]
    %v4184 = vld [vmem:[%s11 + $0x18] sm:$0xff]
    %v4185 = vld [vmem:[%s11 + $0x20] sm:$0xff]
    %v4186 = vld [vmem:[%s11 + $0x28] sm:$0xff]
    %v4187 = vld [vmem:[%s11 + $0x30] sm:$0xff]
    %v4188 = vld [vmem:[%s11 + $0x38] sm:$0xff]
    %v4189 = vld [vmem:[%s11 + $0x40] sm:$0xff]
    %v4190 = vld [vmem:[%s11 + $0x48] sm:$0xff]
    %v4191 = vld [vmem:[%s11 + $0x50] sm:$0xff]
    %v4192 = vld [vmem:[%s11 + $0x58] sm:$0xff]
    %v4193 = vld [vmem:[%s11 + $0x60] sm:$0xff]
    %v4194 = vld [vmem:[%s11 + $0x68] sm:$0xff]
    %v4195 = vld [vmem:[%s11 + $0x70] sm:$0xff]
    %v4196 = vld [vmem:[%s11 + $0x78] sm:$0xff]
    %v4197 = vld [vmem:[%s12] sm:$0x1]
    %v4199 = vlaneseq
    %v4200 = vshrl.u32 %v4199, 7
    %v4201 = vsub.s32 0, %v4200
    %v4202 = vrot.slane %v4197, %v4201
    %4204 = vmatprep.subr.mxu0 0.0
    %4205 = vmatpush1.msra.mxu0 %v4196
    %4206 = vmatprep.subr.mxu0 0.0
    %4207 = vmatpush1.msra.mxu0 %v4195
    %4208 = vmatprep.subr.mxu0 0.0
    %4209 = vmatpush1.msra.mxu0 %v4194
    %4210 = vmatprep.subr.mxu0 0.0
    %4211 = vmatpush1.msra.mxu0 %v4193
    %4212 = vmatprep.subr.mxu0 0.0
    %4213 = vmatpush1.msra.mxu0 %v4192
    %4214 = vmatprep.subr.mxu0 0.0
    %4215 = vmatpush1.msra.mxu0 %v4191
    %4216 = vmatprep.subr.mxu0 0.0
    %4217 = vmatpush1.msra.mxu0 %v4190
    %4218 = vmatprep.subr.mxu0 0.0
    %4219 = vmatpush1.msra.mxu0 %v4189
    %4220 = vmatprep.subr.mxu0 0.0
    %4221 = vmatpush1.msra.mxu0 %v4188
    %4222 = vmatprep.subr.mxu0 0.0
    %4223 = vmatpush1.msra.mxu0 %v4187
    %4224 = vmatprep.subr.mxu0 0.0
    %4225 = vmatpush1.msra.mxu0 %v4186
    %4226 = vmatprep.subr.mxu0 0.0
    %4227 = vmatpush1.msra.mxu0 %v4185
    %4228 = vmatprep.subr.mxu0 0.0
    %4229 = vmatpush1.msra.mxu0 %v4184
    %4230 = vmatprep.subr.mxu0 0.0
    %4231 = vmatpush1.msra.mxu0 %v4183
    %4232 = vmatprep.subr.mxu0 0.0
    %4233 = vmatpush1.msra.mxu0 %v4182
    %4234 = vmatprep.subr.mxu0 0.0
    %4235 = vmatpush1.msra.mxu0 %v4181
    %4236 = vmatprep.subr.mxu0 0.0
    %4237 = vmatpush2.msra.mxu0 0.0
    %4238 = vmatprep.subr.mxu0 0.0
    %4239 = vmatpush2.msra.mxu0 0.0
    %4240 = vmatprep.subr.mxu0 0.0
    %4241 = vmatpush2.msra.mxu0 0.0
    %4242 = vmatprep.subr.mxu0 0.0
    %4243 = vmatpush2.msra.mxu0 0.0
    %4244 = vmatprep.subr.mxu0 0.0
    %4245 = vmatpush2.msra.mxu0 0.0
    %4246 = vmatprep.subr.mxu0 0.0
    %4247 = vmatpush2.msra.mxu0 0.0
    %4248 = vmatprep.subr.mxu0 0.0
    %4249 = vmatpush2.msra.mxu0 0.0
    %4250 = vmatprep.subr.mxu0 0.0
    %4251 = vmatpush2.msra.mxu0 0.0
    %4252 = vmatprep.subr.mxu0 0.0
    %4253 = vmatpush2.msra.mxu0 0.0
    %4254 = vmatprep.subr.mxu0 0.0
    %4255 = vmatpush2.msra.mxu0 0.0
    %4256 = vmatprep.subr.mxu0 0.0
    %4257 = vmatpush2.msra.mxu0 0.0
    %4258 = vmatprep.subr.mxu0 0.0
    %4259 = vmatpush2.msra.mxu0 0.0
    %4260 = vmatprep.subr.mxu0 0.0
    %4261 = vmatpush2.msra.mxu0 0.0
    %4262 = vmatprep.subr.mxu0 0.0
    %4263 = vmatpush2.msra.mxu0 0.0
    %4264 = vmatprep.subr.mxu0 0.0
    %4265 = vmatpush2.msra.mxu0 0.0
    %4266 = vmatprep.subr.mxu0 0.0
    %4267 = vmatpush2.msra.mxu0 0.0
    %4268 = vmatprep.mubr.f32.mxu0 0.0
    %4269 = vmatmul.mubr.f32.gmra.mxu0 %v4179
    %v4270 = vpop.f32.mrf.mxu0
    %v4271 = vadd.f32 %v4202, %v4270
    %v4272 = vpop.f32.mrf.mxu0
    %4273 = vmatprep.mubr.f32.mxu0 0.0
    %4274 = vmatmul.mubr.f32.gmra.mxu0 %v4180
    %v4275 = vpop.f32.mrf.mxu0
    %v4276 = vadd.f32 %v4202, %v4275
    %v4277 = vpop.f32.mrf.mxu0
    %4278 = vdwg.mxu0
    %v4279 = vld [vmem:[%s14] sm:$0x1]
    %v4281 = vlaneseq
    %v4282 = vshrl.u32 %v4281, 7
    %v4283 = vsub.s32 0, %v4282
    %v4284 = vrot.slane %v4279, %v4283
    %v4286 = vmul.f32 %v4284, %v4271
    %v4287 = vmul.f32 %v4284, %v4276
    %v4288 = vadd.f32 %v4033, %v4286
    %v4289 = vadd.f32 %v4034, %v4287
    %4290 = vst.msk [vmem:[#allocation2] sm:$0xff] %vm55, %v4288
    %4291 = vst.msk [vmem:[#allocation2 + $0x8] sm:$0xff] %vm55, %v4289
    // Predicated region
    $region62: #{tpu_custom_call.1} parent=1 // pred_check
      _
    $region63: #{tpu_custom_call.1} parent=1 // pred_check_branch
      %4293 = sbr.rel (0) target = $region65
    $region64: #{tpu_custom_call.1} parent=1 // pred_region
      %s4295 = ssub.s32 256, 256
      %4296 = vsyncadd [#allocation3], %s4295
      %s4297 = sshll.u32 [#allocation2], 4
      %s4298 = int_to_ptr.vmem [resolvable:$true] %s4297
      %4303 = dma.vmem_to_hbm [thread:$0]  %s4298, 256, %s15, [#allocation3], 128, 128, 8
    $region65: #{tpu_custom_call.1} parent=1 // pred_fallthru
      _
    // Predicated region
    $region66: #{tpu_custom_call.1} parent=1 // pred_check
      _
    $region67: #{tpu_custom_call.1} parent=1 // pred_check_branch
      %4305 = sbr.rel (0) target = $region69
    $region68: #{tpu_custom_call.1} parent=1 // pred_region
      %4306 = dma.done [#allocation3], 256
    $region69: #{tpu_custom_call.1} parent=1 // pred_fallthru
      _
    %4307 = vsyncpa [#allocation3], 1

</llo_original>
